<compile_context>
chip_gen: v7x
topology: tpu7x:2x2x1
jax: 0.10.0
libtpu: 0.0.40
codegen_flags: <defaults>
</compile_context>

<pallas_src>
import jax
import jax.numpy as jnp
from jax.experimental import pallas as pl
from jax.experimental.pallas import tpu as pltpu


def _round_up(x, m):
    return ((x + m - 1) // m) * m


def _tpu_config():
    """(tensorcores per chip, physical VMEM bytes per core) — generation aware."""
    kind = ""
    try:
        kind = jax.devices()[0].device_kind.lower()
    except Exception:
        pass
    if "v7" in kind:                       # v7x: 2 TCs/chip, 64 MiB VMEM per TC
        return 2, 64 * 1024 * 1024
    if "v5" in kind or "v6" in kind:       # v5e / v6e: 1 TC, 128 MiB VMEM
        return 1, 128 * 1024 * 1024
    return 1, 64 * 1024 * 1024             # unknown: conservative


def classifier_kernel(sent_ref, adjpack_ref, bertsyn_ref,
                      w1_ref, b1_ref, w2_ref, b2_ref, fcw_ref, fcb_ref,
                      gcn_ref, slab_ref):
    tb, s, d = sent_ref.shape
    p = fcw_ref.shape[1]
    packp = slab_ref.shape[1]

    sent = sent_ref[...]                      # (TB, S, D)
    adjpack = adjpack_ref[...]                # (TB, S, S+2) = [adj | pw | am]
    bs = bertsyn_ref[...]                     # (TB, 1, D+S) = [bert | syn_mask]

    adj = adjpack[:, :, 0:s]                  # (TB, S, S)
    pw = adjpack[:, :, s:s + 1]               # (TB, S, 1)
    am = adjpack[:, :, s + 1:s + 2]           # (TB, S, 1)
    bert = bs[:, :, 0:d]                      # (TB, 1, D)
    synm = bs[:, :, d:d + s]                  # (TB, 1, S)

    # --- normalise adjacency once; reused by both GCN layers ----------------
    inv_denom = 1.0 / (jnp.sum(adj, axis=2, keepdims=True) + 1.0)   # (TB, S, 1)
    adj_n = adj * inv_denom                                          # (TB, S, S)

    def aggregate(h):
        # out[b,i,:] = sum_j adj_n[b,i,j] * h[b,j,:]
        if s <= 32:
            # tiny batched matmuls underfill the MXU badly; use VPU mul +
            # XLU sublane reduce instead.
            return jnp.sum(adj_n[:, :, :, None] * h[:, None, :, :], axis=2)
        return jnp.einsum('bij,bjd->bid', adj_n, h,
                          preferred_element_type=jnp.float32)

    # --- gc1: hidden = (pw * sent) @ W1 ; out = relu(adj_n @ hidden + b1) ----
    wx = (sent * pw).reshape(tb * s, d)                              # (TB*S, D)
    h1 = jnp.dot(wx, w1_ref[...],
                 preferred_element_type=jnp.float32).reshape(tb, s, d)
    x1 = jnp.maximum(aggregate(h1) + b1_ref[...], 0.0)

    # --- gc2 -----------------------------------------------------------------
    h2 = jnp.dot(x1.reshape(tb * s, d), w2_ref[...],
                 preferred_element_type=jnp.float32).reshape(tb, s, d)
    x2 = jnp.maximum(aggregate(h2) + b2_ref[...], 0.0)

    # lane-dense gcn_x output: one (tb, S*D) unmasked store
    gcn_ref[...] = x2.reshape(tb, s * d)

    # --- aspect-masked sum (also the collapsed attention left operand) ------
    asum = jnp.sum(am * x2, axis=1, keepdims=True)                   # (TB, 1, D)

    # --- attention: mixed = (asum + bert) @ sent^T, masked softmax -----------
    q = asum + bert                                                  # (TB, 1, D)
    mixed = jnp.einsum('bqd,bkd->bqk', q, sent,
                       preferred_element_type=jnp.float32)           # (TB, 1, S)
    mixed = jnp.where(synm == 0.0, -1000000000.0, mixed)

    mx = jnp.max(mixed, axis=-1, keepdims=True)
    e = jnp.exp(mixed - mx)
    alpha = e / jnp.sum(e, axis=-1, keepdims=True)                   # (TB, 1, S)

    # --- context vector + final linear ---------------------------------------
    xf = jnp.einsum('bqk,bkd->bqd', alpha, sent,
                    preferred_element_type=jnp.float32)              # (TB, 1, D)
    logits = (jnp.dot(xf.reshape(tb, d), fcw_ref[...],
                      preferred_element_type=jnp.float32)
              + fcb_ref[...])                                        # (TB, P)

    # --- pack small outputs into one lane-dense slab and store once ---------
    pieces = [logits, alpha.reshape(tb, s), asum.reshape(tb, d)]
    tail = packp - (p + s + d)
    if tail > 0:
        pieces.append(jnp.zeros((tb, tail), jnp.float32))
    slab_ref[...] = jnp.concatenate(pieces, axis=-1)


def classifier_forward(sentence, bert_out, adj, aspect_double_idx,
                       text_len, aspect_len, syntax_distance, params, tb=None):
    B, S, D = sentence.shape
    P = params["fc_w"].shape[1]

    n_tc, vmem_phys = _tpu_config()

    Sp = _round_up(S, 8)                          # sublane-aligned sequence
    PACKP = _round_up(P + Sp + D, 128)            # lane-dense packed slab width

    # ---- pick batch-block size tb (sublane aligned, generation-aware) ------
    if tb is None:
        shards = n_tc if B > 1 else 1             # split only on dual-TC chips
        tb = pl.cdiv(B, shards)
    tb = _round_up(max(int(tb), 1), 8)

    # crude per-example VMEM footprint (f32, lane-padded), double-buffered I/O
    lane = lambda n: _round_up(n, 128)
    per_ex = 4 * (Sp * lane(D)                    # sentence block
                  + Sp * lane(Sp + 2)             # [adj|pw|am] block
                  + lane(D + Sp)                  # [bert|syn] block
                  + lane(Sp * D)                  # gcn output slab
                  + lane(PACKP))                  # packed output slab
    per_ex = 2 * per_ex                           # pipeline double buffering
    per_ex += 4 * 8 * Sp * lane(D)                # live temporaries (h1,x1,h2,x2,...)
    per_ex += 4 * min(Sp, 32) * Sp * lane(D)      # VPU-aggregation broadcast temp
    budget = int(vmem_phys * 0.5)
    max_tb = max(8, (budget // max(per_ex, 1)) // 8 * 8)
    tb = min(tb, max_tb)

    grid_b = pl.cdiv(B, tb)
    Bp = grid_b * tb

    # ---- glue: position weights / aspect mask / syn-dist mask (dense) ------
    j = jnp.arange(S, dtype=jnp.float32)[None, :]                    # (1, S)
    a0 = aspect_double_idx[:, 0:1].astype(jnp.float32)               # (B, 1)
    a1 = aspect_double_idx[:, 1:2].astype(jnp.float32)
    tl = text_len[:, None].astype(jnp.float32)
    # Same division by context_len = text_len - aspect_len as the PyTorch code
    # (which implicitly assumes it is > 0); clamp only guards the degenerate case.
    cl = jnp.maximum((text_len - aspect_len)[:, None].astype(jnp.float32), 1.0)

    pos_weight = jnp.where(
        j < a0, 1.0 - (a0 - j) / cl,
        jnp.where(j <= a1, 0.0,
                  jnp.where(j < tl, 1.0 - (j - a1) / cl, 0.0))
    ).astype(jnp.float32)                                            # (B, S)
    aspect_mask = ((j >= a0) & (j <= a1)).astype(jnp.float32)        # (B, S)
    syn_mask = (syntax_distance > -6.0).astype(jnp.float32)          # (B, S)

    # ---- pad batch and sequence to aligned sizes ----------------------------
    dB, dS = Bp - B, Sp - S
    sent_p = jnp.pad(sentence, ((0, dB), (0, dS), (0, 0)))
    adj_p = jnp.pad(adj, ((0, dB), (0, dS), (0, dS)))
    pw_p = jnp.pad(pos_weight, ((0, dB), (0, dS)))
    am_p = jnp.pad(aspect_mask, ((0, dB), (0, dS)))
    syn_p = jnp.pad(syn_mask, ((0, dB), (0, dS)))       # padded tokens get mask 0
    bert_p = jnp.pad(bert_out, ((0, dB), (0, 0)))

    # pack masks into adjacency slab and per-example vectors into one slab
    adjpack = jnp.concatenate([adj_p, pw_p[:, :, None], am_p[:, :, None]],
                              axis=-1)                               # (Bp, Sp, Sp+2)
    bertsyn = jnp.concatenate([bert_p, syn_p], axis=-1)[:, None, :]  # (Bp, 1, D+Sp)

    in_specs = [
        pl.BlockSpec((tb, Sp, D), lambda b: (b, 0, 0)),        # sentence
        pl.BlockSpec((tb, Sp, Sp + 2), lambda b: (b, 0, 0)),   # [adj|pw|am]
        pl.BlockSpec((tb, 1, D + Sp), lambda b: (b, 0, 0)),    # [bert|syn_mask]
        pl.BlockSpec((D, D), lambda b: (0, 0)),                # gc1.weight
        pl.BlockSpec((1, D), lambda b: (0, 0)),                # gc1.bias
        pl.BlockSpec((D, D), lambda b: (0, 0)),                # gc2.weight
        pl.BlockSpec((1, D), lambda b: (0, 0)),                # gc2.bias
        pl.BlockSpec((D, P), lambda b: (0, 0)),                # fc.weight (in, out)
        pl.BlockSpec((1, P), lambda b: (0, 0)),                # fc.bias
    ]
    out_specs = [
        pl.BlockSpec((tb, Sp * D), lambda b: (b, 0)),          # gcn_x (flat, lane-dense)
        pl.BlockSpec((tb, PACKP), lambda b: (b, 0)),           # [logits|alpha|asum|0...]
    ]
    out_shape = [
        jax.ShapeDtypeStruct((Bp, Sp * D), jnp.float32),
        jax.ShapeDtypeStruct((Bp, PACKP), jnp.float32),
    ]

    flops = Bp * (4 * Sp * D * D            # two token-wise matmuls
                  + 4 * Sp * Sp * D         # two adjacency aggregations
                  + 4 * Sp * D              # attention matvec + context
                  + 2 * D * P)              # final linear
    transcendentals = Bp * Sp               # softmax exp
    bytes_acc = 4 * (Bp * Sp * D + Bp * Sp * (Sp + 2) + Bp * (D + Sp)
                     + 2 * D * D + 2 * D + D * P + P
                     + Bp * Sp * D + Bp * PACKP)

    fn = pl.pallas_call(
        classifier_kernel,
        grid=(grid_b,),
        in_specs=in_specs,
        out_specs=out_specs,
        out_shape=out_shape,
        compiler_params=pltpu.CompilerParams(
            dimension_semantics=("parallel",),
            vmem_limit_bytes=int(vmem_phys * 0.75)),
        cost_estimate=pl.CostEstimate(flops=int(flops),
                                      transcendentals=int(transcendentals),
                                      bytes_accessed=int(bytes_acc)),
    )
    gcn_p, slab_p = fn(
        sent_p, adjpack, bertsyn,
        params["w1"], params["b1"][None, :],
        params["w2"], params["b2"][None, :],
        params["fc_w"], params["fc_b"][None, :],
    )

    gcn_x = gcn_p.reshape(Bp, Sp, D)[:B, :S]
    slab = slab_p[:B]
    logits = slab[:, 0:P]
    alpha = slab[:, P:P + S]
    aspect_sum = slab[:, P + Sp:P + Sp + D]
    return logits, alpha, aspect_sum, gcn_x


def reference_forward(sentence, bert_out, adj, aspect_double_idx,
                      text_len, aspect_len, syntax_distance, params):
    """Pure-JAX replica of the PyTorch forward (for verification)."""
    B, S, D = sentence.shape
    j = jnp.arange(S, dtype=jnp.float32)[None, :]
    a0 = aspect_double_idx[:, 0:1].astype(jnp.float32)
    a1 = aspect_double_idx[:, 1:2].astype(jnp.float32)
    tl = text_len[:, None].astype(jnp.float32)
    cl = (text_len - aspect_len)[:, None].astype(jnp.float32)
    pw = jnp.where(j < a0, 1.0 - (a0 - j) / cl,
                   jnp.where(j <= a1, 0.0,
                             jnp.where(j < tl, 1.0 - (j - a1) / cl, 0.0)))
    am = ((j >= a0) & (j <= a1)).astype(jnp.float32)
    syn_mask = (syntax_distance > -6.0).astype(jnp.float32)

    wx = sentence * pw[:, :, None]
    denom = jnp.sum(adj, axis=2, keepdims=True) + 1.0
    x1 = jax.nn.relu(adj @ (wx @ params["w1"]) / denom + params["b1"])
    x2 = jax.nn.relu(adj @ (x1 @ params["w2"]) / denom + params["b2"])
    gcn_x = x2
    aspect_x = am[:, :, None] * x2
    alpha_mat = aspect_x @ jnp.swapaxes(sentence, 1, 2)
    alpha2 = bert_out[:, None, :] @ jnp.swapaxes(sentence, 1, 2)
    mixed = jnp.sum(alpha_mat, axis=1, keepdims=True) + alpha2
    mixed = jnp.where(syn_mask[:, None, :] == 0.0, -1000000000.0, mixed)
    alpha = jax.nn.softmax(mixed, axis=2)
    xf = (alpha @ sentence)[:, 0, :]
    logits = xf @ params["fc_w"] + params["fc_b"]
    return logits, alpha[:, 0, :], jnp.sum(aspect_x, axis=1), gcn_x


if __name__ == "__main__":
    # Small shapes consistent with the module: hidden_dim=16 -> D=2*16=32,
    # polarities_dim=3, batch=4, seq=8.
    B, S, H, P = 4, 8, 16, 3
    D = 2 * H

    key = jax.random.PRNGKey(0)
    ks = jax.random.split(key, 8)

    sentence = jax.random.normal(ks[0], (B, S, D), dtype=jnp.float32)
    bert_out = jax.random.normal(ks[1], (B, D), dtype=jnp.float32)
    adj = (jax.random.uniform(ks[2], (B, S, S)) > 0.5).astype(jnp.float32)
    aspect_double_idx = jnp.array([[2, 3], [1, 2], [0, 1], [4, 6]],
                                  dtype=jnp.int32)
    text_len = jnp.array([8, 6, 7, 8], dtype=jnp.int32)
    aspect_len = jnp.array([2, 2, 2, 3], dtype=jnp.int32)
    syntax_distance = jax.random.randint(ks[3], (B, S), -7, 8).astype(jnp.float32)

    # Deterministic parameter init (synthetic; shapes from __init__).
    params = {
        "w1": jax.random.uniform(ks[4], (D, D), minval=-0.1, maxval=0.1,
                                 dtype=jnp.float32),
        "b1": jnp.zeros((D,), dtype=jnp.float32),
        "w2": jax.random.uniform(ks[5], (D, D), minval=-0.1, maxval=0.1,
                                 dtype=jnp.float32),
        "b2": jnp.zeros((D,), dtype=jnp.float32),
        # fc: uniform_(-0.002, 0.002) weight, zero bias.  Stored as (in, out).
        "fc_w": jax.random.uniform(ks[6], (D, P), minval=-0.002, maxval=0.002,
                                   dtype=jnp.float32),
        "fc_b": jnp.zeros((P,), dtype=jnp.float32),
    }

    outs = classifier_forward(sentence, bert_out, adj, aspect_double_idx,
                              text_len, aspect_len, syntax_distance, params)
    outs = jax.block_until_ready(outs)

    refs = reference_forward(sentence, bert_out, adj, aspect_double_idx,
                             text_len, aspect_len, syntax_distance, params)
    for o, r in zip(outs, refs):
        assert o.shape == r.shape, f"shape mismatch {o.shape} vs {r.shape}"
        assert jnp.allclose(o, r, atol=1e-3, rtol=1e-3), "mismatch vs reference"

    print("KERNEL_OK")
</pallas_src>

<mosaic_0001>
module attributes {stable_mosaic.version = 11 : i64} {
  func.func @classifier_kernel(%arg0: i32, %arg1: memref<8x8x32xf32, #tpu.memory_space<vmem>>, %arg2: memref<8x8x10xf32, #tpu.memory_space<vmem>>, %arg3: memref<8x1x40xf32, #tpu.memory_space<vmem>>, %arg4: memref<32x32xf32, #tpu.memory_space<vmem>>, %arg5: memref<1x32xf32, #tpu.memory_space<vmem>>, %arg6: memref<32x32xf32, #tpu.memory_space<vmem>>, %arg7: memref<1x32xf32, #tpu.memory_space<vmem>>, %arg8: memref<32x3xf32, #tpu.memory_space<vmem>>, %arg9: memref<1x3xf32, #tpu.memory_space<vmem>>, %arg10: memref<8x256xf32, #tpu.memory_space<vmem>>, %arg11: memref<8x128xf32, #tpu.memory_space<vmem>>) attributes {dimension_semantics = [#tpu.dimension_semantics<parallel>], iteration_bounds = array<i64: 1>, scalar_prefetch = 0 : i64, scratch_operands = 0 : i64, tpu.core_type = #tpu.core_type<tc>, window_params = [{transform_indices = @transform_0, window_bounds = array<i64: 8, 8, 32>}, {transform_indices = @transform_1, window_bounds = array<i64: 8, 8, 10>}, {transform_indices = @transform_2, window_bounds = array<i64: 8, 1, 40>}, {pipeline_mode = #tpu.pipeline_mode<synchronous>, transform_indices = @transform_3, window_bounds = array<i64: 32, 32>}, {pipeline_mode = #tpu.pipeline_mode<synchronous>, transform_indices = @transform_4, window_bounds = array<i64: 1, 32>}, {pipeline_mode = #tpu.pipeline_mode<synchronous>, transform_indices = @transform_5, window_bounds = array<i64: 32, 32>}, {pipeline_mode = #tpu.pipeline_mode<synchronous>, transform_indices = @transform_6, window_bounds = array<i64: 1, 32>}, {pipeline_mode = #tpu.pipeline_mode<synchronous>, transform_indices = @transform_7, window_bounds = array<i64: 32, 3>}, {pipeline_mode = #tpu.pipeline_mode<synchronous>, transform_indices = @transform_8, window_bounds = array<i64: 1, 3>}, {transform_indices = @transform_9, window_bounds = array<i64: 8, 256>}, {transform_indices = @transform_10, window_bounds = array<i64: 8, 128>}]} {
    %c0 = arith.constant 0 : index
    %c0_0 = arith.constant 0 : index
    %c0_1 = arith.constant 0 : index
    %0 = vector.load %arg1[%c0, %c0_0, %c0_1] : memref<8x8x32xf32, #tpu.memory_space<vmem>>, vector<8x8x32xf32>
    %c0_2 = arith.constant 0 : index
    %c0_3 = arith.constant 0 : index
    %c0_4 = arith.constant 0 : index
    %1 = vector.load %arg2[%c0_2, %c0_3, %c0_4] : memref<8x8x10xf32, #tpu.memory_space<vmem>>, vector<8x8x10xf32>
    %c0_5 = arith.constant 0 : index
    %c0_6 = arith.constant 0 : index
    %c0_7 = arith.constant 0 : index
    %2 = vector.load %arg3[%c0_5, %c0_6, %c0_7] : memref<8x1x40xf32, #tpu.memory_space<vmem>>, vector<8x1x40xf32>
    %3 = vector.extract_strided_slice %1 {offsets = [0, 0, 0], sizes = [8, 8, 8], strides = [1, 1, 1]} : vector<8x8x10xf32> to vector<8x8x8xf32>
    %4 = vector.extract_strided_slice %1 {offsets = [0, 0, 8], sizes = [8, 8, 1], strides = [1, 1, 1]} : vector<8x8x10xf32> to vector<8x8x1xf32>
    %5 = vector.extract_strided_slice %1 {offsets = [0, 0, 9], sizes = [8, 8, 1], strides = [1, 1, 1]} : vector<8x8x10xf32> to vector<8x8x1xf32>
    %6 = vector.extract_strided_slice %2 {offsets = [0, 0, 0], sizes = [8, 1, 32], strides = [1, 1, 1]} : vector<8x1x40xf32> to vector<8x1x32xf32>
    %7 = vector.extract_strided_slice %2 {offsets = [0, 0, 32], sizes = [8, 1, 8], strides = [1, 1, 1]} : vector<8x1x40xf32> to vector<8x1x8xf32>
    %cst = arith.constant dense<0.000000e+00> : vector<8x8xf32>
    %8 = vector.multi_reduction <add>, %3, %cst [2] : vector<8x8x8xf32> to vector<8x8xf32>
    %9 = vector.shape_cast %8 : vector<8x8xf32> to vector<8x8x1xf32>
    %cst_8 = arith.constant 1.000000e+00 : f32
    %10 = vector.broadcast %cst_8 : f32 to vector<8x8x1xf32>
    %11 = arith.addf %9, %10 : vector<8x8x1xf32>
    %cst_9 = arith.constant 1.000000e+00 : f32
    %12 = vector.broadcast %cst_9 : f32 to vector<8x8x1xf32>
    %13 = arith.divf %12, %11 : vector<8x8x1xf32>
    %14 = vector.broadcast %13 : vector<8x8x1xf32> to vector<8x8x8xf32>
    %15 = arith.mulf %3, %14 : vector<8x8x8xf32>
    %16 = vector.broadcast %4 : vector<8x8x1xf32> to vector<8x8x32xf32>
    %17 = arith.mulf %0, %16 : vector<8x8x32xf32>
    %18 = vector.shape_cast %17 : vector<8x8x32xf32> to vector<64x32xf32>
    %c0_10 = arith.constant 0 : index
    %c0_11 = arith.constant 0 : index
    %19 = vector.load %arg4[%c0_10, %c0_11] : memref<32x32xf32, #tpu.memory_space<vmem>>, vector<32x32xf32>
    %cst_12 = arith.constant dense<0.000000e+00> : vector<64x32xf32>
    %20 = tpu.matmul %18, %19, %cst_12 {dimension_numbers = #tpu.dot_dimension_numbers<[1], [0], [0], [1], [0, 0, 1, 1], [], []>} : vector<64x32xf32>, vector<32x32xf32>, vector<64x32xf32> -> vector<64x32xf32>
    %21 = vector.shape_cast %20 : vector<64x32xf32> to vector<8x8x32xf32>
    %22 = vector.shape_cast %15 : vector<8x8x8xf32> to vector<8x8x8x1xf32>
    %23 = vector.shape_cast %21 : vector<8x8x32xf32> to vector<8x1x8x32xf32>
    %24 = vector.broadcast %22 : vector<8x8x8x1xf32> to vector<8x8x8x32xf32>
    %25 = vector.broadcast %23 : vector<8x1x8x32xf32> to vector<8x8x8x32xf32>
    %26 = arith.mulf %24, %25 : vector<8x8x8x32xf32>
    %cst_13 = arith.constant dense<0.000000e+00> : vector<8x8x32xf32>
    %27 = vector.multi_reduction <add>, %26, %cst_13 [2] : vector<8x8x8x32xf32> to vector<8x8x32xf32>
    %c0_14 = arith.constant 0 : index
    %c0_15 = arith.constant 0 : index
    %28 = vector.load %arg5[%c0_14, %c0_15] : memref<1x32xf32, #tpu.memory_space<vmem>>, vector<1x32xf32>
    %29 = vector.shape_cast %28 : vector<1x32xf32> to vector<1x1x32xf32>
    %30 = vector.broadcast %29 : vector<1x1x32xf32> to vector<8x8x32xf32>
    %31 = arith.addf %27, %30 : vector<8x8x32xf32>
    %cst_16 = arith.constant 0.000000e+00 : f32
    %32 = vector.broadcast %cst_16 : f32 to vector<8x8x32xf32>
    %33 = arith.maximumf %31, %32 : vector<8x8x32xf32>
    %34 = vector.shape_cast %33 : vector<8x8x32xf32> to vector<64x32xf32>
    %c0_17 = arith.constant 0 : index
    %c0_18 = arith.constant 0 : index
    %35 = vector.load %arg6[%c0_17, %c0_18] : memref<32x32xf32, #tpu.memory_space<vmem>>, vector<32x32xf32>
    %cst_19 = arith.constant dense<0.000000e+00> : vector<64x32xf32>
    %36 = tpu.matmul %34, %35, %cst_19 {dimension_numbers = #tpu.dot_dimension_numbers<[1], [0], [0], [1], [0, 0, 1, 1], [], []>} : vector<64x32xf32>, vector<32x32xf32>, vector<64x32xf32> -> vector<64x32xf32>
    %37 = vector.shape_cast %36 : vector<64x32xf32> to vector<8x8x32xf32>
    %38 = vector.shape_cast %15 : vector<8x8x8xf32> to vector<8x8x8x1xf32>
    %39 = vector.shape_cast %37 : vector<8x8x32xf32> to vector<8x1x8x32xf32>
    %40 = vector.broadcast %38 : vector<8x8x8x1xf32> to vector<8x8x8x32xf32>
    %41 = vector.broadcast %39 : vector<8x1x8x32xf32> to vector<8x8x8x32xf32>
    %42 = arith.mulf %40, %41 : vector<8x8x8x32xf32>
    %cst_20 = arith.constant dense<0.000000e+00> : vector<8x8x32xf32>
    %43 = vector.multi_reduction <add>, %42, %cst_20 [2] : vector<8x8x8x32xf32> to vector<8x8x32xf32>
    %c0_21 = arith.constant 0 : index
    %c0_22 = arith.constant 0 : index
    %44 = vector.load %arg7[%c0_21, %c0_22] : memref<1x32xf32, #tpu.memory_space<vmem>>, vector<1x32xf32>
    %45 = vector.shape_cast %44 : vector<1x32xf32> to vector<1x1x32xf32>
    %46 = vector.broadcast %45 : vector<1x1x32xf32> to vector<8x8x32xf32>
    %47 = arith.addf %43, %46 : vector<8x8x32xf32>
    %cst_23 = arith.constant 0.000000e+00 : f32
    %48 = vector.broadcast %cst_23 : f32 to vector<8x8x32xf32>
    %49 = arith.maximumf %47, %48 : vector<8x8x32xf32>
    %50 = vector.shape_cast %49 : vector<8x8x32xf32> to vector<8x256xf32>
    %c0_24 = arith.constant 0 : index
    %c0_25 = arith.constant 0 : index
    %51 = vector.load %arg10[%c0_24, %c0_25] : memref<8x256xf32, #tpu.memory_space<vmem>>, vector<8x256xf32>
    tpu.vector_store %arg10[%c0_24, %c0_25], %50 {strides = array<i32>} : memref<8x256xf32, #tpu.memory_space<vmem>>, vector<8x256xf32>,
    %52 = vector.broadcast %5 : vector<8x8x1xf32> to vector<8x8x32xf32>
    %53 = arith.mulf %52, %49 : vector<8x8x32xf32>
    %cst_26 = arith.constant dense<0.000000e+00> : vector<8x32xf32>
    %54 = vector.multi_reduction <add>, %53, %cst_26 [1] : vector<8x8x32xf32> to vector<8x32xf32>
    %55 = vector.shape_cast %54 : vector<8x32xf32> to vector<8x1x32xf32>
    %56 = arith.addf %55, %6 : vector<8x1x32xf32>
    "tpu.trace_start"() <{level = 10 : i32, message = "bqd,bkd->bqk"}> : () -> ()
    %cst_27 = arith.constant dense<0.000000e+00> : vector<8x1x8xf32>
    %57 = tpu.matmul %56, %0, %cst_27 {dimension_numbers = #tpu.dot_dimension_numbers<[2], [2], [1], [1], [0, 0, 0, 1, 1, 1], [0], [0]>} : vector<8x1x32xf32>, vector<8x8x32xf32>, vector<8x1x8xf32> -> vector<8x1x8xf32>
    %cst_28 = arith.constant 0.000000e+00 : f32
    "tpu.trace_stop"() : () -> ()
    %58 = vector.broadcast %cst_28 : f32 to vector<8x1x8xf32>
    %59 = arith.cmpf oeq, %7, %58 : vector<8x1x8xf32>
    %cst_29 = arith.constant -1.000000e+09 : f32
    %60 = vector.broadcast %cst_29 : f32 to vector<8x1x8xf32>
    %61 = arith.select %59, %60, %57 : vector<8x1x8xi1>, vector<8x1x8xf32>
    %cst_30 = arith.constant dense<0xFF800000> : vector<8x1xf32>
    %62 = vector.multi_reduction <maximumf>, %61, %cst_30 [2] : vector<8x1x8xf32> to vector<8x1xf32>
    %63 = vector.shape_cast %62 : vector<8x1xf32> to vector<8x1x1xf32>
    %64 = vector.broadcast %63 : vector<8x1x1xf32> to vector<8x1x8xf32>
    %65 = arith.subf %61, %64 : vector<8x1x8xf32>
    %66 = math.exp %65 : vector<8x1x8xf32>
    %cst_31 = arith.constant dense<0.000000e+00> : vector<8x1xf32>
    %67 = vector.multi_reduction <add>, %66, %cst_31 [2] : vector<8x1x8xf32> to vector<8x1xf32>
    %68 = vector.shape_cast %67 : vector<8x1xf32> to vector<8x1x1xf32>
    %69 = vector.broadcast %68 : vector<8x1x1xf32> to vector<8x1x8xf32>
    %70 = arith.divf %66, %69 : vector<8x1x8xf32>
    "tpu.trace_start"() <{level = 10 : i32, message = "bqk,bkd->bqd"}> : () -> ()
    %cst_32 = arith.constant dense<0.000000e+00> : vector<8x1x32xf32>
    %71 = tpu.matmul %70, %0, %cst_32 {dimension_numbers = #tpu.dot_dimension_numbers<[2], [1], [1], [2], [0, 0, 0, 1, 1, 2], [0], [0]>} : vector<8x1x8xf32>, vector<8x8x32xf32>, vector<8x1x32xf32> -> vector<8x1x32xf32>
    "tpu.trace_stop"() : () -> ()
    %72 = vector.shape_cast %71 : vector<8x1x32xf32> to vector<8x32xf32>
    %c0_33 = arith.constant 0 : index
    %c0_34 = arith.constant 0 : index
    %73 = vector.load %arg8[%c0_33, %c0_34] : memref<32x3xf32, #tpu.memory_space<vmem>>, vector<32x3xf32>
    %cst_35 = arith.constant dense<0.000000e+00> : vector<8x3xf32>
    %74 = tpu.matmul %72, %73, %cst_35 {dimension_numbers = #tpu.dot_dimension_numbers<[1], [0], [0], [1], [0, 0, 1, 1], [], []>} : vector<8x32xf32>, vector<32x3xf32>, vector<8x3xf32> -> vector<8x3xf32>
    %c0_36 = arith.constant 0 : index
    %c0_37 = arith.constant 0 : index
    %75 = vector.load %arg9[%c0_36, %c0_37] : memref<1x3xf32, #tpu.memory_space<vmem>>, vector<1x3xf32>
    %76 = vector.broadcast %75 : vector<1x3xf32> to vector<8x3xf32>
    %77 = arith.addf %74, %76 : vector<8x3xf32>
    %78 = vector.shape_cast %70 : vector<8x1x8xf32> to vector<8x8xf32>
    %79 = vector.shape_cast %55 : vector<8x1x32xf32> to vector<8x32xf32>
    %cst_38 = arith.constant 0.000000e+00 : f32
    %80 = vector.broadcast %cst_38 : f32 to vector<8x85xf32>
    %81 = tpu.concatenate %77, %78, %79, %80 in 1 : vector<8x3xf32>, vector<8x8xf32>, vector<8x32xf32>, vector<8x85xf32> -> vector<8x128xf32>
    %c0_39 = arith.constant 0 : index
    %c0_40 = arith.constant 0 : index
    %82 = vector.load %arg11[%c0_39, %c0_40] : memref<8x128xf32, #tpu.memory_space<vmem>>, vector<8x128xf32>
    tpu.vector_store %arg11[%c0_39, %c0_40], %81 {strides = array<i32>} : memref<8x128xf32, #tpu.memory_space<vmem>>, vector<8x128xf32>,
    return
  }
  func.func @transform_0(%arg0: i32) -> (i32, i32, i32) {
    %c0_i32 = arith.constant 0 : i32
    %c0_i32_0 = arith.constant 0 : i32
    %c0_i32_1 = arith.constant 0 : i32
    return %arg0, %c0_i32, %c0_i32_0 : i32, i32, i32
  }
  func.func @transform_1(%arg0: i32) -> (i32, i32, i32) {
    %c0_i32 = arith.constant 0 : i32
    %c0_i32_0 = arith.constant 0 : i32
    %c0_i32_1 = arith.constant 0 : i32
    return %arg0, %c0_i32, %c0_i32_0 : i32, i32, i32
  }
  func.func @transform_2(%arg0: i32) -> (i32, i32, i32) {
    %c0_i32 = arith.constant 0 : i32
    %c0_i32_0 = arith.constant 0 : i32
    %c0_i32_1 = arith.constant 0 : i32
    return %arg0, %c0_i32, %c0_i32_0 : i32, i32, i32
  }
  func.func @transform_3(%arg0: i32) -> (i32, i32) {
    %c0_i32 = arith.constant 0 : i32
    %c0_i32_0 = arith.constant 0 : i32
    %c0_i32_1 = arith.constant 0 : i32
    return %c0_i32, %c0_i32_0 : i32, i32
  }
  func.func @transform_4(%arg0: i32) -> (i32, i32) {
    %c0_i32 = arith.constant 0 : i32
    %c0_i32_0 = arith.constant 0 : i32
    %c0_i32_1 = arith.constant 0 : i32
    return %c0_i32, %c0_i32_0 : i32, i32
  }
  func.func @transform_5(%arg0: i32) -> (i32, i32) {
    %c0_i32 = arith.constant 0 : i32
    %c0_i32_0 = arith.constant 0 : i32
    %c0_i32_1 = arith.constant 0 : i32
    return %c0_i32, %c0_i32_0 : i32, i32
  }
  func.func @transform_6(%arg0: i32) -> (i32, i32) {
    %c0_i32 = arith.constant 0 : i32
    %c0_i32_0 = arith.constant 0 : i32
    %c0_i32_1 = arith.constant 0 : i32
    return %c0_i32, %c0_i32_0 : i32, i32
  }
  func.func @transform_7(%arg0: i32) -> (i32, i32) {
    %c0_i32 = arith.constant 0 : i32
    %c0_i32_0 = arith.constant 0 : i32
    %c0_i32_1 = arith.constant 0 : i32
    return %c0_i32, %c0_i32_0 : i32, i32
  }
  func.func @transform_8(%arg0: i32) -> (i32, i32) {
    %c0_i32 = arith.constant 0 : i32
    %c0_i32_0 = arith.constant 0 : i32
    %c0_i32_1 = arith.constant 0 : i32
    return %c0_i32, %c0_i32_0 : i32, i32
  }
  func.func @transform_9(%arg0: i32) -> (i32, i32) {
    %c0_i32 = arith.constant 0 : i32
    %c0_i32_0 = arith.constant 0 : i32
    return %arg0, %c0_i32 : i32, i32
  }
  func.func @transform_10(%arg0: i32) -> (i32, i32) {
    %c0_i32 = arith.constant 0 : i32
    %c0_i32_0 = arith.constant 0 : i32
    return %arg0, %c0_i32 : i32, i32
  }
}

</mosaic_0001>

<llo_original>
// kernel: tpu_custom_call.1
$region0: #{tpu_custom_call.1}
  #allocation0 [shape = 'u32[]', space=smem, size = 0x4, offset = 0x4, fixed_abs, tag = 'smem constant byte address 0x4 - core index']
  #allocation1 [shape = 'u32[144,128]{1,0:T(1,128)}', space=vmem, size = 0x12000, scoped, tag = 'internal scratch']
  %s0 = inlined_call_operand.hbm [shape: f32[8,8,32], index: 0, kind: input, shape index: {}]
  %s1 = inlined_call_operand.hbm [shape: f32[8,8,10], index: 1, kind: input, shape index: {}]
  %s2 = inlined_call_operand.vmem [shape: f32[8,1,40], index: 2, kind: input, shape index: {}]
  %s3 = inlined_call_operand.vmem [shape: f32[32,32], index: 3, kind: input, shape index: {}]
  %s4 = inlined_call_operand.vmem [shape: f32[1,32], index: 4, kind: input, shape index: {}]
  %s5 = inlined_call_operand.hbm [shape: f32[32,32], index: 5, kind: input, shape index: {}]
  %s6 = inlined_call_operand.vmem [shape: f32[1,32], index: 6, kind: input, shape index: {}]
  %s7 = inlined_call_operand.vmem [shape: f32[32,3], index: 7, kind: input, shape index: {}]
  %s8 = inlined_call_operand.vmem [shape: f32[1,3], index: 8, kind: input, shape index: {}]
  %s9 = inlined_call_operand.hbm [shape: f32[8,256], index: 9, kind: output, shape index: {0}]
  %s10 = inlined_call_operand.hbm [shape: f32[8,128], index: 10, kind: output, shape index: {1}]
  %11 = xla_tuple %s9, %s10
  %s12 = sld [smem:[#allocation0]]
  $region66: #{tpu_custom_call.1} parent=0
    _
  %s14 = ssub.s32 1, %s12
  %s15 = scalar_select 0, %s14, %s12
  $region1: #{tpu_custom_call.1} parent=0
    #allocation2 [shape = 'u8[32768]{0}', space=vmem, size = 0x8000, scoped, tag = 'input window, operand 0, single buffered']
    #allocation3 [shape = 's32[1]{0}', space=sflag, size = 0x4, scoped, tag = 'scoped memory for tpu_custom_call.1']
    #allocation4 [shape = 's32[1]{0}', space=sflag, size = 0x4, scoped, tag = 'scoped memory for tpu_custom_call.1']
    #allocation5 [shape = 'u8[32768]{0}', space=vmem, size = 0x8000, scoped, tag = 'input window, operand 1, single buffered']
    #allocation6 [shape = 's32[1]{0}', space=sflag, size = 0x4, scoped, tag = 'scoped memory for tpu_custom_call.1']
    #allocation7 [shape = 'u8[16384]{0}', space=vmem, size = 0x4000, scoped, tag = 'input window, operand 5, single buffered']
    #allocation8 [shape = 'u8[8192]{0}', space=vmem, size = 0x2000, scoped, tag = 'output window, operand 0, single buffered']
    #allocation9 [shape = 'u8[4096]{0}', space=vmem, size = 0x1000, scoped, tag = 'output window, operand 1, single buffered']
    #allocation10 [shape = 's32[1]{0}', space=sflag, size = 0x4, scoped, tag = 'scoped memory for tpu_custom_call.1']
    %16 = vsyncpa [#allocation3], 0
    %17 = vsyncpa [#allocation6], 0
    %18 = vsyncpa [#allocation4], 0
    %19 = vsyncpa [#allocation10], 0
    // Predicated region
    $region2: #{tpu_custom_call.1} parent=1 // pred_check
      _
    $region3: #{tpu_custom_call.1} parent=1 // pred_check_branch
      %21 = sbr.rel (0) target = $region5
    $region4: #{tpu_custom_call.1} parent=1 // pred_region
      %s23 = ssub.s32 1024, 1024
      %24 = vsyncadd [#allocation3], %s23
      %s25 = sshll.u32 [#allocation2], 4
      %s26 = int_to_ptr.vmem [resolvable:$true] %s25
      %31 = dma.hbm_to_vmem [thread:$0]  %s0, 1024, %s26, [#allocation3], 128, 128, 8
    $region5: #{tpu_custom_call.1} parent=1 // pred_fallthru
      _
    // Predicated region
    $region6: #{tpu_custom_call.1} parent=1 // pred_check
      _
    $region7: #{tpu_custom_call.1} parent=1 // pred_check_branch
      %33 = sbr.rel (0) target = $region9
    $region8: #{tpu_custom_call.1} parent=1 // pred_region
      %s35 = ssub.s32 1024, 1024
      %36 = vsyncadd [#allocation6], %s35
      %s37 = sshll.u32 [#allocation5], 4
      %s38 = int_to_ptr.vmem [resolvable:$true] %s37
      %43 = dma.hbm_to_vmem [thread:$0]  %s1, 1024, %s38, [#allocation6], 128, 128, 8
    $region9: #{tpu_custom_call.1} parent=1 // pred_fallthru
      _
    // Predicated region
    $region10: #{tpu_custom_call.1} parent=1 // pred_check
      _
    $region11: #{tpu_custom_call.1} parent=1 // pred_check_branch
      %45 = sbr.rel (0) target = $region13
    $region12: #{tpu_custom_call.1} parent=1 // pred_region
      _
    $region13: #{tpu_custom_call.1} parent=1 // pred_fallthru
      _
    // Predicated region
    $region14: #{tpu_custom_call.1} parent=1 // pred_check
      _
    $region15: #{tpu_custom_call.1} parent=1 // pred_check_branch
      %47 = sbr.rel (0) target = $region17
    $region16: #{tpu_custom_call.1} parent=1 // pred_region
      _
    $region17: #{tpu_custom_call.1} parent=1 // pred_fallthru
      _
    // Predicated region
    $region18: #{tpu_custom_call.1} parent=1 // pred_check
      _
    $region19: #{tpu_custom_call.1} parent=1 // pred_check_branch
      %49 = sbr.rel (0) target = $region21
    $region20: #{tpu_custom_call.1} parent=1 // pred_region
      _
    $region21: #{tpu_custom_call.1} parent=1 // pred_fallthru
      _
    // Predicated region
    $region22: #{tpu_custom_call.1} parent=1 // pred_check
      _
    $region23: #{tpu_custom_call.1} parent=1 // pred_check_branch
      %51 = sbr.rel (0) target = $region25
    $region24: #{tpu_custom_call.1} parent=1 // pred_region
      %s53 = ssub.s32 512, 512
      %54 = vsyncadd [#allocation6], %s53
      %s55 = sshll.u32 [#allocation7], 4
      %s56 = int_to_ptr.vmem [resolvable:$true] %s55
      %61 = dma.hbm_to_vmem [thread:$0]  %s5, 512, %s56, [#allocation6], 128, 128, 8
    $region25: #{tpu_custom_call.1} parent=1 // pred_fallthru
      _
    // Predicated region
    $region26: #{tpu_custom_call.1} parent=1 // pred_check
      _
    $region27: #{tpu_custom_call.1} parent=1 // pred_check_branch
      %63 = sbr.rel (0) target = $region29
    $region28: #{tpu_custom_call.1} parent=1 // pred_region
      _
    $region29: #{tpu_custom_call.1} parent=1 // pred_fallthru
      _
    // Predicated region
    $region30: #{tpu_custom_call.1} parent=1 // pred_check
      _
    $region31: #{tpu_custom_call.1} parent=1 // pred_check_branch
      %65 = sbr.rel (0) target = $region33
    $region32: #{tpu_custom_call.1} parent=1 // pred_region
      _
    $region33: #{tpu_custom_call.1} parent=1 // pred_fallthru
      _
    // Predicated region
    $region34: #{tpu_custom_call.1} parent=1 // pred_check
      _
    $region35: #{tpu_custom_call.1} parent=1 // pred_check_branch
      %67 = sbr.rel (0) target = $region37
    $region36: #{tpu_custom_call.1} parent=1 // pred_region
      _
    $region37: #{tpu_custom_call.1} parent=1 // pred_fallthru
      _
    // Predicated region
    $region38: #{tpu_custom_call.1} parent=1 // pred_check
      _
    $region39: #{tpu_custom_call.1} parent=1 // pred_check_branch
      %69 = sbr.rel (0) target = $region41
    $region40: #{tpu_custom_call.1} parent=1 // pred_region
      %70 = dma.done [#allocation3], 1024
    $region41: #{tpu_custom_call.1} parent=1 // pred_fallthru
      _
    // Predicated region
    $region42: #{tpu_custom_call.1} parent=1 // pred_check
      _
    $region43: #{tpu_custom_call.1} parent=1 // pred_check_branch
      %72 = sbr.rel (0) target = $region45
    $region44: #{tpu_custom_call.1} parent=1 // pred_region
      %73 = dma.done [#allocation6], 1024
    $region45: #{tpu_custom_call.1} parent=1 // pred_fallthru
      _
    // Predicated region
    $region46: #{tpu_custom_call.1} parent=1 // pred_check
      _
    $region47: #{tpu_custom_call.1} parent=1 // pred_check_branch
      %75 = sbr.rel (0) target = $region49
    $region48: #{tpu_custom_call.1} parent=1 // pred_region
      %76 = dma.done [#allocation6], 512
    $region49: #{tpu_custom_call.1} parent=1 // pred_fallthru
      _
    %v77 = vld [vmem:[#allocation2] sm:$0xff]
    %v78 = vld [vmem:[#allocation2 + $0x8] sm:$0xff]
    %v79 = vld [vmem:[#allocation2 + $0x10] sm:$0xff]
    %v80 = vld [vmem:[#allocation2 + $0x18] sm:$0xff]
    %v81 = vld [vmem:[#allocation2 + $0x20] sm:$0xff]
    %v82 = vld [vmem:[#allocation2 + $0x28] sm:$0xff]
    %v83 = vld [vmem:[#allocation2 + $0x30] sm:$0xff]
    %v84 = vld [vmem:[#allocation2 + $0x38] sm:$0xff]
    %v85 = vld [vmem:[#allocation5] sm:$0xff]
    %v86 = vld [vmem:[#allocation5 + $0x8] sm:$0xff]
    %v87 = vld [vmem:[#allocation5 + $0x10] sm:$0xff]
    %v88 = vld [vmem:[#allocation5 + $0x18] sm:$0xff]
    %v89 = vld [vmem:[#allocation5 + $0x20] sm:$0xff]
    %v90 = vld [vmem:[#allocation5 + $0x28] sm:$0xff]
    %v91 = vld [vmem:[#allocation5 + $0x30] sm:$0xff]
    %v92 = vld [vmem:[#allocation5 + $0x38] sm:$0xff]
    %v93 = vld [vmem:[%s2] sm:$0x1]
    %v94 = vld [vmem:[%s2 + $0x1] sm:$0x1]
    %v95 = vld [vmem:[%s2 + $0x2] sm:$0x1]
    %v96 = vld [vmem:[%s2 + $0x3] sm:$0x1]
    %v97 = vld [vmem:[%s2 + $0x4] sm:$0x1]
    %v98 = vld [vmem:[%s2 + $0x5] sm:$0x1]
    %v99 = vld [vmem:[%s2 + $0x6] sm:$0x1]
    %v100 = vld [vmem:[%s2 + $0x7] sm:$0x1]
    %vm101 = vcmask 64512
    %v102 = vsel %vm101, %v85, 0.0
    %103 = vadd.xlane.f32.xlu0 %v102
    %v104 = vpop.xlane.xlu0 %103
    %v105 = vsel %vm101, %v86, 0.0
    %106 = vadd.xlane.f32.xlu0 %v105
    %v107 = vpop.xlane.xlu0 %106
    %v108 = vsel %vm101, %v87, 0.0
    %109 = vadd.xlane.f32.xlu0 %v108
    %v110 = vpop.xlane.xlu0 %109
    %v111 = vsel %vm101, %v88, 0.0
    %112 = vadd.xlane.f32.xlu0 %v111
    %v113 = vpop.xlane.xlu0 %112
    %v114 = vsel %vm101, %v89, 0.0
    %115 = vadd.xlane.f32.xlu0 %v114
    %v116 = vpop.xlane.xlu0 %115
    %v117 = vsel %vm101, %v90, 0.0
    %118 = vadd.xlane.f32.xlu0 %v117
    %v119 = vpop.xlane.xlu0 %118
    %v120 = vsel %vm101, %v91, 0.0
    %121 = vadd.xlane.f32.xlu0 %v120
    %v122 = vpop.xlane.xlu0 %121
    %v123 = vsel %vm101, %v92, 0.0
    %124 = vadd.xlane.f32.xlu0 %v123
    %v125 = vpop.xlane.xlu0 %124
    %v126 = vadd.f32 %v104, 1.0
    %v127 = vadd.f32 %v107, 1.0
    %v128 = vadd.f32 %v110, 1.0
    %v129 = vadd.f32 %v113, 1.0
    %v130 = vadd.f32 %v116, 1.0
    %v131 = vadd.f32 %v119, 1.0
    %v132 = vadd.f32 %v122, 1.0
    %v133 = vadd.f32 %v125, 1.0
    %v134 = vrcp.pop %v126
    %v135 = vmul.f32 1.0, %v134
    %v136 = vrcp.pop %v127
    %v137 = vmul.f32 1.0, %v136
    %v138 = vrcp.pop %v128
    %v139 = vmul.f32 1.0, %v138
    %v140 = vrcp.pop %v129
    %v141 = vmul.f32 1.0, %v140
    %v142 = vrcp.pop %v130
    %v143 = vmul.f32 1.0, %v142
    %v144 = vrcp.pop %v131
    %v145 = vmul.f32 1.0, %v144
    %v146 = vrcp.pop %v132
    %v147 = vmul.f32 1.0, %v146
    %v148 = vrcp.pop %v133
    %v149 = vmul.f32 1.0, %v148
    %v150 = vmul.f32 %v85, %v135
    %v151 = vmul.f32 %v86, %v137
    %v152 = vmul.f32 %v87, %v139
    %v153 = vmul.f32 %v88, %v141
    %v154 = vmul.f32 %v89, %v143
    %v155 = vmul.f32 %v90, %v145
    %v156 = vmul.f32 %v91, %v147
    %v157 = vmul.f32 %v92, %v149
    %159 = vset.pattern.permute.xlu0 8
    %160 = vperm.xlu0 %159, %v85
    %v161 = vpop.permute.xlu0 %160
    %164 = vset.pattern.permute.xlu0 8
    %165 = vperm.xlu0 %164, %v86
    %v166 = vpop.permute.xlu0 %165
    %169 = vset.pattern.permute.xlu0 8
    %170 = vperm.xlu0 %169, %v87
    %v171 = vpop.permute.xlu0 %170
    %174 = vset.pattern.permute.xlu0 8
    %175 = vperm.xlu0 %174, %v88
    %v176 = vpop.permute.xlu0 %175
    %179 = vset.pattern.permute.xlu0 8
    %180 = vperm.xlu0 %179, %v89
    %v181 = vpop.permute.xlu0 %180
    %184 = vset.pattern.permute.xlu0 8
    %185 = vperm.xlu0 %184, %v90
    %v186 = vpop.permute.xlu0 %185
    %189 = vset.pattern.permute.xlu0 8
    %190 = vperm.xlu0 %189, %v91
    %v191 = vpop.permute.xlu0 %190
    %194 = vset.pattern.permute.xlu0 8
    %195 = vperm.xlu0 %194, %v92
    %v196 = vpop.permute.xlu0 %195
    %v198 = vmul.f32 %v77, %v161
    %v199 = vmul.f32 %v78, %v166
    %v200 = vmul.f32 %v79, %v171
    %v201 = vmul.f32 %v80, %v176
    %v202 = vmul.f32 %v81, %v181
    %v203 = vmul.f32 %v82, %v186
    %v204 = vmul.f32 %v83, %v191
    %v205 = vmul.f32 %v84, %v196
    %v206 = vld [vmem:[%s3] sm:$0xff]
    %v207 = vld [vmem:[%s3 + $0x8] sm:$0xff]
    %v208 = vld [vmem:[%s3 + $0x10] sm:$0xff]
    %v209 = vld [vmem:[%s3 + $0x18] sm:$0xff]
    %vm210 = vcmask 261120
    %v212 = vsel %vm210, %v198, 0
    %v215 = vsel %vm210, %v199, 0
    %v218 = vsel %vm210, %v200, 0
    %v221 = vsel %vm210, %v201, 0
    %v224 = vsel %vm210, %v202, 0
    %v227 = vsel %vm210, %v203, 0
    %v230 = vsel %vm210, %v204, 0
    %v233 = vsel %vm210, %v205, 0
    %235 = vmatprep.subr.mxu0 0.0
    %236 = vmatpush1.msra.mxu0 %v206
    %237 = vmatprep.subr.mxu0 0.0
    %238 = vmatpush1.msra.mxu0 %v207
    %239 = vmatprep.subr.mxu0 0.0
    %240 = vmatpush1.msra.mxu0 %v208
    %241 = vmatprep.subr.mxu0 0.0
    %242 = vmatpush1.msra.mxu0 %v209
    %243 = vmatprep.subr.mxu0 0.0
    %244 = vmatpush1.msra.mxu0 0.0
    %245 = vmatprep.subr.mxu0 0.0
    %246 = vmatpush1.msra.mxu0 0.0
    %247 = vmatprep.subr.mxu0 0.0
    %248 = vmatpush1.msra.mxu0 0.0
    %249 = vmatprep.subr.mxu0 0.0
    %250 = vmatpush1.msra.mxu0 0.0
    %251 = vmatprep.subr.mxu0 0.0
    %252 = vmatpush1.msra.mxu0 0.0
    %253 = vmatprep.subr.mxu0 0.0
    %254 = vmatpush1.msra.mxu0 0.0
    %255 = vmatprep.subr.mxu0 0.0
    %256 = vmatpush1.msra.mxu0 0.0
    %257 = vmatprep.subr.mxu0 0.0
    %258 = vmatpush1.msra.mxu0 0.0
    %259 = vmatprep.subr.mxu0 0.0
    %260 = vmatpush1.msra.mxu0 0.0
    %261 = vmatprep.subr.mxu0 0.0
    %262 = vmatpush1.msra.mxu0 0.0
    %263 = vmatprep.subr.mxu0 0.0
    %264 = vmatpush1.msra.mxu0 0.0
    %265 = vmatprep.subr.mxu0 0.0
    %266 = vmatpush1.msra.mxu0 0.0
    %267 = vmatprep.subr.mxu0 0.0
    %268 = vmatpush1.msra.mxu0 0.0
    %269 = vmatprep.subr.mxu0 0.0
    %270 = vmatpush1.msra.mxu0 0.0
    %271 = vmatprep.subr.mxu0 0.0
    %272 = vmatpush1.msra.mxu0 0.0
    %273 = vmatprep.subr.mxu0 0.0
    %274 = vmatpush1.msra.mxu0 0.0
    %275 = vmatprep.subr.mxu0 0.0
    %276 = vmatpush1.msra.mxu0 0.0
    %277 = vmatprep.subr.mxu0 0.0
    %278 = vmatpush1.msra.mxu0 0.0
    %279 = vmatprep.subr.mxu0 0.0
    %280 = vmatpush1.msra.mxu0 0.0
    %281 = vmatprep.subr.mxu0 0.0
    %282 = vmatpush1.msra.mxu0 0.0
    %283 = vmatprep.subr.mxu0 0.0
    %284 = vmatpush1.msra.mxu0 0.0
    %285 = vmatprep.subr.mxu0 0.0
    %286 = vmatpush1.msra.mxu0 0.0
    %287 = vmatprep.subr.mxu0 0.0
    %288 = vmatpush1.msra.mxu0 0.0
    %289 = vmatprep.subr.mxu0 0.0
    %290 = vmatpush1.msra.mxu0 0.0
    %291 = vmatprep.subr.mxu0 0.0
    %292 = vmatpush1.msra.mxu0 0.0
    %293 = vmatprep.subr.mxu0 0.0
    %294 = vmatpush1.msra.mxu0 0.0
    %295 = vmatprep.subr.mxu0 0.0
    %296 = vmatpush1.msra.mxu0 0.0
    %297 = vmatprep.subr.mxu0 0.0
    %298 = vmatpush1.msra.mxu0 0.0
    %299 = vmatprep.mubr.f32.mxu0 0.0
    %300 = vmatmul.mubr.f32.gmra.mrb[0].mxu0 %v212
    %v301 = vpop.f32.mrb[0].mxu0
    %v302 = vadd.f32 0.0, %v301
    %v303 = vpop.f32.mrb[0].mxu0
    %304 = vmatprep.mubr.f32.mxu0 0.0
    %305 = vmatmul.mubr.f32.gmra.mrb[0].mxu0 %v215
    %v306 = vpop.f32.mrb[0].mxu0
    %v307 = vadd.f32 0.0, %v306
    %v308 = vpop.f32.mrb[0].mxu0
    %309 = vmatprep.mubr.f32.mxu0 0.0
    %310 = vmatmul.mubr.f32.gmra.mrb[0].mxu0 %v218
    %v311 = vpop.f32.mrb[0].mxu0
    %v312 = vadd.f32 0.0, %v311
    %v313 = vpop.f32.mrb[0].mxu0
    %314 = vmatprep.mubr.f32.mxu0 0.0
    %315 = vmatmul.mubr.f32.gmra.mrb[0].mxu0 %v221
    %v316 = vpop.f32.mrb[0].mxu0
    %v317 = vadd.f32 0.0, %v316
    %v318 = vpop.f32.mrb[0].mxu0
    %319 = vmatprep.mubr.f32.mxu0 0.0
    %320 = vmatmul.mubr.f32.gmra.mrb[0].mxu0 %v224
    %v321 = vpop.f32.mrb[0].mxu0
    %v322 = vadd.f32 0.0, %v321
    %v323 = vpop.f32.mrb[0].mxu0
    %324 = vmatprep.mubr.f32.mxu0 0.0
    %325 = vmatmul.mubr.f32.gmra.mrb[0].mxu0 %v227
    %v326 = vpop.f32.mrb[0].mxu0
    %v327 = vadd.f32 0.0, %v326
    %v328 = vpop.f32.mrb[0].mxu0
    %329 = vmatprep.mubr.f32.mxu0 0.0
    %330 = vmatmul.mubr.f32.gmra.mrb[0].mxu0 %v230
    %v331 = vpop.f32.mrb[0].mxu0
    %v332 = vadd.f32 0.0, %v331
    %v333 = vpop.f32.mrb[0].mxu0
    %334 = vmatprep.mubr.f32.mxu0 0.0
    %335 = vmatmul.mubr.f32.gmra.mrb[0].mxu0 %v233
    %v336 = vpop.f32.mrb[0].mxu0
    %v337 = vadd.f32 0.0, %v336
    %v338 = vpop.f32.mrb[0].mxu0
    %339 = vdwg.mxu0
    %v340 = vlaneseq
    %v341 = vshrl.u32 %v340, 7
    %v342 = vsub.s32 0, %v341
    %v343 = vrot.slane %v150, %v342
    %345 = vbcast.lane.b32.xlu0 %v343, 256
    %v346 = vpop.permute.xlu0 %345
    %v347 = vlaneseq
    %v348 = vshrl.u32 %v347, 7
    %v349 = vsub.s32 1, %v348
    %v350 = vrot.slane %v150, %v349
    %352 = vbcast.lane.b32.xlu0 %v350, 256
    %v353 = vpop.permute.xlu0 %352
    %v354 = vlaneseq
    %v355 = vshrl.u32 %v354, 7
    %v356 = vsub.s32 2, %v355
    %v357 = vrot.slane %v150, %v356
    %359 = vbcast.lane.b32.xlu0 %v357, 256
    %v360 = vpop.permute.xlu0 %359
    %v361 = vlaneseq
    %v362 = vshrl.u32 %v361, 7
    %v363 = vsub.s32 3, %v362
    %v364 = vrot.slane %v150, %v363
    %366 = vbcast.lane.b32.xlu0 %v364, 256
    %v367 = vpop.permute.xlu0 %366
    %v368 = vlaneseq
    %v369 = vshrl.u32 %v368, 7
    %v370 = vsub.s32 4, %v369
    %v371 = vrot.slane %v150, %v370
    %373 = vbcast.lane.b32.xlu0 %v371, 256
    %v374 = vpop.permute.xlu0 %373
    %v375 = vlaneseq
    %v376 = vshrl.u32 %v375, 7
    %v377 = vsub.s32 5, %v376
    %v378 = vrot.slane %v150, %v377
    %380 = vbcast.lane.b32.xlu0 %v378, 256
    %v381 = vpop.permute.xlu0 %380
    %v382 = vlaneseq
    %v383 = vshrl.u32 %v382, 7
    %v384 = vsub.s32 6, %v383
    %v385 = vrot.slane %v150, %v384
    %387 = vbcast.lane.b32.xlu0 %v385, 256
    %v388 = vpop.permute.xlu0 %387
    %v389 = vlaneseq
    %v390 = vshrl.u32 %v389, 7
    %v391 = vsub.s32 7, %v390
    %v392 = vrot.slane %v150, %v391
    %394 = vbcast.lane.b32.xlu0 %v392, 256
    %v395 = vpop.permute.xlu0 %394
    %v396 = vlaneseq
    %v397 = vshrl.u32 %v396, 7
    %v398 = vsub.s32 0, %v397
    %v399 = vrot.slane %v151, %v398
    %401 = vbcast.lane.b32.xlu0 %v399, 256
    %v402 = vpop.permute.xlu0 %401
    %v403 = vlaneseq
    %v404 = vshrl.u32 %v403, 7
    %v405 = vsub.s32 1, %v404
    %v406 = vrot.slane %v151, %v405
    %408 = vbcast.lane.b32.xlu0 %v406, 256
    %v409 = vpop.permute.xlu0 %408
    %v410 = vlaneseq
    %v411 = vshrl.u32 %v410, 7
    %v412 = vsub.s32 2, %v411
    %v413 = vrot.slane %v151, %v412
    %415 = vbcast.lane.b32.xlu0 %v413, 256
    %v416 = vpop.permute.xlu0 %415
    %v417 = vlaneseq
    %v418 = vshrl.u32 %v417, 7
    %v419 = vsub.s32 3, %v418
    %v420 = vrot.slane %v151, %v419
    %422 = vbcast.lane.b32.xlu0 %v420, 256
    %v423 = vpop.permute.xlu0 %422
    %v424 = vlaneseq
    %v425 = vshrl.u32 %v424, 7
    %v426 = vsub.s32 4, %v425
    %v427 = vrot.slane %v151, %v426
    %429 = vbcast.lane.b32.xlu0 %v427, 256
    %v430 = vpop.permute.xlu0 %429
    %v431 = vlaneseq
    %v432 = vshrl.u32 %v431, 7
    %v433 = vsub.s32 5, %v432
    %v434 = vrot.slane %v151, %v433
    %436 = vbcast.lane.b32.xlu0 %v434, 256
    %v437 = vpop.permute.xlu0 %436
    %v438 = vlaneseq
    %v439 = vshrl.u32 %v438, 7
    %v440 = vsub.s32 6, %v439
    %v441 = vrot.slane %v151, %v440
    %443 = vbcast.lane.b32.xlu0 %v441, 256
    %v444 = vpop.permute.xlu0 %443
    %v445 = vlaneseq
    %v446 = vshrl.u32 %v445, 7
    %v447 = vsub.s32 7, %v446
    %v448 = vrot.slane %v151, %v447
    %450 = vbcast.lane.b32.xlu0 %v448, 256
    %v451 = vpop.permute.xlu0 %450
    %v452 = vlaneseq
    %v453 = vshrl.u32 %v452, 7
    %v454 = vsub.s32 0, %v453
    %v455 = vrot.slane %v152, %v454
    %457 = vbcast.lane.b32.xlu0 %v455, 256
    %v458 = vpop.permute.xlu0 %457
    %v459 = vlaneseq
    %v460 = vshrl.u32 %v459, 7
    %v461 = vsub.s32 1, %v460
    %v462 = vrot.slane %v152, %v461
    %464 = vbcast.lane.b32.xlu0 %v462, 256
    %v465 = vpop.permute.xlu0 %464
    %v466 = vlaneseq
    %v467 = vshrl.u32 %v466, 7
    %v468 = vsub.s32 2, %v467
    %v469 = vrot.slane %v152, %v468
    %471 = vbcast.lane.b32.xlu0 %v469, 256
    %v472 = vpop.permute.xlu0 %471
    %v473 = vlaneseq
    %v474 = vshrl.u32 %v473, 7
    %v475 = vsub.s32 3, %v474
    %v476 = vrot.slane %v152, %v475
    %478 = vbcast.lane.b32.xlu0 %v476, 256
    %v479 = vpop.permute.xlu0 %478
    %v480 = vlaneseq
    %v481 = vshrl.u32 %v480, 7
    %v482 = vsub.s32 4, %v481
    %v483 = vrot.slane %v152, %v482
    %485 = vbcast.lane.b32.xlu0 %v483, 256
    %v486 = vpop.permute.xlu0 %485
    %v487 = vlaneseq
    %v488 = vshrl.u32 %v487, 7
    %v489 = vsub.s32 5, %v488
    %v490 = vrot.slane %v152, %v489
    %492 = vbcast.lane.b32.xlu0 %v490, 256
    %v493 = vpop.permute.xlu0 %492
    %v494 = vlaneseq
    %v495 = vshrl.u32 %v494, 7
    %v496 = vsub.s32 6, %v495
    %v497 = vrot.slane %v152, %v496
    %499 = vbcast.lane.b32.xlu0 %v497, 256
    %v500 = vpop.permute.xlu0 %499
    %v501 = vlaneseq
    %v502 = vshrl.u32 %v501, 7
    %v503 = vsub.s32 7, %v502
    %v504 = vrot.slane %v152, %v503
    %506 = vbcast.lane.b32.xlu0 %v504, 256
    %v507 = vpop.permute.xlu0 %506
    %v508 = vlaneseq
    %v509 = vshrl.u32 %v508, 7
    %v510 = vsub.s32 0, %v509
    %v511 = vrot.slane %v153, %v510
    %513 = vbcast.lane.b32.xlu0 %v511, 256
    %v514 = vpop.permute.xlu0 %513
    %v515 = vlaneseq
    %v516 = vshrl.u32 %v515, 7
    %v517 = vsub.s32 1, %v516
    %v518 = vrot.slane %v153, %v517
    %520 = vbcast.lane.b32.xlu0 %v518, 256
    %v521 = vpop.permute.xlu0 %520
    %v522 = vlaneseq
    %v523 = vshrl.u32 %v522, 7
    %v524 = vsub.s32 2, %v523
    %v525 = vrot.slane %v153, %v524
    %527 = vbcast.lane.b32.xlu0 %v525, 256
    %v528 = vpop.permute.xlu0 %527
    %v529 = vlaneseq
    %v530 = vshrl.u32 %v529, 7
    %v531 = vsub.s32 3, %v530
    %v532 = vrot.slane %v153, %v531
    %534 = vbcast.lane.b32.xlu0 %v532, 256
    %v535 = vpop.permute.xlu0 %534
    %v536 = vlaneseq
    %v537 = vshrl.u32 %v536, 7
    %v538 = vsub.s32 4, %v537
    %v539 = vrot.slane %v153, %v538
    %541 = vbcast.lane.b32.xlu0 %v539, 256
    %v542 = vpop.permute.xlu0 %541
    %v543 = vlaneseq
    %v544 = vshrl.u32 %v543, 7
    %v545 = vsub.s32 5, %v544
    %v546 = vrot.slane %v153, %v545
    %548 = vbcast.lane.b32.xlu0 %v546, 256
    %v549 = vpop.permute.xlu0 %548
    %v550 = vlaneseq
    %v551 = vshrl.u32 %v550, 7
    %v552 = vsub.s32 6, %v551
    %v553 = vrot.slane %v153, %v552
    %555 = vbcast.lane.b32.xlu0 %v553, 256
    %v556 = vpop.permute.xlu0 %555
    %v557 = vlaneseq
    %v558 = vshrl.u32 %v557, 7
    %v559 = vsub.s32 7, %v558
    %v560 = vrot.slane %v153, %v559
    %562 = vbcast.lane.b32.xlu0 %v560, 256
    %v563 = vpop.permute.xlu0 %562
    %v564 = vlaneseq
    %v565 = vshrl.u32 %v564, 7
    %v566 = vsub.s32 0, %v565
    %v567 = vrot.slane %v154, %v566
    %569 = vbcast.lane.b32.xlu0 %v567, 256
    %v570 = vpop.permute.xlu0 %569
    %v571 = vlaneseq
    %v572 = vshrl.u32 %v571, 7
    %v573 = vsub.s32 1, %v572
    %v574 = vrot.slane %v154, %v573
    %576 = vbcast.lane.b32.xlu0 %v574, 256
    %v577 = vpop.permute.xlu0 %576
    %v578 = vlaneseq
    %v579 = vshrl.u32 %v578, 7
    %v580 = vsub.s32 2, %v579
    %v581 = vrot.slane %v154, %v580
    %583 = vbcast.lane.b32.xlu0 %v581, 256
    %v584 = vpop.permute.xlu0 %583
    %v585 = vlaneseq
    %v586 = vshrl.u32 %v585, 7
    %v587 = vsub.s32 3, %v586
    %v588 = vrot.slane %v154, %v587
    %590 = vbcast.lane.b32.xlu0 %v588, 256
    %v591 = vpop.permute.xlu0 %590
    %v592 = vlaneseq
    %v593 = vshrl.u32 %v592, 7
    %v594 = vsub.s32 4, %v593
    %v595 = vrot.slane %v154, %v594
    %597 = vbcast.lane.b32.xlu0 %v595, 256
    %v598 = vpop.permute.xlu0 %597
    %v599 = vlaneseq
    %v600 = vshrl.u32 %v599, 7
    %v601 = vsub.s32 5, %v600
    %v602 = vrot.slane %v154, %v601
    %604 = vbcast.lane.b32.xlu0 %v602, 256
    %v605 = vpop.permute.xlu0 %604
    %v606 = vlaneseq
    %v607 = vshrl.u32 %v606, 7
    %v608 = vsub.s32 6, %v607
    %v609 = vrot.slane %v154, %v608
    %611 = vbcast.lane.b32.xlu0 %v609, 256
    %v612 = vpop.permute.xlu0 %611
    %v613 = vlaneseq
    %v614 = vshrl.u32 %v613, 7
    %v615 = vsub.s32 7, %v614
    %v616 = vrot.slane %v154, %v615
    %618 = vbcast.lane.b32.xlu0 %v616, 256
    %v619 = vpop.permute.xlu0 %618
    %v620 = vlaneseq
    %v621 = vshrl.u32 %v620, 7
    %v622 = vsub.s32 0, %v621
    %v623 = vrot.slane %v155, %v622
    %625 = vbcast.lane.b32.xlu0 %v623, 256
    %v626 = vpop.permute.xlu0 %625
    %v627 = vlaneseq
    %v628 = vshrl.u32 %v627, 7
    %v629 = vsub.s32 1, %v628
    %v630 = vrot.slane %v155, %v629
    %632 = vbcast.lane.b32.xlu0 %v630, 256
    %v633 = vpop.permute.xlu0 %632
    %v634 = vlaneseq
    %v635 = vshrl.u32 %v634, 7
    %v636 = vsub.s32 2, %v635
    %v637 = vrot.slane %v155, %v636
    %639 = vbcast.lane.b32.xlu0 %v637, 256
    %v640 = vpop.permute.xlu0 %639
    %v641 = vlaneseq
    %v642 = vshrl.u32 %v641, 7
    %v643 = vsub.s32 3, %v642
    %v644 = vrot.slane %v155, %v643
    %646 = vbcast.lane.b32.xlu0 %v644, 256
    %v647 = vpop.permute.xlu0 %646
    %v648 = vlaneseq
    %v649 = vshrl.u32 %v648, 7
    %v650 = vsub.s32 4, %v649
    %v651 = vrot.slane %v155, %v650
    %653 = vbcast.lane.b32.xlu0 %v651, 256
    %v654 = vpop.permute.xlu0 %653
    %v655 = vlaneseq
    %v656 = vshrl.u32 %v655, 7
    %v657 = vsub.s32 5, %v656
    %v658 = vrot.slane %v155, %v657
    %660 = vbcast.lane.b32.xlu0 %v658, 256
    %v661 = vpop.permute.xlu0 %660
    %v662 = vlaneseq
    %v663 = vshrl.u32 %v662, 7
    %v664 = vsub.s32 6, %v663
    %v665 = vrot.slane %v155, %v664
    %667 = vbcast.lane.b32.xlu0 %v665, 256
    %v668 = vpop.permute.xlu0 %667
    %v669 = vlaneseq
    %v670 = vshrl.u32 %v669, 7
    %v671 = vsub.s32 7, %v670
    %v672 = vrot.slane %v155, %v671
    %674 = vbcast.lane.b32.xlu0 %v672, 256
    %v675 = vpop.permute.xlu0 %674
    %v676 = vlaneseq
    %v677 = vshrl.u32 %v676, 7
    %v678 = vsub.s32 0, %v677
    %v679 = vrot.slane %v156, %v678
    %681 = vbcast.lane.b32.xlu0 %v679, 256
    %v682 = vpop.permute.xlu0 %681
    %v683 = vlaneseq
    %v684 = vshrl.u32 %v683, 7
    %v685 = vsub.s32 1, %v684
    %v686 = vrot.slane %v156, %v685
    %688 = vbcast.lane.b32.xlu0 %v686, 256
    %v689 = vpop.permute.xlu0 %688
    %v690 = vlaneseq
    %v691 = vshrl.u32 %v690, 7
    %v692 = vsub.s32 2, %v691
    %v693 = vrot.slane %v156, %v692
    %695 = vbcast.lane.b32.xlu0 %v693, 256
    %v696 = vpop.permute.xlu0 %695
    %v697 = vlaneseq
    %v698 = vshrl.u32 %v697, 7
    %v699 = vsub.s32 3, %v698
    %v700 = vrot.slane %v156, %v699
    %702 = vbcast.lane.b32.xlu0 %v700, 256
    %v703 = vpop.permute.xlu0 %702
    %v704 = vlaneseq
    %v705 = vshrl.u32 %v704, 7
    %v706 = vsub.s32 4, %v705
    %v707 = vrot.slane %v156, %v706
    %709 = vbcast.lane.b32.xlu0 %v707, 256
    %v710 = vpop.permute.xlu0 %709
    %v711 = vlaneseq
    %v712 = vshrl.u32 %v711, 7
    %v713 = vsub.s32 5, %v712
    %v714 = vrot.slane %v156, %v713
    %716 = vbcast.lane.b32.xlu0 %v714, 256
    %v717 = vpop.permute.xlu0 %716
    %v718 = vlaneseq
    %v719 = vshrl.u32 %v718, 7
    %v720 = vsub.s32 6, %v719
    %v721 = vrot.slane %v156, %v720
    %723 = vbcast.lane.b32.xlu0 %v721, 256
    %v724 = vpop.permute.xlu0 %723
    %v725 = vlaneseq
    %v726 = vshrl.u32 %v725, 7
    %v727 = vsub.s32 7, %v726
    %v728 = vrot.slane %v156, %v727
    %730 = vbcast.lane.b32.xlu0 %v728, 256
    %v731 = vpop.permute.xlu0 %730
    %v732 = vlaneseq
    %v733 = vshrl.u32 %v732, 7
    %v734 = vsub.s32 0, %v733
    %v735 = vrot.slane %v157, %v734
    %737 = vbcast.lane.b32.xlu0 %v735, 256
    %v738 = vpop.permute.xlu0 %737
    %v739 = vlaneseq
    %v740 = vshrl.u32 %v739, 7
    %v741 = vsub.s32 1, %v740
    %v742 = vrot.slane %v157, %v741
    %744 = vbcast.lane.b32.xlu0 %v742, 256
    %v745 = vpop.permute.xlu0 %744
    %v746 = vlaneseq
    %v747 = vshrl.u32 %v746, 7
    %v748 = vsub.s32 2, %v747
    %v749 = vrot.slane %v157, %v748
    %751 = vbcast.lane.b32.xlu0 %v749, 256
    %v752 = vpop.permute.xlu0 %751
    %v753 = vlaneseq
    %v754 = vshrl.u32 %v753, 7
    %v755 = vsub.s32 3, %v754
    %v756 = vrot.slane %v157, %v755
    %758 = vbcast.lane.b32.xlu0 %v756, 256
    %v759 = vpop.permute.xlu0 %758
    %v760 = vlaneseq
    %v761 = vshrl.u32 %v760, 7
    %v762 = vsub.s32 4, %v761
    %v763 = vrot.slane %v157, %v762
    %765 = vbcast.lane.b32.xlu0 %v763, 256
    %v766 = vpop.permute.xlu0 %765
    %v767 = vlaneseq
    %v768 = vshrl.u32 %v767, 7
    %v769 = vsub.s32 5, %v768
    %v770 = vrot.slane %v157, %v769
    %772 = vbcast.lane.b32.xlu0 %v770, 256
    %v773 = vpop.permute.xlu0 %772
    %v774 = vlaneseq
    %v775 = vshrl.u32 %v774, 7
    %v776 = vsub.s32 6, %v775
    %v777 = vrot.slane %v157, %v776
    %779 = vbcast.lane.b32.xlu0 %v777, 256
    %v780 = vpop.permute.xlu0 %779
    %v781 = vlaneseq
    %v782 = vshrl.u32 %v781, 7
    %v783 = vsub.s32 7, %v782
    %v784 = vrot.slane %v157, %v783
    %786 = vbcast.lane.b32.xlu0 %v784, 256
    %v787 = vpop.permute.xlu0 %786
    %v788 = vmul.f32 %v346, %v302
    %v789 = vmul.f32 %v353, %v302
    %v790 = vmul.f32 %v360, %v302
    %v791 = vmul.f32 %v367, %v302
    %v792 = vmul.f32 %v374, %v302
    %v793 = vmul.f32 %v381, %v302
    %v794 = vmul.f32 %v388, %v302
    %v795 = vmul.f32 %v395, %v302
    %v796 = vmul.f32 %v402, %v307
    %v797 = vmul.f32 %v409, %v307
    %v798 = vmul.f32 %v416, %v307
    %v799 = vmul.f32 %v423, %v307
    %v800 = vmul.f32 %v430, %v307
    %v801 = vmul.f32 %v437, %v307
    %v802 = vmul.f32 %v444, %v307
    %v803 = vmul.f32 %v451, %v307
    %v804 = vmul.f32 %v458, %v312
    %v805 = vmul.f32 %v465, %v312
    %v806 = vmul.f32 %v472, %v312
    %v807 = vmul.f32 %v479, %v312
    %v808 = vmul.f32 %v486, %v312
    %v809 = vmul.f32 %v493, %v312
    %v810 = vmul.f32 %v500, %v312
    %v811 = vmul.f32 %v507, %v312
    %v812 = vmul.f32 %v514, %v317
    %v813 = vmul.f32 %v521, %v317
    %v814 = vmul.f32 %v528, %v317
    %v815 = vmul.f32 %v535, %v317
    %v816 = vmul.f32 %v542, %v317
    %v817 = vmul.f32 %v549, %v317
    %v818 = vmul.f32 %v556, %v317
    %v819 = vmul.f32 %v563, %v317
    %v820 = vmul.f32 %v570, %v322
    %v821 = vmul.f32 %v577, %v322
    %v822 = vmul.f32 %v584, %v322
    %v823 = vmul.f32 %v591, %v322
    %v824 = vmul.f32 %v598, %v322
    %v825 = vmul.f32 %v605, %v322
    %v826 = vmul.f32 %v612, %v322
    %v827 = vmul.f32 %v619, %v322
    %v828 = vmul.f32 %v626, %v327
    %v829 = vmul.f32 %v633, %v327
    %v830 = vmul.f32 %v640, %v327
    %v831 = vmul.f32 %v647, %v327
    %v832 = vmul.f32 %v654, %v327
    %v833 = vmul.f32 %v661, %v327
    %v834 = vmul.f32 %v668, %v327
    %v835 = vmul.f32 %v675, %v327
    %v836 = vmul.f32 %v682, %v332
    %v837 = vmul.f32 %v689, %v332
    %v838 = vmul.f32 %v696, %v332
    %v839 = vmul.f32 %v703, %v332
    %v840 = vmul.f32 %v710, %v332
    %v841 = vmul.f32 %v717, %v332
    %v842 = vmul.f32 %v724, %v332
    %v843 = vmul.f32 %v731, %v332
    %v844 = vmul.f32 %v738, %v337
    %v845 = vmul.f32 %v745, %v337
    %v846 = vmul.f32 %v752, %v337
    %v847 = vmul.f32 %v759, %v337
    %v848 = vmul.f32 %v766, %v337
    %v849 = vmul.f32 %v773, %v337
    %v850 = vmul.f32 %v780, %v337
    %v851 = vmul.f32 %v787, %v337
    %v852 = vsel %vm210, %v788, 0.0
    %v853 = vrot.slane %v852, 4
    %v854 = vadd.f32 %v852, %v853
    %v855 = vrot.slane %v854, 2
    %v856 = vadd.f32 %v854, %v855
    %v857 = vrot.slane %v856, 1
    %v858 = vadd.f32 %v856, %v857
    %v859 = vsel %vm210, %v789, 0.0
    %v860 = vrot.slane %v859, 4
    %v861 = vadd.f32 %v859, %v860
    %v862 = vrot.slane %v861, 2
    %v863 = vadd.f32 %v861, %v862
    %v864 = vrot.slane %v863, 1
    %v865 = vadd.f32 %v863, %v864
    %v866 = vsel %vm210, %v790, 0.0
    %v867 = vrot.slane %v866, 4
    %v868 = vadd.f32 %v866, %v867
    %v869 = vrot.slane %v868, 2
    %v870 = vadd.f32 %v868, %v869
    %v871 = vrot.slane %v870, 1
    %v872 = vadd.f32 %v870, %v871
    %v873 = vsel %vm210, %v791, 0.0
    %v874 = vrot.slane %v873, 4
    %v875 = vadd.f32 %v873, %v874
    %v876 = vrot.slane %v875, 2
    %v877 = vadd.f32 %v875, %v876
    %v878 = vrot.slane %v877, 1
    %v879 = vadd.f32 %v877, %v878
    %v880 = vsel %vm210, %v792, 0.0
    %v881 = vrot.slane %v880, 4
    %v882 = vadd.f32 %v880, %v881
    %v883 = vrot.slane %v882, 2
    %v884 = vadd.f32 %v882, %v883
    %v885 = vrot.slane %v884, 1
    %v886 = vadd.f32 %v884, %v885
    %v887 = vsel %vm210, %v793, 0.0
    %v888 = vrot.slane %v887, 4
    %v889 = vadd.f32 %v887, %v888
    %v890 = vrot.slane %v889, 2
    %v891 = vadd.f32 %v889, %v890
    %v892 = vrot.slane %v891, 1
    %v893 = vadd.f32 %v891, %v892
    %v894 = vsel %vm210, %v794, 0.0
    %v895 = vrot.slane %v894, 4
    %v896 = vadd.f32 %v894, %v895
    %v897 = vrot.slane %v896, 2
    %v898 = vadd.f32 %v896, %v897
    %v899 = vrot.slane %v898, 1
    %v900 = vadd.f32 %v898, %v899
    %v901 = vsel %vm210, %v795, 0.0
    %v902 = vrot.slane %v901, 4
    %v903 = vadd.f32 %v901, %v902
    %v904 = vrot.slane %v903, 2
    %v905 = vadd.f32 %v903, %v904
    %v906 = vrot.slane %v905, 1
    %v907 = vadd.f32 %v905, %v906
    %v908 = vsel %vm210, %v796, 0.0
    %v909 = vrot.slane %v908, 4
    %v910 = vadd.f32 %v908, %v909
    %v911 = vrot.slane %v910, 2
    %v912 = vadd.f32 %v910, %v911
    %v913 = vrot.slane %v912, 1
    %v914 = vadd.f32 %v912, %v913
    %v915 = vsel %vm210, %v797, 0.0
    %v916 = vrot.slane %v915, 4
    %v917 = vadd.f32 %v915, %v916
    %v918 = vrot.slane %v917, 2
    %v919 = vadd.f32 %v917, %v918
    %v920 = vrot.slane %v919, 1
    %v921 = vadd.f32 %v919, %v920
    %v922 = vsel %vm210, %v798, 0.0
    %v923 = vrot.slane %v922, 4
    %v924 = vadd.f32 %v922, %v923
    %v925 = vrot.slane %v924, 2
    %v926 = vadd.f32 %v924, %v925
    %v927 = vrot.slane %v926, 1
    %v928 = vadd.f32 %v926, %v927
    %v929 = vsel %vm210, %v799, 0.0
    %v930 = vrot.slane %v929, 4
    %v931 = vadd.f32 %v929, %v930
    %v932 = vrot.slane %v931, 2
    %v933 = vadd.f32 %v931, %v932
    %v934 = vrot.slane %v933, 1
    %v935 = vadd.f32 %v933, %v934
    %v936 = vsel %vm210, %v800, 0.0
    %v937 = vrot.slane %v936, 4
    %v938 = vadd.f32 %v936, %v937
    %v939 = vrot.slane %v938, 2
    %v940 = vadd.f32 %v938, %v939
    %v941 = vrot.slane %v940, 1
    %v942 = vadd.f32 %v940, %v941
    %v943 = vsel %vm210, %v801, 0.0
    %v944 = vrot.slane %v943, 4
    %v945 = vadd.f32 %v943, %v944
    %v946 = vrot.slane %v945, 2
    %v947 = vadd.f32 %v945, %v946
    %v948 = vrot.slane %v947, 1
    %v949 = vadd.f32 %v947, %v948
    %v950 = vsel %vm210, %v802, 0.0
    %v951 = vrot.slane %v950, 4
    %v952 = vadd.f32 %v950, %v951
    %v953 = vrot.slane %v952, 2
    %v954 = vadd.f32 %v952, %v953
    %v955 = vrot.slane %v954, 1
    %v956 = vadd.f32 %v954, %v955
    %v957 = vsel %vm210, %v803, 0.0
    %v958 = vrot.slane %v957, 4
    %v959 = vadd.f32 %v957, %v958
    %v960 = vrot.slane %v959, 2
    %v961 = vadd.f32 %v959, %v960
    %v962 = vrot.slane %v961, 1
    %v963 = vadd.f32 %v961, %v962
    %v964 = vsel %vm210, %v804, 0.0
    %v965 = vrot.slane %v964, 4
    %v966 = vadd.f32 %v964, %v965
    %v967 = vrot.slane %v966, 2
    %v968 = vadd.f32 %v966, %v967
    %v969 = vrot.slane %v968, 1
    %v970 = vadd.f32 %v968, %v969
    %v971 = vsel %vm210, %v805, 0.0
    %v972 = vrot.slane %v971, 4
    %v973 = vadd.f32 %v971, %v972
    %v974 = vrot.slane %v973, 2
    %v975 = vadd.f32 %v973, %v974
    %v976 = vrot.slane %v975, 1
    %v977 = vadd.f32 %v975, %v976
    %v978 = vsel %vm210, %v806, 0.0
    %v979 = vrot.slane %v978, 4
    %v980 = vadd.f32 %v978, %v979
    %v981 = vrot.slane %v980, 2
    %v982 = vadd.f32 %v980, %v981
    %v983 = vrot.slane %v982, 1
    %v984 = vadd.f32 %v982, %v983
    %v985 = vsel %vm210, %v807, 0.0
    %v986 = vrot.slane %v985, 4
    %v987 = vadd.f32 %v985, %v986
    %v988 = vrot.slane %v987, 2
    %v989 = vadd.f32 %v987, %v988
    %v990 = vrot.slane %v989, 1
    %v991 = vadd.f32 %v989, %v990
    %v992 = vsel %vm210, %v808, 0.0
    %v993 = vrot.slane %v992, 4
    %v994 = vadd.f32 %v992, %v993
    %v995 = vrot.slane %v994, 2
    %v996 = vadd.f32 %v994, %v995
    %v997 = vrot.slane %v996, 1
    %v998 = vadd.f32 %v996, %v997
    %v999 = vsel %vm210, %v809, 0.0
    %v1000 = vrot.slane %v999, 4
    %v1001 = vadd.f32 %v999, %v1000
    %v1002 = vrot.slane %v1001, 2
    %v1003 = vadd.f32 %v1001, %v1002
    %v1004 = vrot.slane %v1003, 1
    %v1005 = vadd.f32 %v1003, %v1004
    %v1006 = vsel %vm210, %v810, 0.0
    %v1007 = vrot.slane %v1006, 4
    %v1008 = vadd.f32 %v1006, %v1007
    %v1009 = vrot.slane %v1008, 2
    %v1010 = vadd.f32 %v1008, %v1009
    %v1011 = vrot.slane %v1010, 1
    %v1012 = vadd.f32 %v1010, %v1011
    %v1013 = vsel %vm210, %v811, 0.0
    %v1014 = vrot.slane %v1013, 4
    %v1015 = vadd.f32 %v1013, %v1014
    %v1016 = vrot.slane %v1015, 2
    %v1017 = vadd.f32 %v1015, %v1016
    %v1018 = vrot.slane %v1017, 1
    %v1019 = vadd.f32 %v1017, %v1018
    %v1020 = vsel %vm210, %v812, 0.0
    %v1021 = vrot.slane %v1020, 4
    %v1022 = vadd.f32 %v1020, %v1021
    %v1023 = vrot.slane %v1022, 2
    %v1024 = vadd.f32 %v1022, %v1023
    %v1025 = vrot.slane %v1024, 1
    %v1026 = vadd.f32 %v1024, %v1025
    %v1027 = vsel %vm210, %v813, 0.0
    %v1028 = vrot.slane %v1027, 4
    %v1029 = vadd.f32 %v1027, %v1028
    %v1030 = vrot.slane %v1029, 2
    %v1031 = vadd.f32 %v1029, %v1030
    %v1032 = vrot.slane %v1031, 1
    %v1033 = vadd.f32 %v1031, %v1032
    %v1034 = vsel %vm210, %v814, 0.0
    %v1035 = vrot.slane %v1034, 4
    %v1036 = vadd.f32 %v1034, %v1035
    %v1037 = vrot.slane %v1036, 2
    %v1038 = vadd.f32 %v1036, %v1037
    %v1039 = vrot.slane %v1038, 1
    %v1040 = vadd.f32 %v1038, %v1039
    %v1041 = vsel %vm210, %v815, 0.0
    %v1042 = vrot.slane %v1041, 4
    %v1043 = vadd.f32 %v1041, %v1042
    %v1044 = vrot.slane %v1043, 2
    %v1045 = vadd.f32 %v1043, %v1044
    %v1046 = vrot.slane %v1045, 1
    %v1047 = vadd.f32 %v1045, %v1046
    %v1048 = vsel %vm210, %v816, 0.0
    %v1049 = vrot.slane %v1048, 4
    %v1050 = vadd.f32 %v1048, %v1049
    %v1051 = vrot.slane %v1050, 2
    %v1052 = vadd.f32 %v1050, %v1051
    %v1053 = vrot.slane %v1052, 1
    %v1054 = vadd.f32 %v1052, %v1053
    %v1055 = vsel %vm210, %v817, 0.0
    %v1056 = vrot.slane %v1055, 4
    %v1057 = vadd.f32 %v1055, %v1056
    %v1058 = vrot.slane %v1057, 2
    %v1059 = vadd.f32 %v1057, %v1058
    %v1060 = vrot.slane %v1059, 1
    %v1061 = vadd.f32 %v1059, %v1060
    %v1062 = vsel %vm210, %v818, 0.0
    %v1063 = vrot.slane %v1062, 4
    %v1064 = vadd.f32 %v1062, %v1063
    %v1065 = vrot.slane %v1064, 2
    %v1066 = vadd.f32 %v1064, %v1065
    %v1067 = vrot.slane %v1066, 1
    %v1068 = vadd.f32 %v1066, %v1067
    %v1069 = vsel %vm210, %v819, 0.0
    %v1070 = vrot.slane %v1069, 4
    %v1071 = vadd.f32 %v1069, %v1070
    %v1072 = vrot.slane %v1071, 2
    %v1073 = vadd.f32 %v1071, %v1072
    %v1074 = vrot.slane %v1073, 1
    %v1075 = vadd.f32 %v1073, %v1074
    %v1076 = vsel %vm210, %v820, 0.0
    %v1077 = vrot.slane %v1076, 4
    %v1078 = vadd.f32 %v1076, %v1077
    %v1079 = vrot.slane %v1078, 2
    %v1080 = vadd.f32 %v1078, %v1079
    %v1081 = vrot.slane %v1080, 1
    %v1082 = vadd.f32 %v1080, %v1081
    %v1083 = vsel %vm210, %v821, 0.0
    %v1084 = vrot.slane %v1083, 4
    %v1085 = vadd.f32 %v1083, %v1084
    %v1086 = vrot.slane %v1085, 2
    %v1087 = vadd.f32 %v1085, %v1086
    %v1088 = vrot.slane %v1087, 1
    %v1089 = vadd.f32 %v1087, %v1088
    %v1090 = vsel %vm210, %v822, 0.0
    %v1091 = vrot.slane %v1090, 4
    %v1092 = vadd.f32 %v1090, %v1091
    %v1093 = vrot.slane %v1092, 2
    %v1094 = vadd.f32 %v1092, %v1093
    %v1095 = vrot.slane %v1094, 1
    %v1096 = vadd.f32 %v1094, %v1095
    %v1097 = vsel %vm210, %v823, 0.0
    %v1098 = vrot.slane %v1097, 4
    %v1099 = vadd.f32 %v1097, %v1098
    %v1100 = vrot.slane %v1099, 2
    %v1101 = vadd.f32 %v1099, %v1100
    %v1102 = vrot.slane %v1101, 1
    %v1103 = vadd.f32 %v1101, %v1102
    %v1104 = vsel %vm210, %v824, 0.0
    %v1105 = vrot.slane %v1104, 4
    %v1106 = vadd.f32 %v1104, %v1105
    %v1107 = vrot.slane %v1106, 2
    %v1108 = vadd.f32 %v1106, %v1107
    %v1109 = vrot.slane %v1108, 1
    %v1110 = vadd.f32 %v1108, %v1109
    %v1111 = vsel %vm210, %v825, 0.0
    %v1112 = vrot.slane %v1111, 4
    %v1113 = vadd.f32 %v1111, %v1112
    %v1114 = vrot.slane %v1113, 2
    %v1115 = vadd.f32 %v1113, %v1114
    %v1116 = vrot.slane %v1115, 1
    %v1117 = vadd.f32 %v1115, %v1116
    %v1118 = vsel %vm210, %v826, 0.0
    %v1119 = vrot.slane %v1118, 4
    %v1120 = vadd.f32 %v1118, %v1119
    %v1121 = vrot.slane %v1120, 2
    %v1122 = vadd.f32 %v1120, %v1121
    %v1123 = vrot.slane %v1122, 1
    %v1124 = vadd.f32 %v1122, %v1123
    %v1125 = vsel %vm210, %v827, 0.0
    %v1126 = vrot.slane %v1125, 4
    %v1127 = vadd.f32 %v1125, %v1126
    %v1128 = vrot.slane %v1127, 2
    %v1129 = vadd.f32 %v1127, %v1128
    %v1130 = vrot.slane %v1129, 1
    %v1131 = vadd.f32 %v1129, %v1130
    %v1132 = vsel %vm210, %v828, 0.0
    %v1133 = vrot.slane %v1132, 4
    %v1134 = vadd.f32 %v1132, %v1133
    %v1135 = vrot.slane %v1134, 2
    %v1136 = vadd.f32 %v1134, %v1135
    %v1137 = vrot.slane %v1136, 1
    %v1138 = vadd.f32 %v1136, %v1137
    %v1139 = vsel %vm210, %v829, 0.0
    %v1140 = vrot.slane %v1139, 4
    %v1141 = vadd.f32 %v1139, %v1140
    %v1142 = vrot.slane %v1141, 2
    %v1143 = vadd.f32 %v1141, %v1142
    %v1144 = vrot.slane %v1143, 1
    %v1145 = vadd.f32 %v1143, %v1144
    %v1146 = vsel %vm210, %v830, 0.0
    %v1147 = vrot.slane %v1146, 4
    %v1148 = vadd.f32 %v1146, %v1147
    %v1149 = vrot.slane %v1148, 2
    %v1150 = vadd.f32 %v1148, %v1149
    %v1151 = vrot.slane %v1150, 1
    %v1152 = vadd.f32 %v1150, %v1151
    %v1153 = vsel %vm210, %v831, 0.0
    %v1154 = vrot.slane %v1153, 4
    %v1155 = vadd.f32 %v1153, %v1154
    %v1156 = vrot.slane %v1155, 2
    %v1157 = vadd.f32 %v1155, %v1156
    %v1158 = vrot.slane %v1157, 1
    %v1159 = vadd.f32 %v1157, %v1158
    %v1160 = vsel %vm210, %v832, 0.0
    %v1161 = vrot.slane %v1160, 4
    %v1162 = vadd.f32 %v1160, %v1161
    %v1163 = vrot.slane %v1162, 2
    %v1164 = vadd.f32 %v1162, %v1163
    %v1165 = vrot.slane %v1164, 1
    %v1166 = vadd.f32 %v1164, %v1165
    %v1167 = vsel %vm210, %v833, 0.0
    %v1168 = vrot.slane %v1167, 4
    %v1169 = vadd.f32 %v1167, %v1168
    %v1170 = vrot.slane %v1169, 2
    %v1171 = vadd.f32 %v1169, %v1170
    %v1172 = vrot.slane %v1171, 1
    %v1173 = vadd.f32 %v1171, %v1172
    %v1174 = vsel %vm210, %v834, 0.0
    %v1175 = vrot.slane %v1174, 4
    %v1176 = vadd.f32 %v1174, %v1175
    %v1177 = vrot.slane %v1176, 2
    %v1178 = vadd.f32 %v1176, %v1177
    %v1179 = vrot.slane %v1178, 1
    %v1180 = vadd.f32 %v1178, %v1179
    %v1181 = vsel %vm210, %v835, 0.0
    %v1182 = vrot.slane %v1181, 4
    %v1183 = vadd.f32 %v1181, %v1182
    %v1184 = vrot.slane %v1183, 2
    %v1185 = vadd.f32 %v1183, %v1184
    %v1186 = vrot.slane %v1185, 1
    %v1187 = vadd.f32 %v1185, %v1186
    %v1188 = vsel %vm210, %v836, 0.0
    %v1189 = vrot.slane %v1188, 4
    %v1190 = vadd.f32 %v1188, %v1189
    %v1191 = vrot.slane %v1190, 2
    %v1192 = vadd.f32 %v1190, %v1191
    %v1193 = vrot.slane %v1192, 1
    %v1194 = vadd.f32 %v1192, %v1193
    %v1195 = vsel %vm210, %v837, 0.0
    %v1196 = vrot.slane %v1195, 4
    %v1197 = vadd.f32 %v1195, %v1196
    %v1198 = vrot.slane %v1197, 2
    %v1199 = vadd.f32 %v1197, %v1198
    %v1200 = vrot.slane %v1199, 1
    %v1201 = vadd.f32 %v1199, %v1200
    %v1202 = vsel %vm210, %v838, 0.0
    %v1203 = vrot.slane %v1202, 4
    %v1204 = vadd.f32 %v1202, %v1203
    %v1205 = vrot.slane %v1204, 2
    %v1206 = vadd.f32 %v1204, %v1205
    %v1207 = vrot.slane %v1206, 1
    %v1208 = vadd.f32 %v1206, %v1207
    %v1209 = vsel %vm210, %v839, 0.0
    %v1210 = vrot.slane %v1209, 4
    %v1211 = vadd.f32 %v1209, %v1210
    %v1212 = vrot.slane %v1211, 2
    %v1213 = vadd.f32 %v1211, %v1212
    %v1214 = vrot.slane %v1213, 1
    %v1215 = vadd.f32 %v1213, %v1214
    %v1216 = vsel %vm210, %v840, 0.0
    %v1217 = vrot.slane %v1216, 4
    %v1218 = vadd.f32 %v1216, %v1217
    %v1219 = vrot.slane %v1218, 2
    %v1220 = vadd.f32 %v1218, %v1219
    %v1221 = vrot.slane %v1220, 1
    %v1222 = vadd.f32 %v1220, %v1221
    %v1223 = vsel %vm210, %v841, 0.0
    %v1224 = vrot.slane %v1223, 4
    %v1225 = vadd.f32 %v1223, %v1224
    %v1226 = vrot.slane %v1225, 2
    %v1227 = vadd.f32 %v1225, %v1226
    %v1228 = vrot.slane %v1227, 1
    %v1229 = vadd.f32 %v1227, %v1228
    %v1230 = vsel %vm210, %v842, 0.0
    %v1231 = vrot.slane %v1230, 4
    %v1232 = vadd.f32 %v1230, %v1231
    %v1233 = vrot.slane %v1232, 2
    %v1234 = vadd.f32 %v1232, %v1233
    %v1235 = vrot.slane %v1234, 1
    %v1236 = vadd.f32 %v1234, %v1235
    %v1237 = vsel %vm210, %v843, 0.0
    %v1238 = vrot.slane %v1237, 4
    %v1239 = vadd.f32 %v1237, %v1238
    %v1240 = vrot.slane %v1239, 2
    %v1241 = vadd.f32 %v1239, %v1240
    %v1242 = vrot.slane %v1241, 1
    %v1243 = vadd.f32 %v1241, %v1242
    %v1244 = vsel %vm210, %v844, 0.0
    %v1245 = vrot.slane %v1244, 4
    %v1246 = vadd.f32 %v1244, %v1245
    %v1247 = vrot.slane %v1246, 2
    %v1248 = vadd.f32 %v1246, %v1247
    %v1249 = vrot.slane %v1248, 1
    %v1250 = vadd.f32 %v1248, %v1249
    %v1251 = vsel %vm210, %v845, 0.0
    %v1252 = vrot.slane %v1251, 4
    %v1253 = vadd.f32 %v1251, %v1252
    %v1254 = vrot.slane %v1253, 2
    %v1255 = vadd.f32 %v1253, %v1254
    %v1256 = vrot.slane %v1255, 1
    %v1257 = vadd.f32 %v1255, %v1256
    %v1258 = vsel %vm210, %v846, 0.0
    %v1259 = vrot.slane %v1258, 4
    %v1260 = vadd.f32 %v1258, %v1259
    %v1261 = vrot.slane %v1260, 2
    %v1262 = vadd.f32 %v1260, %v1261
    %v1263 = vrot.slane %v1262, 1
    %v1264 = vadd.f32 %v1262, %v1263
    %v1265 = vsel %vm210, %v847, 0.0
    %v1266 = vrot.slane %v1265, 4
    %v1267 = vadd.f32 %v1265, %v1266
    %v1268 = vrot.slane %v1267, 2
    %v1269 = vadd.f32 %v1267, %v1268
    %v1270 = vrot.slane %v1269, 1
    %v1271 = vadd.f32 %v1269, %v1270
    %v1272 = vsel %vm210, %v848, 0.0
    %v1273 = vrot.slane %v1272, 4
    %v1274 = vadd.f32 %v1272, %v1273
    %v1275 = vrot.slane %v1274, 2
    %v1276 = vadd.f32 %v1274, %v1275
    %v1277 = vrot.slane %v1276, 1
    %v1278 = vadd.f32 %v1276, %v1277
    %v1279 = vsel %vm210, %v849, 0.0
    %v1280 = vrot.slane %v1279, 4
    %v1281 = vadd.f32 %v1279, %v1280
    %v1282 = vrot.slane %v1281, 2
    %v1283 = vadd.f32 %v1281, %v1282
    %v1284 = vrot.slane %v1283, 1
    %v1285 = vadd.f32 %v1283, %v1284
    %v1286 = vsel %vm210, %v850, 0.0
    %v1287 = vrot.slane %v1286, 4
    %v1288 = vadd.f32 %v1286, %v1287
    %v1289 = vrot.slane %v1288, 2
    %v1290 = vadd.f32 %v1288, %v1289
    %v1291 = vrot.slane %v1290, 1
    %v1292 = vadd.f32 %v1290, %v1291
    %v1293 = vsel %vm210, %v851, 0.0
    %v1294 = vrot.slane %v1293, 4
    %v1295 = vadd.f32 %v1293, %v1294
    %v1296 = vrot.slane %v1295, 2
    %v1297 = vadd.f32 %v1295, %v1296
    %v1298 = vrot.slane %v1297, 1
    %v1299 = vadd.f32 %v1297, %v1298
    %v1300 = vld [vmem:[%s4] sm:$0x1]
    %v1302 = vlaneseq
    %v1303 = vshrl.u32 %v1302, 7
    %v1304 = vsub.s32 0, %v1303
    %v1305 = vrot.slane %v1300, %v1304
    %v1307 = vadd.f32 %v858, %v1305
    %v1308 = vadd.f32 %v865, %v1305
    %v1309 = vadd.f32 %v872, %v1305
    %v1310 = vadd.f32 %v879, %v1305
    %v1311 = vadd.f32 %v886, %v1305
    %v1312 = vadd.f32 %v893, %v1305
    %v1313 = vadd.f32 %v900, %v1305
    %v1314 = vadd.f32 %v907, %v1305
    %v1315 = vadd.f32 %v914, %v1305
    %v1316 = vadd.f32 %v921, %v1305
    %v1317 = vadd.f32 %v928, %v1305
    %v1318 = vadd.f32 %v935, %v1305
    %v1319 = vadd.f32 %v942, %v1305
    %v1320 = vadd.f32 %v949, %v1305
    %v1321 = vadd.f32 %v956, %v1305
    %v1322 = vadd.f32 %v963, %v1305
    %v1323 = vadd.f32 %v970, %v1305
    %v1324 = vadd.f32 %v977, %v1305
    %v1325 = vadd.f32 %v984, %v1305
    %v1326 = vadd.f32 %v991, %v1305
    %v1327 = vadd.f32 %v998, %v1305
    %v1328 = vadd.f32 %v1005, %v1305
    %v1329 = vadd.f32 %v1012, %v1305
    %v1330 = vadd.f32 %v1019, %v1305
    %v1331 = vadd.f32 %v1026, %v1305
    %v1332 = vadd.f32 %v1033, %v1305
    %v1333 = vadd.f32 %v1040, %v1305
    %v1334 = vadd.f32 %v1047, %v1305
    %v1335 = vadd.f32 %v1054, %v1305
    %v1336 = vadd.f32 %v1061, %v1305
    %v1337 = vadd.f32 %v1068, %v1305
    %v1338 = vadd.f32 %v1075, %v1305
    %v1339 = vadd.f32 %v1082, %v1305
    %v1340 = vadd.f32 %v1089, %v1305
    %v1341 = vadd.f32 %v1096, %v1305
    %v1342 = vadd.f32 %v1103, %v1305
    %v1343 = vadd.f32 %v1110, %v1305
    %v1344 = vadd.f32 %v1117, %v1305
    %v1345 = vadd.f32 %v1124, %v1305
    %v1346 = vadd.f32 %v1131, %v1305
    %v1347 = vadd.f32 %v1138, %v1305
    %v1348 = vadd.f32 %v1145, %v1305
    %v1349 = vadd.f32 %v1152, %v1305
    %v1350 = vadd.f32 %v1159, %v1305
    %v1351 = vadd.f32 %v1166, %v1305
    %v1352 = vadd.f32 %v1173, %v1305
    %v1353 = vadd.f32 %v1180, %v1305
    %v1354 = vadd.f32 %v1187, %v1305
    %v1355 = vadd.f32 %v1194, %v1305
    %v1356 = vadd.f32 %v1201, %v1305
    %v1357 = vadd.f32 %v1208, %v1305
    %v1358 = vadd.f32 %v1215, %v1305
    %v1359 = vadd.f32 %v1222, %v1305
    %v1360 = vadd.f32 %v1229, %v1305
    %v1361 = vadd.f32 %v1236, %v1305
    %v1362 = vadd.f32 %v1243, %v1305
    %v1363 = vadd.f32 %v1250, %v1305
    %v1364 = vadd.f32 %v1257, %v1305
    %v1365 = vadd.f32 %v1264, %v1305
    %v1366 = vadd.f32 %v1271, %v1305
    %v1367 = vadd.f32 %v1278, %v1305
    %v1368 = vadd.f32 %v1285, %v1305
    %v1369 = vadd.f32 %v1292, %v1305
    %v1370 = vadd.f32 %v1299, %v1305
    %v1371 = vmax.f32 %v1307, 0.0
    %v1372 = vmax.f32 %v1308, 0.0
    %v1373 = vmax.f32 %v1309, 0.0
    %v1374 = vmax.f32 %v1310, 0.0
    %v1375 = vmax.f32 %v1311, 0.0
    %v1376 = vmax.f32 %v1312, 0.0
    %v1377 = vmax.f32 %v1313, 0.0
    %v1378 = vmax.f32 %v1314, 0.0
    %v1379 = vmax.f32 %v1315, 0.0
    %v1380 = vmax.f32 %v1316, 0.0
    %v1381 = vmax.f32 %v1317, 0.0
    %v1382 = vmax.f32 %v1318, 0.0
    %v1383 = vmax.f32 %v1319, 0.0
    %v1384 = vmax.f32 %v1320, 0.0
    %v1385 = vmax.f32 %v1321, 0.0
    %v1386 = vmax.f32 %v1322, 0.0
    %v1387 = vmax.f32 %v1323, 0.0
    %v1388 = vmax.f32 %v1324, 0.0
    %v1389 = vmax.f32 %v1325, 0.0
    %v1390 = vmax.f32 %v1326, 0.0
    %v1391 = vmax.f32 %v1327, 0.0
    %v1392 = vmax.f32 %v1328, 0.0
    %v1393 = vmax.f32 %v1329, 0.0
    %v1394 = vmax.f32 %v1330, 0.0
    %v1395 = vmax.f32 %v1331, 0.0
    %v1396 = vmax.f32 %v1332, 0.0
    %v1397 = vmax.f32 %v1333, 0.0
    %v1398 = vmax.f32 %v1334, 0.0
    %v1399 = vmax.f32 %v1335, 0.0
    %v1400 = vmax.f32 %v1336, 0.0
    %v1401 = vmax.f32 %v1337, 0.0
    %v1402 = vmax.f32 %v1338, 0.0
    %v1403 = vmax.f32 %v1339, 0.0
    %v1404 = vmax.f32 %v1340, 0.0
    %v1405 = vmax.f32 %v1341, 0.0
    %v1406 = vmax.f32 %v1342, 0.0
    %v1407 = vmax.f32 %v1343, 0.0
    %v1408 = vmax.f32 %v1344, 0.0
    %v1409 = vmax.f32 %v1345, 0.0
    %v1410 = vmax.f32 %v1346, 0.0
    %v1411 = vmax.f32 %v1347, 0.0
    %v1412 = vmax.f32 %v1348, 0.0
    %v1413 = vmax.f32 %v1349, 0.0
    %v1414 = vmax.f32 %v1350, 0.0
    %v1415 = vmax.f32 %v1351, 0.0
    %v1416 = vmax.f32 %v1352, 0.0
    %v1417 = vmax.f32 %v1353, 0.0
    %v1418 = vmax.f32 %v1354, 0.0
    %v1419 = vmax.f32 %v1355, 0.0
    %v1420 = vmax.f32 %v1356, 0.0
    %v1421 = vmax.f32 %v1357, 0.0
    %v1422 = vmax.f32 %v1358, 0.0
    %v1423 = vmax.f32 %v1359, 0.0
    %v1424 = vmax.f32 %v1360, 0.0
    %v1425 = vmax.f32 %v1361, 0.0
    %v1426 = vmax.f32 %v1362, 0.0
    %v1427 = vmax.f32 %v1363, 0.0
    %v1428 = vmax.f32 %v1364, 0.0
    %v1429 = vmax.f32 %v1365, 0.0
    %v1430 = vmax.f32 %v1366, 0.0
    %v1431 = vmax.f32 %v1367, 0.0
    %v1432 = vmax.f32 %v1368, 0.0
    %v1433 = vmax.f32 %v1369, 0.0
    %v1434 = vmax.f32 %v1370, 0.0
    %v1435 = vld [vmem:[#allocation7] sm:$0xff]
    %v1436 = vld [vmem:[#allocation7 + $0x8] sm:$0xff]
    %v1437 = vld [vmem:[#allocation7 + $0x10] sm:$0xff]
    %v1438 = vld [vmem:[#allocation7 + $0x18] sm:$0xff]
    %v1503 = vrot.slane %v1372, 7
    %vm1504 = vcmask 1041409
    %v1505 = vsel %vm1504, %v1503, %v1371
    %v1506 = vrot.slane %v1373, 6
    %vm1507 = vcmask 1042434
    %v1508 = vsel %vm1507, %v1506, %v1505
    %v1509 = vrot.slane %v1374, 5
    %vm1510 = vcmask 1043459
    %v1511 = vsel %vm1510, %v1509, %v1508
    %v1512 = vrot.slane %v1375, 4
    %vm1513 = vcmask 1044484
    %v1514 = vsel %vm1513, %v1512, %v1511
    %v1515 = vrot.slane %v1376, 3
    %vm1516 = vcmask 1045509
    %v1517 = vsel %vm1516, %v1515, %v1514
    %v1518 = vrot.slane %v1377, 2
    %vm1519 = vcmask 1046534
    %v1520 = vsel %vm1519, %v1518, %v1517
    %v1521 = vrot.slane %v1378, 1
    %vm1522 = vcmask 1047559
    %v1523 = vsel %vm1522, %v1521, %v1520
    %v1524 = vrot.slane %v1380, 7
    %v1525 = vsel %vm1504, %v1524, %v1379
    %v1526 = vrot.slane %v1381, 6
    %v1527 = vsel %vm1507, %v1526, %v1525
    %v1528 = vrot.slane %v1382, 5
    %v1529 = vsel %vm1510, %v1528, %v1527
    %v1530 = vrot.slane %v1383, 4
    %v1531 = vsel %vm1513, %v1530, %v1529
    %v1532 = vrot.slane %v1384, 3
    %v1533 = vsel %vm1516, %v1532, %v1531
    %v1534 = vrot.slane %v1385, 2
    %v1535 = vsel %vm1519, %v1534, %v1533
    %v1536 = vrot.slane %v1386, 1
    %v1537 = vsel %vm1522, %v1536, %v1535
    %v1538 = vrot.slane %v1388, 7
    %v1539 = vsel %vm1504, %v1538, %v1387
    %v1540 = vrot.slane %v1389, 6
    %v1541 = vsel %vm1507, %v1540, %v1539
    %v1542 = vrot.slane %v1390, 5
    %v1543 = vsel %vm1510, %v1542, %v1541
    %v1544 = vrot.slane %v1391, 4
    %v1545 = vsel %vm1513, %v1544, %v1543
    %v1546 = vrot.slane %v1392, 3
    %v1547 = vsel %vm1516, %v1546, %v1545
    %v1548 = vrot.slane %v1393, 2
    %v1549 = vsel %vm1519, %v1548, %v1547
    %v1550 = vrot.slane %v1394, 1
    %v1551 = vsel %vm1522, %v1550, %v1549
    %v1552 = vrot.slane %v1396, 7
    %v1553 = vsel %vm1504, %v1552, %v1395
    %v1554 = vrot.slane %v1397, 6
    %v1555 = vsel %vm1507, %v1554, %v1553
    %v1556 = vrot.slane %v1398, 5
    %v1557 = vsel %vm1510, %v1556, %v1555
    %v1558 = vrot.slane %v1399, 4
    %v1559 = vsel %vm1513, %v1558, %v1557
    %v1560 = vrot.slane %v1400, 3
    %v1561 = vsel %vm1516, %v1560, %v1559
    %v1562 = vrot.slane %v1401, 2
    %v1563 = vsel %vm1519, %v1562, %v1561
    %v1564 = vrot.slane %v1402, 1
    %v1565 = vsel %vm1522, %v1564, %v1563
    %v1566 = vrot.slane %v1404, 7
    %v1567 = vsel %vm1504, %v1566, %v1403
    %v1568 = vrot.slane %v1405, 6
    %v1569 = vsel %vm1507, %v1568, %v1567
    %v1570 = vrot.slane %v1406, 5
    %v1571 = vsel %vm1510, %v1570, %v1569
    %v1572 = vrot.slane %v1407, 4
    %v1573 = vsel %vm1513, %v1572, %v1571
    %v1574 = vrot.slane %v1408, 3
    %v1575 = vsel %vm1516, %v1574, %v1573
    %v1576 = vrot.slane %v1409, 2
    %v1577 = vsel %vm1519, %v1576, %v1575
    %v1578 = vrot.slane %v1410, 1
    %v1579 = vsel %vm1522, %v1578, %v1577
    %v1580 = vrot.slane %v1412, 7
    %v1581 = vsel %vm1504, %v1580, %v1411
    %v1582 = vrot.slane %v1413, 6
    %v1583 = vsel %vm1507, %v1582, %v1581
    %v1584 = vrot.slane %v1414, 5
    %v1585 = vsel %vm1510, %v1584, %v1583
    %v1586 = vrot.slane %v1415, 4
    %v1587 = vsel %vm1513, %v1586, %v1585
    %v1588 = vrot.slane %v1416, 3
    %v1589 = vsel %vm1516, %v1588, %v1587
    %v1590 = vrot.slane %v1417, 2
    %v1591 = vsel %vm1519, %v1590, %v1589
    %v1592 = vrot.slane %v1418, 1
    %v1593 = vsel %vm1522, %v1592, %v1591
    %v1594 = vrot.slane %v1420, 7
    %v1595 = vsel %vm1504, %v1594, %v1419
    %v1596 = vrot.slane %v1421, 6
    %v1597 = vsel %vm1507, %v1596, %v1595
    %v1598 = vrot.slane %v1422, 5
    %v1599 = vsel %vm1510, %v1598, %v1597
    %v1600 = vrot.slane %v1423, 4
    %v1601 = vsel %vm1513, %v1600, %v1599
    %v1602 = vrot.slane %v1424, 3
    %v1603 = vsel %vm1516, %v1602, %v1601
    %v1604 = vrot.slane %v1425, 2
    %v1605 = vsel %vm1519, %v1604, %v1603
    %v1606 = vrot.slane %v1426, 1
    %v1607 = vsel %vm1522, %v1606, %v1605
    %v1608 = vrot.slane %v1428, 7
    %v1609 = vsel %vm1504, %v1608, %v1427
    %v1610 = vrot.slane %v1429, 6
    %v1611 = vsel %vm1507, %v1610, %v1609
    %v1612 = vrot.slane %v1430, 5
    %v1613 = vsel %vm1510, %v1612, %v1611
    %v1614 = vrot.slane %v1431, 4
    %v1615 = vsel %vm1513, %v1614, %v1613
    %v1616 = vrot.slane %v1432, 3
    %v1617 = vsel %vm1516, %v1616, %v1615
    %v1618 = vrot.slane %v1433, 2
    %v1619 = vsel %vm1519, %v1618, %v1617
    %v1620 = vrot.slane %v1434, 1
    %v1621 = vsel %vm1522, %v1620, %v1619
    %v1622 = vsel %vm210, %v1523, 0
    %v1624 = vsel %vm210, %v1537, 0
    %v1626 = vsel %vm210, %v1551, 0
    %v1628 = vsel %vm210, %v1565, 0
    %v1630 = vsel %vm210, %v1579, 0
    %v1632 = vsel %vm210, %v1593, 0
    %v1634 = vsel %vm210, %v1607, 0
    %v1636 = vsel %vm210, %v1621, 0
    %1638 = vmatprep.subr.mxu0 0.0
    %1639 = vmatpush1.msra.mxu0 %v1435
    %1640 = vmatprep.subr.mxu0 0.0
    %1641 = vmatpush1.msra.mxu0 %v1436
    %1642 = vmatprep.subr.mxu0 0.0
    %1643 = vmatpush1.msra.mxu0 %v1437
    %1644 = vmatprep.subr.mxu0 0.0
    %1645 = vmatpush1.msra.mxu0 %v1438
    %1646 = vmatprep.subr.mxu0 0.0
    %1647 = vmatpush1.msra.mxu0 0.0
    %1648 = vmatprep.subr.mxu0 0.0
    %1649 = vmatpush1.msra.mxu0 0.0
    %1650 = vmatprep.subr.mxu0 0.0
    %1651 = vmatpush1.msra.mxu0 0.0
    %1652 = vmatprep.subr.mxu0 0.0
    %1653 = vmatpush1.msra.mxu0 0.0
    %1654 = vmatprep.subr.mxu0 0.0
    %1655 = vmatpush1.msra.mxu0 0.0
    %1656 = vmatprep.subr.mxu0 0.0
    %1657 = vmatpush1.msra.mxu0 0.0
    %1658 = vmatprep.subr.mxu0 0.0
    %1659 = vmatpush1.msra.mxu0 0.0
    %1660 = vmatprep.subr.mxu0 0.0
    %1661 = vmatpush1.msra.mxu0 0.0
    %1662 = vmatprep.subr.mxu0 0.0
    %1663 = vmatpush1.msra.mxu0 0.0
    %1664 = vmatprep.subr.mxu0 0.0
    %1665 = vmatpush1.msra.mxu0 0.0
    %1666 = vmatprep.subr.mxu0 0.0
    %1667 = vmatpush1.msra.mxu0 0.0
    %1668 = vmatprep.subr.mxu0 0.0
    %1669 = vmatpush1.msra.mxu0 0.0
    %1670 = vmatprep.subr.mxu0 0.0
    %1671 = vmatpush1.msra.mxu0 0.0
    %1672 = vmatprep.subr.mxu0 0.0
    %1673 = vmatpush1.msra.mxu0 0.0
    %1674 = vmatprep.subr.mxu0 0.0
    %1675 = vmatpush1.msra.mxu0 0.0
    %1676 = vmatprep.subr.mxu0 0.0
    %1677 = vmatpush1.msra.mxu0 0.0
    %1678 = vmatprep.subr.mxu0 0.0
    %1679 = vmatpush1.msra.mxu0 0.0
    %1680 = vmatprep.subr.mxu0 0.0
    %1681 = vmatpush1.msra.mxu0 0.0
    %1682 = vmatprep.subr.mxu0 0.0
    %1683 = vmatpush1.msra.mxu0 0.0
    %1684 = vmatprep.subr.mxu0 0.0
    %1685 = vmatpush1.msra.mxu0 0.0
    %1686 = vmatprep.subr.mxu0 0.0
    %1687 = vmatpush1.msra.mxu0 0.0
    %1688 = vmatprep.subr.mxu0 0.0
    %1689 = vmatpush1.msra.mxu0 0.0
    %1690 = vmatprep.subr.mxu0 0.0
    %1691 = vmatpush1.msra.mxu0 0.0
    %1692 = vmatprep.subr.mxu0 0.0
    %1693 = vmatpush1.msra.mxu0 0.0
    %1694 = vmatprep.subr.mxu0 0.0
    %1695 = vmatpush1.msra.mxu0 0.0
    %1696 = vmatprep.subr.mxu0 0.0
    %1697 = vmatpush1.msra.mxu0 0.0
    %1698 = vmatprep.subr.mxu0 0.0
    %1699 = vmatpush1.msra.mxu0 0.0
    %1700 = vmatprep.subr.mxu0 0.0
    %1701 = vmatpush1.msra.mxu0 0.0
    %1702 = vmatprep.mubr.f32.mxu0 0.0
    %1703 = vmatmul.mubr.f32.gmra.mrb[0].mxu0 %v1622
    %v1704 = vpop.f32.mrb[0].mxu0
    %v1705 = vadd.f32 0.0, %v1704
    %v1706 = vpop.f32.mrb[0].mxu0
    %1707 = vmatprep.mubr.f32.mxu0 0.0
    %1708 = vmatmul.mubr.f32.gmra.mrb[0].mxu0 %v1624
    %v1709 = vpop.f32.mrb[0].mxu0
    %v1710 = vadd.f32 0.0, %v1709
    %v1711 = vpop.f32.mrb[0].mxu0
    %1712 = vmatprep.mubr.f32.mxu0 0.0
    %1713 = vmatmul.mubr.f32.gmra.mrb[0].mxu0 %v1626
    %v1714 = vpop.f32.mrb[0].mxu0
    %v1715 = vadd.f32 0.0, %v1714
    %v1716 = vpop.f32.mrb[0].mxu0
    %1717 = vmatprep.mubr.f32.mxu0 0.0
    %1718 = vmatmul.mubr.f32.gmra.mrb[0].mxu0 %v1628
    %v1719 = vpop.f32.mrb[0].mxu0
    %v1720 = vadd.f32 0.0, %v1719
    %v1721 = vpop.f32.mrb[0].mxu0
    %1722 = vmatprep.mubr.f32.mxu0 0.0
    %1723 = vmatmul.mubr.f32.gmra.mrb[0].mxu0 %v1630
    %v1724 = vpop.f32.mrb[0].mxu0
    %v1725 = vadd.f32 0.0, %v1724
    %v1726 = vpop.f32.mrb[0].mxu0
    %1727 = vmatprep.mubr.f32.mxu0 0.0
    %1728 = vmatmul.mubr.f32.gmra.mrb[0].mxu0 %v1632
    %v1729 = vpop.f32.mrb[0].mxu0
    %v1730 = vadd.f32 0.0, %v1729
    %v1731 = vpop.f32.mrb[0].mxu0
    %1732 = vmatprep.mubr.f32.mxu0 0.0
    %1733 = vmatmul.mubr.f32.gmra.mrb[0].mxu0 %v1634
    %v1734 = vpop.f32.mrb[0].mxu0
    %v1735 = vadd.f32 0.0, %v1734
    %v1736 = vpop.f32.mrb[0].mxu0
    %1737 = vmatprep.mubr.f32.mxu0 0.0
    %1738 = vmatmul.mubr.f32.gmra.mrb[0].mxu0 %v1636
    %v1739 = vpop.f32.mrb[0].mxu0
    %v1740 = vadd.f32 0.0, %v1739
    %v1741 = vpop.f32.mrb[0].mxu0
    %1742 = vdwg.mxu0
    %v1743 = vmul.f32 %v346, %v1705
    %v1744 = vmul.f32 %v353, %v1705
    %v1745 = vmul.f32 %v360, %v1705
    %v1746 = vmul.f32 %v367, %v1705
    %v1747 = vmul.f32 %v374, %v1705
    %v1748 = vmul.f32 %v381, %v1705
    %v1749 = vmul.f32 %v388, %v1705
    %v1750 = vmul.f32 %v395, %v1705
    %v1751 = vmul.f32 %v402, %v1710
    %v1752 = vmul.f32 %v409, %v1710
    %v1753 = vmul.f32 %v416, %v1710
    %v1754 = vmul.f32 %v423, %v1710
    %v1755 = vmul.f32 %v430, %v1710
    %v1756 = vmul.f32 %v437, %v1710
    %v1757 = vmul.f32 %v444, %v1710
    %v1758 = vmul.f32 %v451, %v1710
    %v1759 = vmul.f32 %v458, %v1715
    %v1760 = vmul.f32 %v465, %v1715
    %v1761 = vmul.f32 %v472, %v1715
    %v1762 = vmul.f32 %v479, %v1715
    %v1763 = vmul.f32 %v486, %v1715
    %v1764 = vmul.f32 %v493, %v1715
    %v1765 = vmul.f32 %v500, %v1715
    %v1766 = vmul.f32 %v507, %v1715
    %v1767 = vmul.f32 %v514, %v1720
    %v1768 = vmul.f32 %v521, %v1720
    %v1769 = vmul.f32 %v528, %v1720
    %v1770 = vmul.f32 %v535, %v1720
    %v1771 = vmul.f32 %v542, %v1720
    %v1772 = vmul.f32 %v549, %v1720
    %v1773 = vmul.f32 %v556, %v1720
    %v1774 = vmul.f32 %v563, %v1720
    %v1775 = vmul.f32 %v570, %v1725
    %v1776 = vmul.f32 %v577, %v1725
    %v1777 = vmul.f32 %v584, %v1725
    %v1778 = vmul.f32 %v591, %v1725
    %v1779 = vmul.f32 %v598, %v1725
    %v1780 = vmul.f32 %v605, %v1725
    %v1781 = vmul.f32 %v612, %v1725
    %v1782 = vmul.f32 %v619, %v1725
    %v1783 = vmul.f32 %v626, %v1730
    %v1784 = vmul.f32 %v633, %v1730
    %v1785 = vmul.f32 %v640, %v1730
    %v1786 = vmul.f32 %v647, %v1730
    %v1787 = vmul.f32 %v654, %v1730
    %v1788 = vmul.f32 %v661, %v1730
    %v1789 = vmul.f32 %v668, %v1730
    %v1790 = vmul.f32 %v675, %v1730
    %v1791 = vmul.f32 %v682, %v1735
    %v1792 = vmul.f32 %v689, %v1735
    %v1793 = vmul.f32 %v696, %v1735
    %v1794 = vmul.f32 %v703, %v1735
    %v1795 = vmul.f32 %v710, %v1735
    %v1796 = vmul.f32 %v717, %v1735
    %v1797 = vmul.f32 %v724, %v1735
    %v1798 = vmul.f32 %v731, %v1735
    %v1799 = vmul.f32 %v738, %v1740
    %v1800 = vmul.f32 %v745, %v1740
    %v1801 = vmul.f32 %v752, %v1740
    %v1802 = vmul.f32 %v759, %v1740
    %v1803 = vmul.f32 %v766, %v1740
    %v1804 = vmul.f32 %v773, %v1740
    %v1805 = vmul.f32 %v780, %v1740
    %v1806 = vmul.f32 %v787, %v1740
    %v1807 = vsel %vm210, %v1743, 0.0
    %v1808 = vrot.slane %v1807, 4
    %v1809 = vadd.f32 %v1807, %v1808
    %v1810 = vrot.slane %v1809, 2
    %v1811 = vadd.f32 %v1809, %v1810
    %v1812 = vrot.slane %v1811, 1
    %v1813 = vadd.f32 %v1811, %v1812
    %v1814 = vsel %vm210, %v1744, 0.0
    %v1815 = vrot.slane %v1814, 4
    %v1816 = vadd.f32 %v1814, %v1815
    %v1817 = vrot.slane %v1816, 2
    %v1818 = vadd.f32 %v1816, %v1817
    %v1819 = vrot.slane %v1818, 1
    %v1820 = vadd.f32 %v1818, %v1819
    %v1821 = vsel %vm210, %v1745, 0.0
    %v1822 = vrot.slane %v1821, 4
    %v1823 = vadd.f32 %v1821, %v1822
    %v1824 = vrot.slane %v1823, 2
    %v1825 = vadd.f32 %v1823, %v1824
    %v1826 = vrot.slane %v1825, 1
    %v1827 = vadd.f32 %v1825, %v1826
    %v1828 = vsel %vm210, %v1746, 0.0
    %v1829 = vrot.slane %v1828, 4
    %v1830 = vadd.f32 %v1828, %v1829
    %v1831 = vrot.slane %v1830, 2
    %v1832 = vadd.f32 %v1830, %v1831
    %v1833 = vrot.slane %v1832, 1
    %v1834 = vadd.f32 %v1832, %v1833
    %v1835 = vsel %vm210, %v1747, 0.0
    %v1836 = vrot.slane %v1835, 4
    %v1837 = vadd.f32 %v1835, %v1836
    %v1838 = vrot.slane %v1837, 2
    %v1839 = vadd.f32 %v1837, %v1838
    %v1840 = vrot.slane %v1839, 1
    %v1841 = vadd.f32 %v1839, %v1840
    %v1842 = vsel %vm210, %v1748, 0.0
    %v1843 = vrot.slane %v1842, 4
    %v1844 = vadd.f32 %v1842, %v1843
    %v1845 = vrot.slane %v1844, 2
    %v1846 = vadd.f32 %v1844, %v1845
    %v1847 = vrot.slane %v1846, 1
    %v1848 = vadd.f32 %v1846, %v1847
    %v1849 = vsel %vm210, %v1749, 0.0
    %v1850 = vrot.slane %v1849, 4
    %v1851 = vadd.f32 %v1849, %v1850
    %v1852 = vrot.slane %v1851, 2
    %v1853 = vadd.f32 %v1851, %v1852
    %v1854 = vrot.slane %v1853, 1
    %v1855 = vadd.f32 %v1853, %v1854
    %v1856 = vsel %vm210, %v1750, 0.0
    %v1857 = vrot.slane %v1856, 4
    %v1858 = vadd.f32 %v1856, %v1857
    %v1859 = vrot.slane %v1858, 2
    %v1860 = vadd.f32 %v1858, %v1859
    %v1861 = vrot.slane %v1860, 1
    %v1862 = vadd.f32 %v1860, %v1861
    %v1863 = vsel %vm210, %v1751, 0.0
    %v1864 = vrot.slane %v1863, 4
    %v1865 = vadd.f32 %v1863, %v1864
    %v1866 = vrot.slane %v1865, 2
    %v1867 = vadd.f32 %v1865, %v1866
    %v1868 = vrot.slane %v1867, 1
    %v1869 = vadd.f32 %v1867, %v1868
    %v1870 = vsel %vm210, %v1752, 0.0
    %v1871 = vrot.slane %v1870, 4
    %v1872 = vadd.f32 %v1870, %v1871
    %v1873 = vrot.slane %v1872, 2
    %v1874 = vadd.f32 %v1872, %v1873
    %v1875 = vrot.slane %v1874, 1
    %v1876 = vadd.f32 %v1874, %v1875
    %v1877 = vsel %vm210, %v1753, 0.0
    %v1878 = vrot.slane %v1877, 4
    %v1879 = vadd.f32 %v1877, %v1878
    %v1880 = vrot.slane %v1879, 2
    %v1881 = vadd.f32 %v1879, %v1880
    %v1882 = vrot.slane %v1881, 1
    %v1883 = vadd.f32 %v1881, %v1882
    %v1884 = vsel %vm210, %v1754, 0.0
    %v1885 = vrot.slane %v1884, 4
    %v1886 = vadd.f32 %v1884, %v1885
    %v1887 = vrot.slane %v1886, 2
    %v1888 = vadd.f32 %v1886, %v1887
    %v1889 = vrot.slane %v1888, 1
    %v1890 = vadd.f32 %v1888, %v1889
    %v1891 = vsel %vm210, %v1755, 0.0
    %v1892 = vrot.slane %v1891, 4
    %v1893 = vadd.f32 %v1891, %v1892
    %v1894 = vrot.slane %v1893, 2
    %v1895 = vadd.f32 %v1893, %v1894
    %v1896 = vrot.slane %v1895, 1
    %v1897 = vadd.f32 %v1895, %v1896
    %v1898 = vsel %vm210, %v1756, 0.0
    %v1899 = vrot.slane %v1898, 4
    %v1900 = vadd.f32 %v1898, %v1899
    %v1901 = vrot.slane %v1900, 2
    %v1902 = vadd.f32 %v1900, %v1901
    %v1903 = vrot.slane %v1902, 1
    %v1904 = vadd.f32 %v1902, %v1903
    %v1905 = vsel %vm210, %v1757, 0.0
    %v1906 = vrot.slane %v1905, 4
    %v1907 = vadd.f32 %v1905, %v1906
    %v1908 = vrot.slane %v1907, 2
    %v1909 = vadd.f32 %v1907, %v1908
    %v1910 = vrot.slane %v1909, 1
    %v1911 = vadd.f32 %v1909, %v1910
    %v1912 = vsel %vm210, %v1758, 0.0
    %v1913 = vrot.slane %v1912, 4
    %v1914 = vadd.f32 %v1912, %v1913
    %v1915 = vrot.slane %v1914, 2
    %v1916 = vadd.f32 %v1914, %v1915
    %v1917 = vrot.slane %v1916, 1
    %v1918 = vadd.f32 %v1916, %v1917
    %v1919 = vsel %vm210, %v1759, 0.0
    %v1920 = vrot.slane %v1919, 4
    %v1921 = vadd.f32 %v1919, %v1920
    %v1922 = vrot.slane %v1921, 2
    %v1923 = vadd.f32 %v1921, %v1922
    %v1924 = vrot.slane %v1923, 1
    %v1925 = vadd.f32 %v1923, %v1924
    %v1926 = vsel %vm210, %v1760, 0.0
    %v1927 = vrot.slane %v1926, 4
    %v1928 = vadd.f32 %v1926, %v1927
    %v1929 = vrot.slane %v1928, 2
    %v1930 = vadd.f32 %v1928, %v1929
    %v1931 = vrot.slane %v1930, 1
    %v1932 = vadd.f32 %v1930, %v1931
    %v1933 = vsel %vm210, %v1761, 0.0
    %v1934 = vrot.slane %v1933, 4
    %v1935 = vadd.f32 %v1933, %v1934
    %v1936 = vrot.slane %v1935, 2
    %v1937 = vadd.f32 %v1935, %v1936
    %v1938 = vrot.slane %v1937, 1
    %v1939 = vadd.f32 %v1937, %v1938
    %v1940 = vsel %vm210, %v1762, 0.0
    %v1941 = vrot.slane %v1940, 4
    %v1942 = vadd.f32 %v1940, %v1941
    %v1943 = vrot.slane %v1942, 2
    %v1944 = vadd.f32 %v1942, %v1943
    %v1945 = vrot.slane %v1944, 1
    %v1946 = vadd.f32 %v1944, %v1945
    %v1947 = vsel %vm210, %v1763, 0.0
    %v1948 = vrot.slane %v1947, 4
    %v1949 = vadd.f32 %v1947, %v1948
    %v1950 = vrot.slane %v1949, 2
    %v1951 = vadd.f32 %v1949, %v1950
    %v1952 = vrot.slane %v1951, 1
    %v1953 = vadd.f32 %v1951, %v1952
    %v1954 = vsel %vm210, %v1764, 0.0
    %v1955 = vrot.slane %v1954, 4
    %v1956 = vadd.f32 %v1954, %v1955
    %v1957 = vrot.slane %v1956, 2
    %v1958 = vadd.f32 %v1956, %v1957
    %v1959 = vrot.slane %v1958, 1
    %v1960 = vadd.f32 %v1958, %v1959
    %v1961 = vsel %vm210, %v1765, 0.0
    %v1962 = vrot.slane %v1961, 4
    %v1963 = vadd.f32 %v1961, %v1962
    %v1964 = vrot.slane %v1963, 2
    %v1965 = vadd.f32 %v1963, %v1964
    %v1966 = vrot.slane %v1965, 1
    %v1967 = vadd.f32 %v1965, %v1966
    %v1968 = vsel %vm210, %v1766, 0.0
    %v1969 = vrot.slane %v1968, 4
    %v1970 = vadd.f32 %v1968, %v1969
    %v1971 = vrot.slane %v1970, 2
    %v1972 = vadd.f32 %v1970, %v1971
    %v1973 = vrot.slane %v1972, 1
    %v1974 = vadd.f32 %v1972, %v1973
    %v1975 = vsel %vm210, %v1767, 0.0
    %v1976 = vrot.slane %v1975, 4
    %v1977 = vadd.f32 %v1975, %v1976
    %v1978 = vrot.slane %v1977, 2
    %v1979 = vadd.f32 %v1977, %v1978
    %v1980 = vrot.slane %v1979, 1
    %v1981 = vadd.f32 %v1979, %v1980
    %v1982 = vsel %vm210, %v1768, 0.0
    %v1983 = vrot.slane %v1982, 4
    %v1984 = vadd.f32 %v1982, %v1983
    %v1985 = vrot.slane %v1984, 2
    %v1986 = vadd.f32 %v1984, %v1985
    %v1987 = vrot.slane %v1986, 1
    %v1988 = vadd.f32 %v1986, %v1987
    %v1989 = vsel %vm210, %v1769, 0.0
    %v1990 = vrot.slane %v1989, 4
    %v1991 = vadd.f32 %v1989, %v1990
    %v1992 = vrot.slane %v1991, 2
    %v1993 = vadd.f32 %v1991, %v1992
    %v1994 = vrot.slane %v1993, 1
    %v1995 = vadd.f32 %v1993, %v1994
    %v1996 = vsel %vm210, %v1770, 0.0
    %v1997 = vrot.slane %v1996, 4
    %v1998 = vadd.f32 %v1996, %v1997
    %v1999 = vrot.slane %v1998, 2
    %v2000 = vadd.f32 %v1998, %v1999
    %v2001 = vrot.slane %v2000, 1
    %v2002 = vadd.f32 %v2000, %v2001
    %v2003 = vsel %vm210, %v1771, 0.0
    %v2004 = vrot.slane %v2003, 4
    %v2005 = vadd.f32 %v2003, %v2004
    %v2006 = vrot.slane %v2005, 2
    %v2007 = vadd.f32 %v2005, %v2006
    %v2008 = vrot.slane %v2007, 1
    %v2009 = vadd.f32 %v2007, %v2008
    %v2010 = vsel %vm210, %v1772, 0.0
    %v2011 = vrot.slane %v2010, 4
    %v2012 = vadd.f32 %v2010, %v2011
    %v2013 = vrot.slane %v2012, 2
    %v2014 = vadd.f32 %v2012, %v2013
    %v2015 = vrot.slane %v2014, 1
    %v2016 = vadd.f32 %v2014, %v2015
    %v2017 = vsel %vm210, %v1773, 0.0
    %v2018 = vrot.slane %v2017, 4
    %v2019 = vadd.f32 %v2017, %v2018
    %v2020 = vrot.slane %v2019, 2
    %v2021 = vadd.f32 %v2019, %v2020
    %v2022 = vrot.slane %v2021, 1
    %v2023 = vadd.f32 %v2021, %v2022
    %v2024 = vsel %vm210, %v1774, 0.0
    %v2025 = vrot.slane %v2024, 4
    %v2026 = vadd.f32 %v2024, %v2025
    %v2027 = vrot.slane %v2026, 2
    %v2028 = vadd.f32 %v2026, %v2027
    %v2029 = vrot.slane %v2028, 1
    %v2030 = vadd.f32 %v2028, %v2029
    %v2031 = vsel %vm210, %v1775, 0.0
    %v2032 = vrot.slane %v2031, 4
    %v2033 = vadd.f32 %v2031, %v2032
    %v2034 = vrot.slane %v2033, 2
    %v2035 = vadd.f32 %v2033, %v2034
    %v2036 = vrot.slane %v2035, 1
    %v2037 = vadd.f32 %v2035, %v2036
    %v2038 = vsel %vm210, %v1776, 0.0
    %v2039 = vrot.slane %v2038, 4
    %v2040 = vadd.f32 %v2038, %v2039
    %v2041 = vrot.slane %v2040, 2
    %v2042 = vadd.f32 %v2040, %v2041
    %v2043 = vrot.slane %v2042, 1
    %v2044 = vadd.f32 %v2042, %v2043
    %v2045 = vsel %vm210, %v1777, 0.0
    %v2046 = vrot.slane %v2045, 4
    %v2047 = vadd.f32 %v2045, %v2046
    %v2048 = vrot.slane %v2047, 2
    %v2049 = vadd.f32 %v2047, %v2048
    %v2050 = vrot.slane %v2049, 1
    %v2051 = vadd.f32 %v2049, %v2050
    %v2052 = vsel %vm210, %v1778, 0.0
    %v2053 = vrot.slane %v2052, 4
    %v2054 = vadd.f32 %v2052, %v2053
    %v2055 = vrot.slane %v2054, 2
    %v2056 = vadd.f32 %v2054, %v2055
    %v2057 = vrot.slane %v2056, 1
    %v2058 = vadd.f32 %v2056, %v2057
    %v2059 = vsel %vm210, %v1779, 0.0
    %v2060 = vrot.slane %v2059, 4
    %v2061 = vadd.f32 %v2059, %v2060
    %v2062 = vrot.slane %v2061, 2
    %v2063 = vadd.f32 %v2061, %v2062
    %v2064 = vrot.slane %v2063, 1
    %v2065 = vadd.f32 %v2063, %v2064
    %v2066 = vsel %vm210, %v1780, 0.0
    %v2067 = vrot.slane %v2066, 4
    %v2068 = vadd.f32 %v2066, %v2067
    %v2069 = vrot.slane %v2068, 2
    %v2070 = vadd.f32 %v2068, %v2069
    %v2071 = vrot.slane %v2070, 1
    %v2072 = vadd.f32 %v2070, %v2071
    %v2073 = vsel %vm210, %v1781, 0.0
    %v2074 = vrot.slane %v2073, 4
    %v2075 = vadd.f32 %v2073, %v2074
    %v2076 = vrot.slane %v2075, 2
    %v2077 = vadd.f32 %v2075, %v2076
    %v2078 = vrot.slane %v2077, 1
    %v2079 = vadd.f32 %v2077, %v2078
    %v2080 = vsel %vm210, %v1782, 0.0
    %v2081 = vrot.slane %v2080, 4
    %v2082 = vadd.f32 %v2080, %v2081
    %v2083 = vrot.slane %v2082, 2
    %v2084 = vadd.f32 %v2082, %v2083
    %v2085 = vrot.slane %v2084, 1
    %v2086 = vadd.f32 %v2084, %v2085
    %v2087 = vsel %vm210, %v1783, 0.0
    %v2088 = vrot.slane %v2087, 4
    %v2089 = vadd.f32 %v2087, %v2088
    %v2090 = vrot.slane %v2089, 2
    %v2091 = vadd.f32 %v2089, %v2090
    %v2092 = vrot.slane %v2091, 1
    %v2093 = vadd.f32 %v2091, %v2092
    %v2094 = vsel %vm210, %v1784, 0.0
    %v2095 = vrot.slane %v2094, 4
    %v2096 = vadd.f32 %v2094, %v2095
    %v2097 = vrot.slane %v2096, 2
    %v2098 = vadd.f32 %v2096, %v2097
    %v2099 = vrot.slane %v2098, 1
    %v2100 = vadd.f32 %v2098, %v2099
    %v2101 = vsel %vm210, %v1785, 0.0
    %v2102 = vrot.slane %v2101, 4
    %v2103 = vadd.f32 %v2101, %v2102
    %v2104 = vrot.slane %v2103, 2
    %v2105 = vadd.f32 %v2103, %v2104
    %v2106 = vrot.slane %v2105, 1
    %v2107 = vadd.f32 %v2105, %v2106
    %v2108 = vsel %vm210, %v1786, 0.0
    %v2109 = vrot.slane %v2108, 4
    %v2110 = vadd.f32 %v2108, %v2109
    %v2111 = vrot.slane %v2110, 2
    %v2112 = vadd.f32 %v2110, %v2111
    %v2113 = vrot.slane %v2112, 1
    %v2114 = vadd.f32 %v2112, %v2113
    %v2115 = vsel %vm210, %v1787, 0.0
    %v2116 = vrot.slane %v2115, 4
    %v2117 = vadd.f32 %v2115, %v2116
    %v2118 = vrot.slane %v2117, 2
    %v2119 = vadd.f32 %v2117, %v2118
    %v2120 = vrot.slane %v2119, 1
    %v2121 = vadd.f32 %v2119, %v2120
    %v2122 = vsel %vm210, %v1788, 0.0
    %v2123 = vrot.slane %v2122, 4
    %v2124 = vadd.f32 %v2122, %v2123
    %v2125 = vrot.slane %v2124, 2
    %v2126 = vadd.f32 %v2124, %v2125
    %v2127 = vrot.slane %v2126, 1
    %v2128 = vadd.f32 %v2126, %v2127
    %v2129 = vsel %vm210, %v1789, 0.0
    %v2130 = vrot.slane %v2129, 4
    %v2131 = vadd.f32 %v2129, %v2130
    %v2132 = vrot.slane %v2131, 2
    %v2133 = vadd.f32 %v2131, %v2132
    %v2134 = vrot.slane %v2133, 1
    %v2135 = vadd.f32 %v2133, %v2134
    %v2136 = vsel %vm210, %v1790, 0.0
    %v2137 = vrot.slane %v2136, 4
    %v2138 = vadd.f32 %v2136, %v2137
    %v2139 = vrot.slane %v2138, 2
    %v2140 = vadd.f32 %v2138, %v2139
    %v2141 = vrot.slane %v2140, 1
    %v2142 = vadd.f32 %v2140, %v2141
    %v2143 = vsel %vm210, %v1791, 0.0
    %v2144 = vrot.slane %v2143, 4
    %v2145 = vadd.f32 %v2143, %v2144
    %v2146 = vrot.slane %v2145, 2
    %v2147 = vadd.f32 %v2145, %v2146
    %v2148 = vrot.slane %v2147, 1
    %v2149 = vadd.f32 %v2147, %v2148
    %v2150 = vsel %vm210, %v1792, 0.0
    %v2151 = vrot.slane %v2150, 4
    %v2152 = vadd.f32 %v2150, %v2151
    %v2153 = vrot.slane %v2152, 2
    %v2154 = vadd.f32 %v2152, %v2153
    %v2155 = vrot.slane %v2154, 1
    %v2156 = vadd.f32 %v2154, %v2155
    %v2157 = vsel %vm210, %v1793, 0.0
    %v2158 = vrot.slane %v2157, 4
    %v2159 = vadd.f32 %v2157, %v2158
    %v2160 = vrot.slane %v2159, 2
    %v2161 = vadd.f32 %v2159, %v2160
    %v2162 = vrot.slane %v2161, 1
    %v2163 = vadd.f32 %v2161, %v2162
    %v2164 = vsel %vm210, %v1794, 0.0
    %v2165 = vrot.slane %v2164, 4
    %v2166 = vadd.f32 %v2164, %v2165
    %v2167 = vrot.slane %v2166, 2
    %v2168 = vadd.f32 %v2166, %v2167
    %v2169 = vrot.slane %v2168, 1
    %v2170 = vadd.f32 %v2168, %v2169
    %v2171 = vsel %vm210, %v1795, 0.0
    %v2172 = vrot.slane %v2171, 4
    %v2173 = vadd.f32 %v2171, %v2172
    %v2174 = vrot.slane %v2173, 2
    %v2175 = vadd.f32 %v2173, %v2174
    %v2176 = vrot.slane %v2175, 1
    %v2177 = vadd.f32 %v2175, %v2176
    %v2178 = vsel %vm210, %v1796, 0.0
    %v2179 = vrot.slane %v2178, 4
    %v2180 = vadd.f32 %v2178, %v2179
    %v2181 = vrot.slane %v2180, 2
    %v2182 = vadd.f32 %v2180, %v2181
    %v2183 = vrot.slane %v2182, 1
    %v2184 = vadd.f32 %v2182, %v2183
    %v2185 = vsel %vm210, %v1797, 0.0
    %v2186 = vrot.slane %v2185, 4
    %v2187 = vadd.f32 %v2185, %v2186
    %v2188 = vrot.slane %v2187, 2
    %v2189 = vadd.f32 %v2187, %v2188
    %v2190 = vrot.slane %v2189, 1
    %v2191 = vadd.f32 %v2189, %v2190
    %v2192 = vsel %vm210, %v1798, 0.0
    %v2193 = vrot.slane %v2192, 4
    %v2194 = vadd.f32 %v2192, %v2193
    %v2195 = vrot.slane %v2194, 2
    %v2196 = vadd.f32 %v2194, %v2195
    %v2197 = vrot.slane %v2196, 1
    %v2198 = vadd.f32 %v2196, %v2197
    %v2199 = vsel %vm210, %v1799, 0.0
    %v2200 = vrot.slane %v2199, 4
    %v2201 = vadd.f32 %v2199, %v2200
    %v2202 = vrot.slane %v2201, 2
    %v2203 = vadd.f32 %v2201, %v2202
    %v2204 = vrot.slane %v2203, 1
    %v2205 = vadd.f32 %v2203, %v2204
    %v2206 = vsel %vm210, %v1800, 0.0
    %v2207 = vrot.slane %v2206, 4
    %v2208 = vadd.f32 %v2206, %v2207
    %v2209 = vrot.slane %v2208, 2
    %v2210 = vadd.f32 %v2208, %v2209
    %v2211 = vrot.slane %v2210, 1
    %v2212 = vadd.f32 %v2210, %v2211
    %v2213 = vsel %vm210, %v1801, 0.0
    %v2214 = vrot.slane %v2213, 4
    %v2215 = vadd.f32 %v2213, %v2214
    %v2216 = vrot.slane %v2215, 2
    %v2217 = vadd.f32 %v2215, %v2216
    %v2218 = vrot.slane %v2217, 1
    %v2219 = vadd.f32 %v2217, %v2218
    %v2220 = vsel %vm210, %v1802, 0.0
    %v2221 = vrot.slane %v2220, 4
    %v2222 = vadd.f32 %v2220, %v2221
    %v2223 = vrot.slane %v2222, 2
    %v2224 = vadd.f32 %v2222, %v2223
    %v2225 = vrot.slane %v2224, 1
    %v2226 = vadd.f32 %v2224, %v2225
    %v2227 = vsel %vm210, %v1803, 0.0
    %v2228 = vrot.slane %v2227, 4
    %v2229 = vadd.f32 %v2227, %v2228
    %v2230 = vrot.slane %v2229, 2
    %v2231 = vadd.f32 %v2229, %v2230
    %v2232 = vrot.slane %v2231, 1
    %v2233 = vadd.f32 %v2231, %v2232
    %v2234 = vsel %vm210, %v1804, 0.0
    %v2235 = vrot.slane %v2234, 4
    %v2236 = vadd.f32 %v2234, %v2235
    %v2237 = vrot.slane %v2236, 2
    %v2238 = vadd.f32 %v2236, %v2237
    %v2239 = vrot.slane %v2238, 1
    %v2240 = vadd.f32 %v2238, %v2239
    %v2241 = vsel %vm210, %v1805, 0.0
    %v2242 = vrot.slane %v2241, 4
    %v2243 = vadd.f32 %v2241, %v2242
    %v2244 = vrot.slane %v2243, 2
    %v2245 = vadd.f32 %v2243, %v2244
    %v2246 = vrot.slane %v2245, 1
    %v2247 = vadd.f32 %v2245, %v2246
    %v2248 = vsel %vm210, %v1806, 0.0
    %v2249 = vrot.slane %v2248, 4
    %v2250 = vadd.f32 %v2248, %v2249
    %v2251 = vrot.slane %v2250, 2
    %v2252 = vadd.f32 %v2250, %v2251
    %v2253 = vrot.slane %v2252, 1
    %v2254 = vadd.f32 %v2252, %v2253
    %v2255 = vld [vmem:[%s6] sm:$0x1]
    %v2257 = vlaneseq
    %v2258 = vshrl.u32 %v2257, 7
    %v2259 = vsub.s32 0, %v2258
    %v2260 = vrot.slane %v2255, %v2259
    %v2262 = vadd.f32 %v1813, %v2260
    %v2263 = vadd.f32 %v1820, %v2260
    %v2264 = vadd.f32 %v1827, %v2260
    %v2265 = vadd.f32 %v1834, %v2260
    %v2266 = vadd.f32 %v1841, %v2260
    %v2267 = vadd.f32 %v1848, %v2260
    %v2268 = vadd.f32 %v1855, %v2260
    %v2269 = vadd.f32 %v1862, %v2260
    %v2270 = vadd.f32 %v1869, %v2260
    %v2271 = vadd.f32 %v1876, %v2260
    %v2272 = vadd.f32 %v1883, %v2260
    %v2273 = vadd.f32 %v1890, %v2260
    %v2274 = vadd.f32 %v1897, %v2260
    %v2275 = vadd.f32 %v1904, %v2260
    %v2276 = vadd.f32 %v1911, %v2260
    %v2277 = vadd.f32 %v1918, %v2260
    %v2278 = vadd.f32 %v1925, %v2260
    %v2279 = vadd.f32 %v1932, %v2260
    %v2280 = vadd.f32 %v1939, %v2260
    %v2281 = vadd.f32 %v1946, %v2260
    %v2282 = vadd.f32 %v1953, %v2260
    %v2283 = vadd.f32 %v1960, %v2260
    %v2284 = vadd.f32 %v1967, %v2260
    %v2285 = vadd.f32 %v1974, %v2260
    %v2286 = vadd.f32 %v1981, %v2260
    %v2287 = vadd.f32 %v1988, %v2260
    %v2288 = vadd.f32 %v1995, %v2260
    %v2289 = vadd.f32 %v2002, %v2260
    %v2290 = vadd.f32 %v2009, %v2260
    %v2291 = vadd.f32 %v2016, %v2260
    %v2292 = vadd.f32 %v2023, %v2260
    %v2293 = vadd.f32 %v2030, %v2260
    %v2294 = vadd.f32 %v2037, %v2260
    %v2295 = vadd.f32 %v2044, %v2260
    %v2296 = vadd.f32 %v2051, %v2260
    %v2297 = vadd.f32 %v2058, %v2260
    %v2298 = vadd.f32 %v2065, %v2260
    %v2299 = vadd.f32 %v2072, %v2260
    %v2300 = vadd.f32 %v2079, %v2260
    %v2301 = vadd.f32 %v2086, %v2260
    %v2302 = vadd.f32 %v2093, %v2260
    %v2303 = vadd.f32 %v2100, %v2260
    %v2304 = vadd.f32 %v2107, %v2260
    %v2305 = vadd.f32 %v2114, %v2260
    %v2306 = vadd.f32 %v2121, %v2260
    %v2307 = vadd.f32 %v2128, %v2260
    %v2308 = vadd.f32 %v2135, %v2260
    %v2309 = vadd.f32 %v2142, %v2260
    %v2310 = vadd.f32 %v2149, %v2260
    %v2311 = vadd.f32 %v2156, %v2260
    %v2312 = vadd.f32 %v2163, %v2260
    %v2313 = vadd.f32 %v2170, %v2260
    %v2314 = vadd.f32 %v2177, %v2260
    %v2315 = vadd.f32 %v2184, %v2260
    %v2316 = vadd.f32 %v2191, %v2260
    %v2317 = vadd.f32 %v2198, %v2260
    %v2318 = vadd.f32 %v2205, %v2260
    %v2319 = vadd.f32 %v2212, %v2260
    %v2320 = vadd.f32 %v2219, %v2260
    %v2321 = vadd.f32 %v2226, %v2260
    %v2322 = vadd.f32 %v2233, %v2260
    %v2323 = vadd.f32 %v2240, %v2260
    %v2324 = vadd.f32 %v2247, %v2260
    %v2325 = vadd.f32 %v2254, %v2260
    %v2326 = vmax.f32 %v2262, 0.0
    %v2327 = vmax.f32 %v2263, 0.0
    %v2328 = vmax.f32 %v2264, 0.0
    %v2329 = vmax.f32 %v2265, 0.0
    %v2330 = vmax.f32 %v2266, 0.0
    %v2331 = vmax.f32 %v2267, 0.0
    %v2332 = vmax.f32 %v2268, 0.0
    %v2333 = vmax.f32 %v2269, 0.0
    %v2334 = vmax.f32 %v2270, 0.0
    %v2335 = vmax.f32 %v2271, 0.0
    %v2336 = vmax.f32 %v2272, 0.0
    %v2337 = vmax.f32 %v2273, 0.0
    %v2338 = vmax.f32 %v2274, 0.0
    %v2339 = vmax.f32 %v2275, 0.0
    %v2340 = vmax.f32 %v2276, 0.0
    %v2341 = vmax.f32 %v2277, 0.0
    %v2342 = vmax.f32 %v2278, 0.0
    %v2343 = vmax.f32 %v2279, 0.0
    %v2344 = vmax.f32 %v2280, 0.0
    %v2345 = vmax.f32 %v2281, 0.0
    %v2346 = vmax.f32 %v2282, 0.0
    %v2347 = vmax.f32 %v2283, 0.0
    %v2348 = vmax.f32 %v2284, 0.0
    %v2349 = vmax.f32 %v2285, 0.0
    %v2350 = vmax.f32 %v2286, 0.0
    %v2351 = vmax.f32 %v2287, 0.0
    %v2352 = vmax.f32 %v2288, 0.0
    %v2353 = vmax.f32 %v2289, 0.0
    %v2354 = vmax.f32 %v2290, 0.0
    %v2355 = vmax.f32 %v2291, 0.0
    %v2356 = vmax.f32 %v2292, 0.0
    %v2357 = vmax.f32 %v2293, 0.0
    %v2358 = vmax.f32 %v2294, 0.0
    %v2359 = vmax.f32 %v2295, 0.0
    %v2360 = vmax.f32 %v2296, 0.0
    %v2361 = vmax.f32 %v2297, 0.0
    %v2362 = vmax.f32 %v2298, 0.0
    %v2363 = vmax.f32 %v2299, 0.0
    %v2364 = vmax.f32 %v2300, 0.0
    %v2365 = vmax.f32 %v2301, 0.0
    %v2366 = vmax.f32 %v2302, 0.0
    %v2367 = vmax.f32 %v2303, 0.0
    %v2368 = vmax.f32 %v2304, 0.0
    %v2369 = vmax.f32 %v2305, 0.0
    %v2370 = vmax.f32 %v2306, 0.0
    %v2371 = vmax.f32 %v2307, 0.0
    %v2372 = vmax.f32 %v2308, 0.0
    %v2373 = vmax.f32 %v2309, 0.0
    %v2374 = vmax.f32 %v2310, 0.0
    %v2375 = vmax.f32 %v2311, 0.0
    %v2376 = vmax.f32 %v2312, 0.0
    %v2377 = vmax.f32 %v2313, 0.0
    %v2378 = vmax.f32 %v2314, 0.0
    %v2379 = vmax.f32 %v2315, 0.0
    %v2380 = vmax.f32 %v2316, 0.0
    %v2381 = vmax.f32 %v2317, 0.0
    %v2382 = vmax.f32 %v2318, 0.0
    %v2383 = vmax.f32 %v2319, 0.0
    %v2384 = vmax.f32 %v2320, 0.0
    %v2385 = vmax.f32 %v2321, 0.0
    %v2386 = vmax.f32 %v2322, 0.0
    %v2387 = vmax.f32 %v2323, 0.0
    %v2388 = vmax.f32 %v2324, 0.0
    %v2389 = vmax.f32 %v2325, 0.0
    %v2454 = vrot.slane %v2327, 7
    %v2455 = vsel %vm1504, %v2454, %v2326
    %v2456 = vrot.slane %v2328, 6
    %v2457 = vsel %vm1507, %v2456, %v2455
    %v2458 = vrot.slane %v2329, 5
    %v2459 = vsel %vm1510, %v2458, %v2457
    %v2460 = vrot.slane %v2330, 4
    %v2461 = vsel %vm1513, %v2460, %v2459
    %v2462 = vrot.slane %v2331, 3
    %v2463 = vsel %vm1516, %v2462, %v2461
    %v2464 = vrot.slane %v2332, 2
    %v2465 = vsel %vm1519, %v2464, %v2463
    %v2466 = vrot.slane %v2333, 1
    %v2467 = vsel %vm1522, %v2466, %v2465
    %v2468 = vrot.slane %v2335, 7
    %v2469 = vsel %vm1504, %v2468, %v2334
    %v2470 = vrot.slane %v2336, 6
    %v2471 = vsel %vm1507, %v2470, %v2469
    %v2472 = vrot.slane %v2337, 5
    %v2473 = vsel %vm1510, %v2472, %v2471
    %v2474 = vrot.slane %v2338, 4
    %v2475 = vsel %vm1513, %v2474, %v2473
    %v2476 = vrot.slane %v2339, 3
    %v2477 = vsel %vm1516, %v2476, %v2475
    %v2478 = vrot.slane %v2340, 2
    %v2479 = vsel %vm1519, %v2478, %v2477
    %v2480 = vrot.slane %v2341, 1
    %v2481 = vsel %vm1522, %v2480, %v2479
    %v2482 = vrot.slane %v2343, 7
    %v2483 = vsel %vm1504, %v2482, %v2342
    %v2484 = vrot.slane %v2344, 6
    %v2485 = vsel %vm1507, %v2484, %v2483
    %v2486 = vrot.slane %v2345, 5
    %v2487 = vsel %vm1510, %v2486, %v2485
    %v2488 = vrot.slane %v2346, 4
    %v2489 = vsel %vm1513, %v2488, %v2487
    %v2490 = vrot.slane %v2347, 3
    %v2491 = vsel %vm1516, %v2490, %v2489
    %v2492 = vrot.slane %v2348, 2
    %v2493 = vsel %vm1519, %v2492, %v2491
    %v2494 = vrot.slane %v2349, 1
    %v2495 = vsel %vm1522, %v2494, %v2493
    %v2496 = vrot.slane %v2351, 7
    %v2497 = vsel %vm1504, %v2496, %v2350
    %v2498 = vrot.slane %v2352, 6
    %v2499 = vsel %vm1507, %v2498, %v2497
    %v2500 = vrot.slane %v2353, 5
    %v2501 = vsel %vm1510, %v2500, %v2499
    %v2502 = vrot.slane %v2354, 4
    %v2503 = vsel %vm1513, %v2502, %v2501
    %v2504 = vrot.slane %v2355, 3
    %v2505 = vsel %vm1516, %v2504, %v2503
    %v2506 = vrot.slane %v2356, 2
    %v2507 = vsel %vm1519, %v2506, %v2505
    %v2508 = vrot.slane %v2357, 1
    %v2509 = vsel %vm1522, %v2508, %v2507
    %v2510 = vrot.slane %v2359, 7
    %v2511 = vsel %vm1504, %v2510, %v2358
    %v2512 = vrot.slane %v2360, 6
    %v2513 = vsel %vm1507, %v2512, %v2511
    %v2514 = vrot.slane %v2361, 5
    %v2515 = vsel %vm1510, %v2514, %v2513
    %v2516 = vrot.slane %v2362, 4
    %v2517 = vsel %vm1513, %v2516, %v2515
    %v2518 = vrot.slane %v2363, 3
    %v2519 = vsel %vm1516, %v2518, %v2517
    %v2520 = vrot.slane %v2364, 2
    %v2521 = vsel %vm1519, %v2520, %v2519
    %v2522 = vrot.slane %v2365, 1
    %v2523 = vsel %vm1522, %v2522, %v2521
    %v2524 = vrot.slane %v2367, 7
    %v2525 = vsel %vm1504, %v2524, %v2366
    %v2526 = vrot.slane %v2368, 6
    %v2527 = vsel %vm1507, %v2526, %v2525
    %v2528 = vrot.slane %v2369, 5
    %v2529 = vsel %vm1510, %v2528, %v2527
    %v2530 = vrot.slane %v2370, 4
    %v2531 = vsel %vm1513, %v2530, %v2529
    %v2532 = vrot.slane %v2371, 3
    %v2533 = vsel %vm1516, %v2532, %v2531
    %v2534 = vrot.slane %v2372, 2
    %v2535 = vsel %vm1519, %v2534, %v2533
    %v2536 = vrot.slane %v2373, 1
    %v2537 = vsel %vm1522, %v2536, %v2535
    %v2538 = vrot.slane %v2375, 7
    %v2539 = vsel %vm1504, %v2538, %v2374
    %v2540 = vrot.slane %v2376, 6
    %v2541 = vsel %vm1507, %v2540, %v2539
    %v2542 = vrot.slane %v2377, 5
    %v2543 = vsel %vm1510, %v2542, %v2541
    %v2544 = vrot.slane %v2378, 4
    %v2545 = vsel %vm1513, %v2544, %v2543
    %v2546 = vrot.slane %v2379, 3
    %v2547 = vsel %vm1516, %v2546, %v2545
    %v2548 = vrot.slane %v2380, 2
    %v2549 = vsel %vm1519, %v2548, %v2547
    %v2550 = vrot.slane %v2381, 1
    %v2551 = vsel %vm1522, %v2550, %v2549
    %v2552 = vrot.slane %v2383, 7
    %v2553 = vsel %vm1504, %v2552, %v2382
    %v2554 = vrot.slane %v2384, 6
    %v2555 = vsel %vm1507, %v2554, %v2553
    %v2556 = vrot.slane %v2385, 5
    %v2557 = vsel %vm1510, %v2556, %v2555
    %v2558 = vrot.slane %v2386, 4
    %v2559 = vsel %vm1513, %v2558, %v2557
    %v2560 = vrot.slane %v2387, 3
    %v2561 = vsel %vm1516, %v2560, %v2559
    %v2562 = vrot.slane %v2388, 2
    %v2563 = vsel %vm1519, %v2562, %v2561
    %v2564 = vrot.slane %v2389, 1
    %v2565 = vsel %vm1522, %v2564, %v2563
    %v2574 = vcombine.low %v2467, %v2495
    %v2575 = vcombine.high %v2467, %v2495
    %v2577 = vunpack.c.l.s4 1983009808
    %v2578 = vunpack.c.0.s8 %v2577
    %v2579 = vlaneseq
    %v2580 = vshrl.u32 %v2579, 7
    %v2581 = vsub.s32 %v2578, %v2580
    %v2582 = vrot.slane %v2574, %v2581
    %v2584 = vunpack.c.l.s4 1983009808
    %v2585 = vunpack.c.0.s8 %v2584
    %v2586 = vlaneseq
    %v2587 = vshrl.u32 %v2586, 7
    %v2588 = vsub.s32 %v2585, %v2587
    %v2589 = vrot.slane %v2575, %v2588
    %v2590 = vcombine.low %v2481, %v2509
    %v2591 = vcombine.high %v2481, %v2509
    %v2593 = vunpack.c.l.s4 1983009808
    %v2594 = vunpack.c.0.s8 %v2593
    %v2595 = vlaneseq
    %v2596 = vshrl.u32 %v2595, 7
    %v2597 = vsub.s32 %v2594, %v2596
    %v2598 = vrot.slane %v2590, %v2597
    %v2600 = vunpack.c.l.s4 1983009808
    %v2601 = vunpack.c.0.s8 %v2600
    %v2602 = vlaneseq
    %v2603 = vshrl.u32 %v2602, 7
    %v2604 = vsub.s32 %v2601, %v2603
    %v2605 = vrot.slane %v2591, %v2604
    %v2606 = vcombine.low %v2523, %v2551
    %v2607 = vcombine.high %v2523, %v2551
    %v2609 = vunpack.c.l.s4 1983009808
    %v2610 = vunpack.c.0.s8 %v2609
    %v2611 = vlaneseq
    %v2612 = vshrl.u32 %v2611, 7
    %v2613 = vsub.s32 %v2610, %v2612
    %v2614 = vrot.slane %v2606, %v2613
    %v2616 = vunpack.c.l.s4 1983009808
    %v2617 = vunpack.c.0.s8 %v2616
    %v2618 = vlaneseq
    %v2619 = vshrl.u32 %v2618, 7
    %v2620 = vsub.s32 %v2617, %v2619
    %v2621 = vrot.slane %v2607, %v2620
    %v2622 = vcombine.low %v2537, %v2565
    %v2623 = vcombine.high %v2537, %v2565
    %v2625 = vunpack.c.l.s4 1983009808
    %v2626 = vunpack.c.0.s8 %v2625
    %v2627 = vlaneseq
    %v2628 = vshrl.u32 %v2627, 7
    %v2629 = vsub.s32 %v2626, %v2628
    %v2630 = vrot.slane %v2622, %v2629
    %v2632 = vunpack.c.l.s4 1983009808
    %v2633 = vunpack.c.0.s8 %v2632
    %v2634 = vlaneseq
    %v2635 = vshrl.u32 %v2634, 7
    %v2636 = vsub.s32 %v2633, %v2635
    %v2637 = vrot.slane %v2623, %v2636
    %v2638 = vcombine.low %v2582, %v2598
    %v2639 = vcombine.high %v2582, %v2598
    %v2641 = vunpack.c.l.s4 1934713408
    %v2642 = vunpack.c.0.s8 %v2641
    %v2643 = vlaneseq
    %v2644 = vshrl.u32 %v2643, 7
    %v2645 = vsub.s32 %v2642, %v2644
    %v2646 = vrot.slane %v2638, %v2645
    %v2648 = vunpack.c.l.s4 1934713408
    %v2649 = vunpack.c.0.s8 %v2648
    %v2650 = vlaneseq
    %v2651 = vshrl.u32 %v2650, 7
    %v2652 = vsub.s32 %v2649, %v2651
    %v2653 = vrot.slane %v2639, %v2652
    %v2654 = vcombine.low %v2589, %v2605
    %v2655 = vcombine.high %v2589, %v2605
    %v2657 = vunpack.c.l.s4 1934713408
    %v2658 = vunpack.c.0.s8 %v2657
    %v2659 = vlaneseq
    %v2660 = vshrl.u32 %v2659, 7
    %v2661 = vsub.s32 %v2658, %v2660
    %v2662 = vrot.slane %v2654, %v2661
    %v2664 = vunpack.c.l.s4 1934713408
    %v2665 = vunpack.c.0.s8 %v2664
    %v2666 = vlaneseq
    %v2667 = vshrl.u32 %v2666, 7
    %v2668 = vsub.s32 %v2665, %v2667
    %v2669 = vrot.slane %v2655, %v2668
    %v2670 = vcombine.low %v2614, %v2630
    %v2671 = vcombine.high %v2614, %v2630
    %v2673 = vunpack.c.l.s4 1934713408
    %v2674 = vunpack.c.0.s8 %v2673
    %v2675 = vlaneseq
    %v2676 = vshrl.u32 %v2675, 7
    %v2677 = vsub.s32 %v2674, %v2676
    %v2678 = vrot.slane %v2670, %v2677
    %v2680 = vunpack.c.l.s4 1934713408
    %v2681 = vunpack.c.0.s8 %v2680
    %v2682 = vlaneseq
    %v2683 = vshrl.u32 %v2682, 7
    %v2684 = vsub.s32 %v2681, %v2683
    %v2685 = vrot.slane %v2671, %v2684
    %v2686 = vcombine.low %v2621, %v2637
    %v2687 = vcombine.high %v2621, %v2637
    %v2689 = vunpack.c.l.s4 1934713408
    %v2690 = vunpack.c.0.s8 %v2689
    %v2691 = vlaneseq
    %v2692 = vshrl.u32 %v2691, 7
    %v2693 = vsub.s32 %v2690, %v2692
    %v2694 = vrot.slane %v2686, %v2693
    %v2696 = vunpack.c.l.s4 1934713408
    %v2697 = vunpack.c.0.s8 %v2696
    %v2698 = vlaneseq
    %v2699 = vshrl.u32 %v2698, 7
    %v2700 = vsub.s32 %v2697, %v2699
    %v2701 = vrot.slane %v2687, %v2700
    %v2702 = vcombine.low %v2646, %v2678
    %v2703 = vcombine.high %v2646, %v2678
    %v2704 = vcombine.low %v2653, %v2685
    %v2705 = vcombine.high %v2653, %v2685
    %v2706 = vcombine.low %v2662, %v2694
    %v2707 = vcombine.high %v2662, %v2694
    %v2708 = vcombine.low %v2669, %v2701
    %v2709 = vcombine.high %v2669, %v2701
    %2711 = vrot.lane.b32.xlu0 %v2703, 32
    %v2712 = vpop.permute.xlu0 %2711
    %2715 = vrot.lane.b32.xlu0 %v2704, 64
    %v2716 = vpop.permute.xlu0 %2715
    %2719 = vrot.lane.b32.xlu0 %v2705, 96
    %v2720 = vpop.permute.xlu0 %2719
    %2723 = vrot.lane.b32.xlu0 %v2707, 32
    %v2724 = vpop.permute.xlu0 %2723
    %2727 = vrot.lane.b32.xlu0 %v2708, 64
    %v2728 = vpop.permute.xlu0 %2727
    %2731 = vrot.lane.b32.xlu0 %v2709, 96
    %v2732 = vpop.permute.xlu0 %2731
    %v2734 = vsel %vm210, %v2702, %v2712
    %vm2735 = vcmask 523264
    %v2736 = vsel %vm2735, %v2734, %v2716
    %vm2737 = vcmask 785408
    %v2738 = vsel %vm2737, %v2736, %v2720
    %v2739 = vsel %vm210, %v2706, %v2724
    %v2740 = vsel %vm2735, %v2739, %v2728
    %v2741 = vsel %vm2737, %v2740, %v2732
    %2742 = vst [vmem:[#allocation8] sm:$0xff] %v2738
    %2743 = vst [vmem:[#allocation8 + $0x8] sm:$0xff] %v2741
    %2744 = vset.pattern.permute.xlu0 9
    %2745 = vperm.xlu0 %2744, %v85
    %v2746 = vpop.permute.xlu0 %2745
    %2748 = vset.pattern.permute.xlu0 9
    %2749 = vperm.xlu0 %2748, %v86
    %v2750 = vpop.permute.xlu0 %2749
    %2752 = vset.pattern.permute.xlu0 9
    %2753 = vperm.xlu0 %2752, %v87
    %v2754 = vpop.permute.xlu0 %2753
    %2756 = vset.pattern.permute.xlu0 9
    %2757 = vperm.xlu0 %2756, %v88
    %v2758 = vpop.permute.xlu0 %2757
    %2760 = vset.pattern.permute.xlu0 9
    %2761 = vperm.xlu0 %2760, %v89
    %v2762 = vpop.permute.xlu0 %2761
    %2764 = vset.pattern.permute.xlu0 9
    %2765 = vperm.xlu0 %2764, %v90
    %v2766 = vpop.permute.xlu0 %2765
    %2768 = vset.pattern.permute.xlu0 9
    %2769 = vperm.xlu0 %2768, %v91
    %v2770 = vpop.permute.xlu0 %2769
    %2772 = vset.pattern.permute.xlu0 9
    %2773 = vperm.xlu0 %2772, %v92
    %v2774 = vpop.permute.xlu0 %2773
    %v2776 = vmul.f32 %v2746, %v2467
    %v2777 = vmul.f32 %v2750, %v2481
    %v2778 = vmul.f32 %v2754, %v2495
    %v2779 = vmul.f32 %v2758, %v2509
    %v2780 = vmul.f32 %v2762, %v2523
    %v2781 = vmul.f32 %v2766, %v2537
    %v2782 = vmul.f32 %v2770, %v2551
    %v2783 = vmul.f32 %v2774, %v2565
    %v2784 = vsel %vm210, %v2776, 0.0
    %v2785 = vrot.slane %v2784, 4
    %v2786 = vadd.f32 %v2784, %v2785
    %v2787 = vrot.slane %v2786, 2
    %v2788 = vadd.f32 %v2786, %v2787
    %v2789 = vrot.slane %v2788, 1
    %v2790 = vadd.f32 %v2788, %v2789
    %v2791 = vsel %vm210, %v2777, 0.0
    %v2792 = vrot.slane %v2791, 4
    %v2793 = vadd.f32 %v2791, %v2792
    %v2794 = vrot.slane %v2793, 2
    %v2795 = vadd.f32 %v2793, %v2794
    %v2796 = vrot.slane %v2795, 1
    %v2797 = vadd.f32 %v2795, %v2796
    %v2798 = vsel %vm210, %v2778, 0.0
    %v2799 = vrot.slane %v2798, 4
    %v2800 = vadd.f32 %v2798, %v2799
    %v2801 = vrot.slane %v2800, 2
    %v2802 = vadd.f32 %v2800, %v2801
    %v2803 = vrot.slane %v2802, 1
    %v2804 = vadd.f32 %v2802, %v2803
    %v2805 = vsel %vm210, %v2779, 0.0
    %v2806 = vrot.slane %v2805, 4
    %v2807 = vadd.f32 %v2805, %v2806
    %v2808 = vrot.slane %v2807, 2
    %v2809 = vadd.f32 %v2807, %v2808
    %v2810 = vrot.slane %v2809, 1
    %v2811 = vadd.f32 %v2809, %v2810
    %v2812 = vsel %vm210, %v2780, 0.0
    %v2813 = vrot.slane %v2812, 4
    %v2814 = vadd.f32 %v2812, %v2813
    %v2815 = vrot.slane %v2814, 2
    %v2816 = vadd.f32 %v2814, %v2815
    %v2817 = vrot.slane %v2816, 1
    %v2818 = vadd.f32 %v2816, %v2817
    %v2819 = vsel %vm210, %v2781, 0.0
    %v2820 = vrot.slane %v2819, 4
    %v2821 = vadd.f32 %v2819, %v2820
    %v2822 = vrot.slane %v2821, 2
    %v2823 = vadd.f32 %v2821, %v2822
    %v2824 = vrot.slane %v2823, 1
    %v2825 = vadd.f32 %v2823, %v2824
    %v2826 = vsel %vm210, %v2782, 0.0
    %v2827 = vrot.slane %v2826, 4
    %v2828 = vadd.f32 %v2826, %v2827
    %v2829 = vrot.slane %v2828, 2
    %v2830 = vadd.f32 %v2828, %v2829
    %v2831 = vrot.slane %v2830, 1
    %v2832 = vadd.f32 %v2830, %v2831
    %v2833 = vsel %vm210, %v2783, 0.0
    %v2834 = vrot.slane %v2833, 4
    %v2835 = vadd.f32 %v2833, %v2834
    %v2836 = vrot.slane %v2835, 2
    %v2837 = vadd.f32 %v2835, %v2836
    %v2838 = vrot.slane %v2837, 1
    %v2839 = vadd.f32 %v2837, %v2838
    %v2840 = vadd.f32 %v2790, %v93
    %v2841 = vadd.f32 %v2797, %v94
    %v2842 = vadd.f32 %v2804, %v95
    %v2843 = vadd.f32 %v2811, %v96
    %v2844 = vadd.f32 %v2818, %v97
    %v2845 = vadd.f32 %v2825, %v98
    %v2846 = vadd.f32 %v2832, %v99
    %v2847 = vadd.f32 %v2839, %v100
    %v2849 = vsel %vm210, %v2840, 0
    %v2852 = vsel %vm210, %v77, 0
    %2854 = vmatprep.subr.mxu0 0.0
    %2855 = vmatpush1.xpose.msra.mxu0 %v2852
    %2856 = vmatprep.subr.mxu0 0.0
    %2857 = vmatpush1.xpose.msra.mxu0 0.0
    %2858 = vmatprep.subr.mxu0 0.0
    %2859 = vmatpush1.xpose.msra.mxu0 0.0
    %2860 = vmatprep.subr.mxu0 0.0
    %2861 = vmatpush1.xpose.msra.mxu0 0.0
    %2862 = vmatprep.subr.mxu0 0.0
    %2863 = vmatpush1.xpose.msra.mxu0 0.0
    %2864 = vmatprep.subr.mxu0 0.0
    %2865 = vmatpush1.xpose.msra.mxu0 0.0
    %2866 = vmatprep.subr.mxu0 0.0
    %2867 = vmatpush1.xpose.msra.mxu0 0.0
    %2868 = vmatprep.subr.mxu0 0.0
    %2869 = vmatpush1.xpose.msra.mxu0 0.0
    %2870 = vmatprep.subr.mxu0 0.0
    %2871 = vmatpush1.xpose.msra.mxu0 0.0
    %2872 = vmatprep.subr.mxu0 0.0
    %2873 = vmatpush1.xpose.msra.mxu0 0.0
    %2874 = vmatprep.subr.mxu0 0.0
    %2875 = vmatpush1.xpose.msra.mxu0 0.0
    %2876 = vmatprep.subr.mxu0 0.0
    %2877 = vmatpush1.xpose.msra.mxu0 0.0
    %2878 = vmatprep.subr.mxu0 0.0
    %2879 = vmatpush1.xpose.msra.mxu0 0.0
    %2880 = vmatprep.subr.mxu0 0.0
    %2881 = vmatpush1.xpose.msra.mxu0 0.0
    %2882 = vmatprep.subr.mxu0 0.0
    %2883 = vmatpush1.xpose.msra.mxu0 0.0
    %2884 = vmatprep.subr.mxu0 0.0
    %2885 = vmatpush1.xpose.msra.mxu0 0.0
    %2886 = vmatprep.subr.mxu0 0.0
    %2887 = vmatpush1.xpose.msra.mxu0 0.0
    %2888 = vmatprep.subr.mxu0 0.0
    %2889 = vmatpush1.xpose.msra.mxu0 0.0
    %2890 = vmatprep.subr.mxu0 0.0
    %2891 = vmatpush1.xpose.msra.mxu0 0.0
    %2892 = vmatprep.subr.mxu0 0.0
    %2893 = vmatpush1.xpose.msra.mxu0 0.0
    %2894 = vmatprep.subr.mxu0 0.0
    %2895 = vmatpush1.xpose.msra.mxu0 0.0
    %2896 = vmatprep.subr.mxu0 0.0
    %2897 = vmatpush1.xpose.msra.mxu0 0.0
    %2898 = vmatprep.subr.mxu0 0.0
    %2899 = vmatpush1.xpose.msra.mxu0 0.0
    %2900 = vmatprep.subr.mxu0 0.0
    %2901 = vmatpush1.xpose.msra.mxu0 0.0
    %2902 = vmatprep.subr.mxu0 0.0
    %2903 = vmatpush1.xpose.msra.mxu0 0.0
    %2904 = vmatprep.subr.mxu0 0.0
    %2905 = vmatpush1.xpose.msra.mxu0 0.0
    %2906 = vmatprep.subr.mxu0 0.0
    %2907 = vmatpush1.xpose.msra.mxu0 0.0
    %2908 = vmatprep.subr.mxu0 0.0
    %2909 = vmatpush1.xpose.msra.mxu0 0.0
    %2910 = vmatprep.subr.mxu0 0.0
    %2911 = vmatpush1.xpose.msra.mxu0 0.0
    %2912 = vmatprep.subr.mxu0 0.0
    %2913 = vmatpush1.xpose.msra.mxu0 0.0
    %2914 = vmatprep.subr.mxu0 0.0
    %2915 = vmatpush1.xpose.msra.mxu0 0.0
    %2916 = vmatprep.subr.mxu0 0.0
    %2917 = vmatpush1.xpose.msra.mxu0 0.0
    %2918 = vmatprep.mubr.f32.mxu0 0.0
    %2919 = vmatmul.mubr.f32.gmra.mrb[0].mxu0 %v2849
    %v2920 = vpop.f32.mrb[0].mxu0
    %v2921 = vadd.f32 0.0, %v2920
    %v2922 = vpop.f32.mrb[0].mxu0
    %2923 = vdwg.mxu0
    %v2925 = vsel %vm210, %v2841, 0
    %v2928 = vsel %vm210, %v78, 0
    %2930 = vmatprep.subr.mxu0 0.0
    %2931 = vmatpush1.xpose.msra.mxu0 %v2928
    %2932 = vmatprep.subr.mxu0 0.0
    %2933 = vmatpush1.xpose.msra.mxu0 0.0
    %2934 = vmatprep.subr.mxu0 0.0
    %2935 = vmatpush1.xpose.msra.mxu0 0.0
    %2936 = vmatprep.subr.mxu0 0.0
    %2937 = vmatpush1.xpose.msra.mxu0 0.0
    %2938 = vmatprep.subr.mxu0 0.0
    %2939 = vmatpush1.xpose.msra.mxu0 0.0
    %2940 = vmatprep.subr.mxu0 0.0
    %2941 = vmatpush1.xpose.msra.mxu0 0.0
    %2942 = vmatprep.subr.mxu0 0.0
    %2943 = vmatpush1.xpose.msra.mxu0 0.0
    %2944 = vmatprep.subr.mxu0 0.0
    %2945 = vmatpush1.xpose.msra.mxu0 0.0
    %2946 = vmatprep.subr.mxu0 0.0
    %2947 = vmatpush1.xpose.msra.mxu0 0.0
    %2948 = vmatprep.subr.mxu0 0.0
    %2949 = vmatpush1.xpose.msra.mxu0 0.0
    %2950 = vmatprep.subr.mxu0 0.0
    %2951 = vmatpush1.xpose.msra.mxu0 0.0
    %2952 = vmatprep.subr.mxu0 0.0
    %2953 = vmatpush1.xpose.msra.mxu0 0.0
    %2954 = vmatprep.subr.mxu0 0.0
    %2955 = vmatpush1.xpose.msra.mxu0 0.0
    %2956 = vmatprep.subr.mxu0 0.0
    %2957 = vmatpush1.xpose.msra.mxu0 0.0
    %2958 = vmatprep.subr.mxu0 0.0
    %2959 = vmatpush1.xpose.msra.mxu0 0.0
    %2960 = vmatprep.subr.mxu0 0.0
    %2961 = vmatpush1.xpose.msra.mxu0 0.0
    %2962 = vmatprep.subr.mxu0 0.0
    %2963 = vmatpush1.xpose.msra.mxu0 0.0
    %2964 = vmatprep.subr.mxu0 0.0
    %2965 = vmatpush1.xpose.msra.mxu0 0.0
    %2966 = vmatprep.subr.mxu0 0.0
    %2967 = vmatpush1.xpose.msra.mxu0 0.0
    %2968 = vmatprep.subr.mxu0 0.0
    %2969 = vmatpush1.xpose.msra.mxu0 0.0
    %2970 = vmatprep.subr.mxu0 0.0
    %2971 = vmatpush1.xpose.msra.mxu0 0.0
    %2972 = vmatprep.subr.mxu0 0.0
    %2973 = vmatpush1.xpose.msra.mxu0 0.0
    %2974 = vmatprep.subr.mxu0 0.0
    %2975 = vmatpush1.xpose.msra.mxu0 0.0
    %2976 = vmatprep.subr.mxu0 0.0
    %2977 = vmatpush1.xpose.msra.mxu0 0.0
    %2978 = vmatprep.subr.mxu0 0.0
    %2979 = vmatpush1.xpose.msra.mxu0 0.0
    %2980 = vmatprep.subr.mxu0 0.0
    %2981 = vmatpush1.xpose.msra.mxu0 0.0
    %2982 = vmatprep.subr.mxu0 0.0
    %2983 = vmatpush1.xpose.msra.mxu0 0.0
    %2984 = vmatprep.subr.mxu0 0.0
    %2985 = vmatpush1.xpose.msra.mxu0 0.0
    %2986 = vmatprep.subr.mxu0 0.0
    %2987 = vmatpush1.xpose.msra.mxu0 0.0
    %2988 = vmatprep.subr.mxu0 0.0
    %2989 = vmatpush1.xpose.msra.mxu0 0.0
    %2990 = vmatprep.subr.mxu0 0.0
    %2991 = vmatpush1.xpose.msra.mxu0 0.0
    %2992 = vmatprep.subr.mxu0 0.0
    %2993 = vmatpush1.xpose.msra.mxu0 0.0
    %2994 = vmatprep.mubr.f32.mxu0 0.0
    %2995 = vmatmul.mubr.f32.gmra.mrb[0].mxu0 %v2925
    %v2996 = vpop.f32.mrb[0].mxu0
    %v2997 = vadd.f32 0.0, %v2996
    %v2998 = vpop.f32.mrb[0].mxu0
    %2999 = vdwg.mxu0
    %v3001 = vsel %vm210, %v2842, 0
    %v3004 = vsel %vm210, %v79, 0
    %3006 = vmatprep.subr.mxu0 0.0
    %3007 = vmatpush1.xpose.msra.mxu0 %v3004
    %3008 = vmatprep.subr.mxu0 0.0
    %3009 = vmatpush1.xpose.msra.mxu0 0.0
    %3010 = vmatprep.subr.mxu0 0.0
    %3011 = vmatpush1.xpose.msra.mxu0 0.0
    %3012 = vmatprep.subr.mxu0 0.0
    %3013 = vmatpush1.xpose.msra.mxu0 0.0
    %3014 = vmatprep.subr.mxu0 0.0
    %3015 = vmatpush1.xpose.msra.mxu0 0.0
    %3016 = vmatprep.subr.mxu0 0.0
    %3017 = vmatpush1.xpose.msra.mxu0 0.0
    %3018 = vmatprep.subr.mxu0 0.0
    %3019 = vmatpush1.xpose.msra.mxu0 0.0
    %3020 = vmatprep.subr.mxu0 0.0
    %3021 = vmatpush1.xpose.msra.mxu0 0.0
    %3022 = vmatprep.subr.mxu0 0.0
    %3023 = vmatpush1.xpose.msra.mxu0 0.0
    %3024 = vmatprep.subr.mxu0 0.0
    %3025 = vmatpush1.xpose.msra.mxu0 0.0
    %3026 = vmatprep.subr.mxu0 0.0
    %3027 = vmatpush1.xpose.msra.mxu0 0.0
    %3028 = vmatprep.subr.mxu0 0.0
    %3029 = vmatpush1.xpose.msra.mxu0 0.0
    %3030 = vmatprep.subr.mxu0 0.0
    %3031 = vmatpush1.xpose.msra.mxu0 0.0
    %3032 = vmatprep.subr.mxu0 0.0
    %3033 = vmatpush1.xpose.msra.mxu0 0.0
    %3034 = vmatprep.subr.mxu0 0.0
    %3035 = vmatpush1.xpose.msra.mxu0 0.0
    %3036 = vmatprep.subr.mxu0 0.0
    %3037 = vmatpush1.xpose.msra.mxu0 0.0
    %3038 = vmatprep.subr.mxu0 0.0
    %3039 = vmatpush1.xpose.msra.mxu0 0.0
    %3040 = vmatprep.subr.mxu0 0.0
    %3041 = vmatpush1.xpose.msra.mxu0 0.0
    %3042 = vmatprep.subr.mxu0 0.0
    %3043 = vmatpush1.xpose.msra.mxu0 0.0
    %3044 = vmatprep.subr.mxu0 0.0
    %3045 = vmatpush1.xpose.msra.mxu0 0.0
    %3046 = vmatprep.subr.mxu0 0.0
    %3047 = vmatpush1.xpose.msra.mxu0 0.0
    %3048 = vmatprep.subr.mxu0 0.0
    %3049 = vmatpush1.xpose.msra.mxu0 0.0
    %3050 = vmatprep.subr.mxu0 0.0
    %3051 = vmatpush1.xpose.msra.mxu0 0.0
    %3052 = vmatprep.subr.mxu0 0.0
    %3053 = vmatpush1.xpose.msra.mxu0 0.0
    %3054 = vmatprep.subr.mxu0 0.0
    %3055 = vmatpush1.xpose.msra.mxu0 0.0
    %3056 = vmatprep.subr.mxu0 0.0
    %3057 = vmatpush1.xpose.msra.mxu0 0.0
    %3058 = vmatprep.subr.mxu0 0.0
    %3059 = vmatpush1.xpose.msra.mxu0 0.0
    %3060 = vmatprep.subr.mxu0 0.0
    %3061 = vmatpush1.xpose.msra.mxu0 0.0
    %3062 = vmatprep.subr.mxu0 0.0
    %3063 = vmatpush1.xpose.msra.mxu0 0.0
    %3064 = vmatprep.subr.mxu0 0.0
    %3065 = vmatpush1.xpose.msra.mxu0 0.0
    %3066 = vmatprep.subr.mxu0 0.0
    %3067 = vmatpush1.xpose.msra.mxu0 0.0
    %3068 = vmatprep.subr.mxu0 0.0
    %3069 = vmatpush1.xpose.msra.mxu0 0.0
    %3070 = vmatprep.mubr.f32.mxu0 0.0
    %3071 = vmatmul.mubr.f32.gmra.mrb[0].mxu0 %v3001
    %v3072 = vpop.f32.mrb[0].mxu0
    %v3073 = vadd.f32 0.0, %v3072
    %v3074 = vpop.f32.mrb[0].mxu0
    %3075 = vdwg.mxu0
    %v3077 = vsel %vm210, %v2843, 0
    %v3080 = vsel %vm210, %v80, 0
    %3082 = vmatprep.subr.mxu0 0.0
    %3083 = vmatpush1.xpose.msra.mxu0 %v3080
    %3084 = vmatprep.subr.mxu0 0.0
    %3085 = vmatpush1.xpose.msra.mxu0 0.0
    %3086 = vmatprep.subr.mxu0 0.0
    %3087 = vmatpush1.xpose.msra.mxu0 0.0
    %3088 = vmatprep.subr.mxu0 0.0
    %3089 = vmatpush1.xpose.msra.mxu0 0.0
    %3090 = vmatprep.subr.mxu0 0.0
    %3091 = vmatpush1.xpose.msra.mxu0 0.0
    %3092 = vmatprep.subr.mxu0 0.0
    %3093 = vmatpush1.xpose.msra.mxu0 0.0
    %3094 = vmatprep.subr.mxu0 0.0
    %3095 = vmatpush1.xpose.msra.mxu0 0.0
    %3096 = vmatprep.subr.mxu0 0.0
    %3097 = vmatpush1.xpose.msra.mxu0 0.0
    %3098 = vmatprep.subr.mxu0 0.0
    %3099 = vmatpush1.xpose.msra.mxu0 0.0
    %3100 = vmatprep.subr.mxu0 0.0
    %3101 = vmatpush1.xpose.msra.mxu0 0.0
    %3102 = vmatprep.subr.mxu0 0.0
    %3103 = vmatpush1.xpose.msra.mxu0 0.0
    %3104 = vmatprep.subr.mxu0 0.0
    %3105 = vmatpush1.xpose.msra.mxu0 0.0
    %3106 = vmatprep.subr.mxu0 0.0
    %3107 = vmatpush1.xpose.msra.mxu0 0.0
    %3108 = vmatprep.subr.mxu0 0.0
    %3109 = vmatpush1.xpose.msra.mxu0 0.0
    %3110 = vmatprep.subr.mxu0 0.0
    %3111 = vmatpush1.xpose.msra.mxu0 0.0
    %3112 = vmatprep.subr.mxu0 0.0
    %3113 = vmatpush1.xpose.msra.mxu0 0.0
    %3114 = vmatprep.subr.mxu0 0.0
    %3115 = vmatpush1.xpose.msra.mxu0 0.0
    %3116 = vmatprep.subr.mxu0 0.0
    %3117 = vmatpush1.xpose.msra.mxu0 0.0
    %3118 = vmatprep.subr.mxu0 0.0
    %3119 = vmatpush1.xpose.msra.mxu0 0.0
    %3120 = vmatprep.subr.mxu0 0.0
    %3121 = vmatpush1.xpose.msra.mxu0 0.0
    %3122 = vmatprep.subr.mxu0 0.0
    %3123 = vmatpush1.xpose.msra.mxu0 0.0
    %3124 = vmatprep.subr.mxu0 0.0
    %3125 = vmatpush1.xpose.msra.mxu0 0.0
    %3126 = vmatprep.subr.mxu0 0.0
    %3127 = vmatpush1.xpose.msra.mxu0 0.0
    %3128 = vmatprep.subr.mxu0 0.0
    %3129 = vmatpush1.xpose.msra.mxu0 0.0
    %3130 = vmatprep.subr.mxu0 0.0
    %3131 = vmatpush1.xpose.msra.mxu0 0.0
    %3132 = vmatprep.subr.mxu0 0.0
    %3133 = vmatpush1.xpose.msra.mxu0 0.0
    %3134 = vmatprep.subr.mxu0 0.0
    %3135 = vmatpush1.xpose.msra.mxu0 0.0
    %3136 = vmatprep.subr.mxu0 0.0
    %3137 = vmatpush1.xpose.msra.mxu0 0.0
    %3138 = vmatprep.subr.mxu0 0.0
    %3139 = vmatpush1.xpose.msra.mxu0 0.0
    %3140 = vmatprep.subr.mxu0 0.0
    %3141 = vmatpush1.xpose.msra.mxu0 0.0
    %3142 = vmatprep.subr.mxu0 0.0
    %3143 = vmatpush1.xpose.msra.mxu0 0.0
    %3144 = vmatprep.subr.mxu0 0.0
    %3145 = vmatpush1.xpose.msra.mxu0 0.0
    %3146 = vmatprep.mubr.f32.mxu0 0.0
    %3147 = vmatmul.mubr.f32.gmra.mrb[0].mxu0 %v3077
    %v3148 = vpop.f32.mrb[0].mxu0
    %v3149 = vadd.f32 0.0, %v3148
    %v3150 = vpop.f32.mrb[0].mxu0
    %3151 = vdwg.mxu0
    %v3153 = vsel %vm210, %v2844, 0
    %v3156 = vsel %vm210, %v81, 0
    %3158 = vmatprep.subr.mxu0 0.0
    %3159 = vmatpush1.xpose.msra.mxu0 %v3156
    %3160 = vmatprep.subr.mxu0 0.0
    %3161 = vmatpush1.xpose.msra.mxu0 0.0
    %3162 = vmatprep.subr.mxu0 0.0
    %3163 = vmatpush1.xpose.msra.mxu0 0.0
    %3164 = vmatprep.subr.mxu0 0.0
    %3165 = vmatpush1.xpose.msra.mxu0 0.0
    %3166 = vmatprep.subr.mxu0 0.0
    %3167 = vmatpush1.xpose.msra.mxu0 0.0
    %3168 = vmatprep.subr.mxu0 0.0
    %3169 = vmatpush1.xpose.msra.mxu0 0.0
    %3170 = vmatprep.subr.mxu0 0.0
    %3171 = vmatpush1.xpose.msra.mxu0 0.0
    %3172 = vmatprep.subr.mxu0 0.0
    %3173 = vmatpush1.xpose.msra.mxu0 0.0
    %3174 = vmatprep.subr.mxu0 0.0
    %3175 = vmatpush1.xpose.msra.mxu0 0.0
    %3176 = vmatprep.subr.mxu0 0.0
    %3177 = vmatpush1.xpose.msra.mxu0 0.0
    %3178 = vmatprep.subr.mxu0 0.0
    %3179 = vmatpush1.xpose.msra.mxu0 0.0
    %3180 = vmatprep.subr.mxu0 0.0
    %3181 = vmatpush1.xpose.msra.mxu0 0.0
    %3182 = vmatprep.subr.mxu0 0.0
    %3183 = vmatpush1.xpose.msra.mxu0 0.0
    %3184 = vmatprep.subr.mxu0 0.0
    %3185 = vmatpush1.xpose.msra.mxu0 0.0
    %3186 = vmatprep.subr.mxu0 0.0
    %3187 = vmatpush1.xpose.msra.mxu0 0.0
    %3188 = vmatprep.subr.mxu0 0.0
    %3189 = vmatpush1.xpose.msra.mxu0 0.0
    %3190 = vmatprep.subr.mxu0 0.0
    %3191 = vmatpush1.xpose.msra.mxu0 0.0
    %3192 = vmatprep.subr.mxu0 0.0
    %3193 = vmatpush1.xpose.msra.mxu0 0.0
    %3194 = vmatprep.subr.mxu0 0.0
    %3195 = vmatpush1.xpose.msra.mxu0 0.0
    %3196 = vmatprep.subr.mxu0 0.0
    %3197 = vmatpush1.xpose.msra.mxu0 0.0
    %3198 = vmatprep.subr.mxu0 0.0
    %3199 = vmatpush1.xpose.msra.mxu0 0.0
    %3200 = vmatprep.subr.mxu0 0.0
    %3201 = vmatpush1.xpose.msra.mxu0 0.0
    %3202 = vmatprep.subr.mxu0 0.0
    %3203 = vmatpush1.xpose.msra.mxu0 0.0
    %3204 = vmatprep.subr.mxu0 0.0
    %3205 = vmatpush1.xpose.msra.mxu0 0.0
    %3206 = vmatprep.subr.mxu0 0.0
    %3207 = vmatpush1.xpose.msra.mxu0 0.0
    %3208 = vmatprep.subr.mxu0 0.0
    %3209 = vmatpush1.xpose.msra.mxu0 0.0
    %3210 = vmatprep.subr.mxu0 0.0
    %3211 = vmatpush1.xpose.msra.mxu0 0.0
    %3212 = vmatprep.subr.mxu0 0.0
    %3213 = vmatpush1.xpose.msra.mxu0 0.0
    %3214 = vmatprep.subr.mxu0 0.0
    %3215 = vmatpush1.xpose.msra.mxu0 0.0
    %3216 = vmatprep.subr.mxu0 0.0
    %3217 = vmatpush1.xpose.msra.mxu0 0.0
    %3218 = vmatprep.subr.mxu0 0.0
    %3219 = vmatpush1.xpose.msra.mxu0 0.0
    %3220 = vmatprep.subr.mxu0 0.0
    %3221 = vmatpush1.xpose.msra.mxu0 0.0
    %3222 = vmatprep.mubr.f32.mxu0 0.0
    %3223 = vmatmul.mubr.f32.gmra.mrb[0].mxu0 %v3153
    %v3224 = vpop.f32.mrb[0].mxu0
    %v3225 = vadd.f32 0.0, %v3224
    %v3226 = vpop.f32.mrb[0].mxu0
    %3227 = vdwg.mxu0
    %v3229 = vsel %vm210, %v2845, 0
    %v3232 = vsel %vm210, %v82, 0
    %3234 = vmatprep.subr.mxu0 0.0
    %3235 = vmatpush1.xpose.msra.mxu0 %v3232
    %3236 = vmatprep.subr.mxu0 0.0
    %3237 = vmatpush1.xpose.msra.mxu0 0.0
    %3238 = vmatprep.subr.mxu0 0.0
    %3239 = vmatpush1.xpose.msra.mxu0 0.0
    %3240 = vmatprep.subr.mxu0 0.0
    %3241 = vmatpush1.xpose.msra.mxu0 0.0
    %3242 = vmatprep.subr.mxu0 0.0
    %3243 = vmatpush1.xpose.msra.mxu0 0.0
    %3244 = vmatprep.subr.mxu0 0.0
    %3245 = vmatpush1.xpose.msra.mxu0 0.0
    %3246 = vmatprep.subr.mxu0 0.0
    %3247 = vmatpush1.xpose.msra.mxu0 0.0
    %3248 = vmatprep.subr.mxu0 0.0
    %3249 = vmatpush1.xpose.msra.mxu0 0.0
    %3250 = vmatprep.subr.mxu0 0.0
    %3251 = vmatpush1.xpose.msra.mxu0 0.0
    %3252 = vmatprep.subr.mxu0 0.0
    %3253 = vmatpush1.xpose.msra.mxu0 0.0
    %3254 = vmatprep.subr.mxu0 0.0
    %3255 = vmatpush1.xpose.msra.mxu0 0.0
    %3256 = vmatprep.subr.mxu0 0.0
    %3257 = vmatpush1.xpose.msra.mxu0 0.0
    %3258 = vmatprep.subr.mxu0 0.0
    %3259 = vmatpush1.xpose.msra.mxu0 0.0
    %3260 = vmatprep.subr.mxu0 0.0
    %3261 = vmatpush1.xpose.msra.mxu0 0.0
    %3262 = vmatprep.subr.mxu0 0.0
    %3263 = vmatpush1.xpose.msra.mxu0 0.0
    %3264 = vmatprep.subr.mxu0 0.0
    %3265 = vmatpush1.xpose.msra.mxu0 0.0
    %3266 = vmatprep.subr.mxu0 0.0
    %3267 = vmatpush1.xpose.msra.mxu0 0.0
    %3268 = vmatprep.subr.mxu0 0.0
    %3269 = vmatpush1.xpose.msra.mxu0 0.0
    %3270 = vmatprep.subr.mxu0 0.0
    %3271 = vmatpush1.xpose.msra.mxu0 0.0
    %3272 = vmatprep.subr.mxu0 0.0
    %3273 = vmatpush1.xpose.msra.mxu0 0.0
    %3274 = vmatprep.subr.mxu0 0.0
    %3275 = vmatpush1.xpose.msra.mxu0 0.0
    %3276 = vmatprep.subr.mxu0 0.0
    %3277 = vmatpush1.xpose.msra.mxu0 0.0
    %3278 = vmatprep.subr.mxu0 0.0
    %3279 = vmatpush1.xpose.msra.mxu0 0.0
    %3280 = vmatprep.subr.mxu0 0.0
    %3281 = vmatpush1.xpose.msra.mxu0 0.0
    %3282 = vmatprep.subr.mxu0 0.0
    %3283 = vmatpush1.xpose.msra.mxu0 0.0
    %3284 = vmatprep.subr.mxu0 0.0
    %3285 = vmatpush1.xpose.msra.mxu0 0.0
    %3286 = vmatprep.subr.mxu0 0.0
    %3287 = vmatpush1.xpose.msra.mxu0 0.0
    %3288 = vmatprep.subr.mxu0 0.0
    %3289 = vmatpush1.xpose.msra.mxu0 0.0
    %3290 = vmatprep.subr.mxu0 0.0
    %3291 = vmatpush1.xpose.msra.mxu0 0.0
    %3292 = vmatprep.subr.mxu0 0.0
    %3293 = vmatpush1.xpose.msra.mxu0 0.0
    %3294 = vmatprep.subr.mxu0 0.0
    %3295 = vmatpush1.xpose.msra.mxu0 0.0
    %3296 = vmatprep.subr.mxu0 0.0
    %3297 = vmatpush1.xpose.msra.mxu0 0.0
    %3298 = vmatprep.mubr.f32.mxu0 0.0
    %3299 = vmatmul.mubr.f32.gmra.mrb[0].mxu0 %v3229
    %v3300 = vpop.f32.mrb[0].mxu0
    %v3301 = vadd.f32 0.0, %v3300
    %v3302 = vpop.f32.mrb[0].mxu0
    %3303 = vdwg.mxu0
    %v3305 = vsel %vm210, %v2846, 0
    %v3308 = vsel %vm210, %v83, 0
    %3310 = vmatprep.subr.mxu0 0.0
    %3311 = vmatpush1.xpose.msra.mxu0 %v3308
    %3312 = vmatprep.subr.mxu0 0.0
    %3313 = vmatpush1.xpose.msra.mxu0 0.0
    %3314 = vmatprep.subr.mxu0 0.0
    %3315 = vmatpush1.xpose.msra.mxu0 0.0
    %3316 = vmatprep.subr.mxu0 0.0
    %3317 = vmatpush1.xpose.msra.mxu0 0.0
    %3318 = vmatprep.subr.mxu0 0.0
    %3319 = vmatpush1.xpose.msra.mxu0 0.0
    %3320 = vmatprep.subr.mxu0 0.0
    %3321 = vmatpush1.xpose.msra.mxu0 0.0
    %3322 = vmatprep.subr.mxu0 0.0
    %3323 = vmatpush1.xpose.msra.mxu0 0.0
    %3324 = vmatprep.subr.mxu0 0.0
    %3325 = vmatpush1.xpose.msra.mxu0 0.0
    %3326 = vmatprep.subr.mxu0 0.0
    %3327 = vmatpush1.xpose.msra.mxu0 0.0
    %3328 = vmatprep.subr.mxu0 0.0
    %3329 = vmatpush1.xpose.msra.mxu0 0.0
    %3330 = vmatprep.subr.mxu0 0.0
    %3331 = vmatpush1.xpose.msra.mxu0 0.0
    %3332 = vmatprep.subr.mxu0 0.0
    %3333 = vmatpush1.xpose.msra.mxu0 0.0
    %3334 = vmatprep.subr.mxu0 0.0
    %3335 = vmatpush1.xpose.msra.mxu0 0.0
    %3336 = vmatprep.subr.mxu0 0.0
    %3337 = vmatpush1.xpose.msra.mxu0 0.0
    %3338 = vmatprep.subr.mxu0 0.0
    %3339 = vmatpush1.xpose.msra.mxu0 0.0
    %3340 = vmatprep.subr.mxu0 0.0
    %3341 = vmatpush1.xpose.msra.mxu0 0.0
    %3342 = vmatprep.subr.mxu0 0.0
    %3343 = vmatpush1.xpose.msra.mxu0 0.0
    %3344 = vmatprep.subr.mxu0 0.0
    %3345 = vmatpush1.xpose.msra.mxu0 0.0
    %3346 = vmatprep.subr.mxu0 0.0
    %3347 = vmatpush1.xpose.msra.mxu0 0.0
    %3348 = vmatprep.subr.mxu0 0.0
    %3349 = vmatpush1.xpose.msra.mxu0 0.0
    %3350 = vmatprep.subr.mxu0 0.0
    %3351 = vmatpush1.xpose.msra.mxu0 0.0
    %3352 = vmatprep.subr.mxu0 0.0
    %3353 = vmatpush1.xpose.msra.mxu0 0.0
    %3354 = vmatprep.subr.mxu0 0.0
    %3355 = vmatpush1.xpose.msra.mxu0 0.0
    %3356 = vmatprep.subr.mxu0 0.0
    %3357 = vmatpush1.xpose.msra.mxu0 0.0
    %3358 = vmatprep.subr.mxu0 0.0
    %3359 = vmatpush1.xpose.msra.mxu0 0.0
    %3360 = vmatprep.subr.mxu0 0.0
    %3361 = vmatpush1.xpose.msra.mxu0 0.0
    %3362 = vmatprep.subr.mxu0 0.0
    %3363 = vmatpush1.xpose.msra.mxu0 0.0
    %3364 = vmatprep.subr.mxu0 0.0
    %3365 = vmatpush1.xpose.msra.mxu0 0.0
    %3366 = vmatprep.subr.mxu0 0.0
    %3367 = vmatpush1.xpose.msra.mxu0 0.0
    %3368 = vmatprep.subr.mxu0 0.0
    %3369 = vmatpush1.xpose.msra.mxu0 0.0
    %3370 = vmatprep.subr.mxu0 0.0
    %3371 = vmatpush1.xpose.msra.mxu0 0.0
    %3372 = vmatprep.subr.mxu0 0.0
    %3373 = vmatpush1.xpose.msra.mxu0 0.0
    %3374 = vmatprep.mubr.f32.mxu0 0.0
    %3375 = vmatmul.mubr.f32.gmra.mrb[0].mxu0 %v3305
    %v3376 = vpop.f32.mrb[0].mxu0
    %v3377 = vadd.f32 0.0, %v3376
    %v3378 = vpop.f32.mrb[0].mxu0
    %3379 = vdwg.mxu0
    %v3381 = vsel %vm210, %v2847, 0
    %v3384 = vsel %vm210, %v84, 0
    %3386 = vmatprep.subr.mxu0 0.0
    %3387 = vmatpush1.xpose.msra.mxu0 %v3384
    %3388 = vmatprep.subr.mxu0 0.0
    %3389 = vmatpush1.xpose.msra.mxu0 0.0
    %3390 = vmatprep.subr.mxu0 0.0
    %3391 = vmatpush1.xpose.msra.mxu0 0.0
    %3392 = vmatprep.subr.mxu0 0.0
    %3393 = vmatpush1.xpose.msra.mxu0 0.0
    %3394 = vmatprep.subr.mxu0 0.0
    %3395 = vmatpush1.xpose.msra.mxu0 0.0
    %3396 = vmatprep.subr.mxu0 0.0
    %3397 = vmatpush1.xpose.msra.mxu0 0.0
    %3398 = vmatprep.subr.mxu0 0.0
    %3399 = vmatpush1.xpose.msra.mxu0 0.0
    %3400 = vmatprep.subr.mxu0 0.0
    %3401 = vmatpush1.xpose.msra.mxu0 0.0
    %3402 = vmatprep.subr.mxu0 0.0
    %3403 = vmatpush1.xpose.msra.mxu0 0.0
    %3404 = vmatprep.subr.mxu0 0.0
    %3405 = vmatpush1.xpose.msra.mxu0 0.0
    %3406 = vmatprep.subr.mxu0 0.0
    %3407 = vmatpush1.xpose.msra.mxu0 0.0
    %3408 = vmatprep.subr.mxu0 0.0
    %3409 = vmatpush1.xpose.msra.mxu0 0.0
    %3410 = vmatprep.subr.mxu0 0.0
    %3411 = vmatpush1.xpose.msra.mxu0 0.0
    %3412 = vmatprep.subr.mxu0 0.0
    %3413 = vmatpush1.xpose.msra.mxu0 0.0
    %3414 = vmatprep.subr.mxu0 0.0
    %3415 = vmatpush1.xpose.msra.mxu0 0.0
    %3416 = vmatprep.subr.mxu0 0.0
    %3417 = vmatpush1.xpose.msra.mxu0 0.0
    %3418 = vmatprep.subr.mxu0 0.0
    %3419 = vmatpush1.xpose.msra.mxu0 0.0
    %3420 = vmatprep.subr.mxu0 0.0
    %3421 = vmatpush1.xpose.msra.mxu0 0.0
    %3422 = vmatprep.subr.mxu0 0.0
    %3423 = vmatpush1.xpose.msra.mxu0 0.0
    %3424 = vmatprep.subr.mxu0 0.0
    %3425 = vmatpush1.xpose.msra.mxu0 0.0
    %3426 = vmatprep.subr.mxu0 0.0
    %3427 = vmatpush1.xpose.msra.mxu0 0.0
    %3428 = vmatprep.subr.mxu0 0.0
    %3429 = vmatpush1.xpose.msra.mxu0 0.0
    %3430 = vmatprep.subr.mxu0 0.0
    %3431 = vmatpush1.xpose.msra.mxu0 0.0
    %3432 = vmatprep.subr.mxu0 0.0
    %3433 = vmatpush1.xpose.msra.mxu0 0.0
    %3434 = vmatprep.subr.mxu0 0.0
    %3435 = vmatpush1.xpose.msra.mxu0 0.0
    %3436 = vmatprep.subr.mxu0 0.0
    %3437 = vmatpush1.xpose.msra.mxu0 0.0
    %3438 = vmatprep.subr.mxu0 0.0
    %3439 = vmatpush1.xpose.msra.mxu0 0.0
    %3440 = vmatprep.subr.mxu0 0.0
    %3441 = vmatpush1.xpose.msra.mxu0 0.0
    %3442 = vmatprep.subr.mxu0 0.0
    %3443 = vmatpush1.xpose.msra.mxu0 0.0
    %3444 = vmatprep.subr.mxu0 0.0
    %3445 = vmatpush1.xpose.msra.mxu0 0.0
    %3446 = vmatprep.subr.mxu0 0.0
    %3447 = vmatpush1.xpose.msra.mxu0 0.0
    %3448 = vmatprep.subr.mxu0 0.0
    %3449 = vmatpush1.xpose.msra.mxu0 0.0
    %3450 = vmatprep.mubr.f32.mxu0 0.0
    %3451 = vmatmul.mubr.f32.gmra.mrb[0].mxu0 %v3381
    %v3452 = vpop.f32.mrb[0].mxu0
    %v3453 = vadd.f32 0.0, %v3452
    %v3454 = vpop.f32.mrb[0].mxu0
    %3455 = vdwg.mxu0
    %vm3456 = vcmp.eq.f32.partialorder %v93, 0.0
    %vm3457 = vcmp.eq.f32.partialorder %v94, 0.0
    %vm3458 = vcmp.eq.f32.partialorder %v95, 0.0
    %vm3459 = vcmp.eq.f32.partialorder %v96, 0.0
    %vm3460 = vcmp.eq.f32.partialorder %v97, 0.0
    %vm3461 = vcmp.eq.f32.partialorder %v98, 0.0
    %vm3462 = vcmp.eq.f32.partialorder %v99, 0.0
    %vm3463 = vcmp.eq.f32.partialorder %v100, 0.0
    %v3473 = vunpack.c.l.s4 1966171168
    %v3474 = vunpack.c.0.s8 %v3473
    %v3475 = vlaneseq
    %v3476 = vshrl.u32 %v3475, 7
    %v3477 = vsub.s32 %v3474, %v3476
    %v3478 = vrot.slane %v2921, %v3477
    %v3480 = vunpack.c.l.s4 1966171168
    %v3481 = vunpack.c.0.s8 %v3480
    %v3482 = vlaneseq
    %v3483 = vshrl.u32 %v3482, 7
    %v3484 = vsub.s32 %v3481, %v3483
    %v3485 = vrot.slane %v3478, %v3484
    %v3487 = vunpack.c.l.s4 1966171168
    %v3488 = vunpack.c.0.s8 %v3487
    %v3489 = vlaneseq
    %v3490 = vshrl.u32 %v3489, 7
    %v3491 = vsub.s32 %v3488, %v3490
    %v3492 = vrot.slane %v2997, %v3491
    %v3494 = vunpack.c.l.s4 1966171168
    %v3495 = vunpack.c.0.s8 %v3494
    %v3496 = vlaneseq
    %v3497 = vshrl.u32 %v3496, 7
    %v3498 = vsub.s32 %v3495, %v3497
    %v3499 = vrot.slane %v3492, %v3498
    %v3501 = vunpack.c.l.s4 1966171168
    %v3502 = vunpack.c.0.s8 %v3501
    %v3503 = vlaneseq
    %v3504 = vshrl.u32 %v3503, 7
    %v3505 = vsub.s32 %v3502, %v3504
    %v3506 = vrot.slane %v3073, %v3505
    %v3508 = vunpack.c.l.s4 1966171168
    %v3509 = vunpack.c.0.s8 %v3508
    %v3510 = vlaneseq
    %v3511 = vshrl.u32 %v3510, 7
    %v3512 = vsub.s32 %v3509, %v3511
    %v3513 = vrot.slane %v3506, %v3512
    %v3515 = vunpack.c.l.s4 1966171168
    %v3516 = vunpack.c.0.s8 %v3515
    %v3517 = vlaneseq
    %v3518 = vshrl.u32 %v3517, 7
    %v3519 = vsub.s32 %v3516, %v3518
    %v3520 = vrot.slane %v3149, %v3519
    %v3522 = vunpack.c.l.s4 1966171168
    %v3523 = vunpack.c.0.s8 %v3522
    %v3524 = vlaneseq
    %v3525 = vshrl.u32 %v3524, 7
    %v3526 = vsub.s32 %v3523, %v3525
    %v3527 = vrot.slane %v3520, %v3526
    %v3529 = vunpack.c.l.s4 1966171168
    %v3530 = vunpack.c.0.s8 %v3529
    %v3531 = vlaneseq
    %v3532 = vshrl.u32 %v3531, 7
    %v3533 = vsub.s32 %v3530, %v3532
    %v3534 = vrot.slane %v3225, %v3533
    %v3536 = vunpack.c.l.s4 1966171168
    %v3537 = vunpack.c.0.s8 %v3536
    %v3538 = vlaneseq
    %v3539 = vshrl.u32 %v3538, 7
    %v3540 = vsub.s32 %v3537, %v3539
    %v3541 = vrot.slane %v3534, %v3540
    %v3543 = vunpack.c.l.s4 1966171168
    %v3544 = vunpack.c.0.s8 %v3543
    %v3545 = vlaneseq
    %v3546 = vshrl.u32 %v3545, 7
    %v3547 = vsub.s32 %v3544, %v3546
    %v3548 = vrot.slane %v3301, %v3547
    %v3550 = vunpack.c.l.s4 1966171168
    %v3551 = vunpack.c.0.s8 %v3550
    %v3552 = vlaneseq
    %v3553 = vshrl.u32 %v3552, 7
    %v3554 = vsub.s32 %v3551, %v3553
    %v3555 = vrot.slane %v3548, %v3554
    %v3557 = vunpack.c.l.s4 1966171168
    %v3558 = vunpack.c.0.s8 %v3557
    %v3559 = vlaneseq
    %v3560 = vshrl.u32 %v3559, 7
    %v3561 = vsub.s32 %v3558, %v3560
    %v3562 = vrot.slane %v3377, %v3561
    %v3564 = vunpack.c.l.s4 1966171168
    %v3565 = vunpack.c.0.s8 %v3564
    %v3566 = vlaneseq
    %v3567 = vshrl.u32 %v3566, 7
    %v3568 = vsub.s32 %v3565, %v3567
    %v3569 = vrot.slane %v3562, %v3568
    %v3571 = vunpack.c.l.s4 1966171168
    %v3572 = vunpack.c.0.s8 %v3571
    %v3573 = vlaneseq
    %v3574 = vshrl.u32 %v3573, 7
    %v3575 = vsub.s32 %v3572, %v3574
    %v3576 = vrot.slane %v3453, %v3575
    %v3578 = vunpack.c.l.s4 1966171168
    %v3579 = vunpack.c.0.s8 %v3578
    %v3580 = vlaneseq
    %v3581 = vshrl.u32 %v3580, 7
    %v3582 = vsub.s32 %v3579, %v3581
    %v3583 = vrot.slane %v3576, %v3582
    %3584 = vrot.lane.b32.xlu0 %v3485, 32
    %v3585 = vpop.permute.xlu0 %3584
    %3586 = vrot.lane.b32.xlu0 %v3499, 32
    %v3587 = vpop.permute.xlu0 %3586
    %3588 = vrot.lane.b32.xlu0 %v3513, 32
    %v3589 = vpop.permute.xlu0 %3588
    %3590 = vrot.lane.b32.xlu0 %v3527, 32
    %v3591 = vpop.permute.xlu0 %3590
    %3592 = vrot.lane.b32.xlu0 %v3541, 32
    %v3593 = vpop.permute.xlu0 %3592
    %3594 = vrot.lane.b32.xlu0 %v3555, 32
    %v3595 = vpop.permute.xlu0 %3594
    %3596 = vrot.lane.b32.xlu0 %v3569, 32
    %v3597 = vpop.permute.xlu0 %3596
    %3598 = vrot.lane.b32.xlu0 %v3583, 32
    %v3599 = vpop.permute.xlu0 %3598
    %v3608 = vsel %vm3456, -1e+09, %v3585
    %v3609 = vsel %vm3457, -1e+09, %v3587
    %v3610 = vsel %vm3458, -1e+09, %v3589
    %v3611 = vsel %vm3459, -1e+09, %v3591
    %v3612 = vsel %vm3460, -1e+09, %v3593
    %v3613 = vsel %vm3461, -1e+09, %v3595
    %v3614 = vsel %vm3462, -1e+09, %v3597
    %v3615 = vsel %vm3463, -1e+09, %v3599
    %vm3616 = vcmask 319744
    %v3617 = vsel %vm3616, %v3608, -inf
    %3618 = vmax.xlane.f32.xlu0 %v3617
    %v3619 = vpop.xlane.xlu0 %3618
    %v3620 = vsel %vm3616, %v3609, -inf
    %3621 = vmax.xlane.f32.xlu0 %v3620
    %v3622 = vpop.xlane.xlu0 %3621
    %v3623 = vsel %vm3616, %v3610, -inf
    %3624 = vmax.xlane.f32.xlu0 %v3623
    %v3625 = vpop.xlane.xlu0 %3624
    %v3626 = vsel %vm3616, %v3611, -inf
    %3627 = vmax.xlane.f32.xlu0 %v3626
    %v3628 = vpop.xlane.xlu0 %3627
    %v3629 = vsel %vm3616, %v3612, -inf
    %3630 = vmax.xlane.f32.xlu0 %v3629
    %v3631 = vpop.xlane.xlu0 %3630
    %v3632 = vsel %vm3616, %v3613, -inf
    %3633 = vmax.xlane.f32.xlu0 %v3632
    %v3634 = vpop.xlane.xlu0 %3633
    %v3635 = vsel %vm3616, %v3614, -inf
    %3636 = vmax.xlane.f32.xlu0 %v3635
    %v3637 = vpop.xlane.xlu0 %3636
    %v3638 = vsel %vm3616, %v3615, -inf
    %3639 = vmax.xlane.f32.xlu0 %v3638
    %v3640 = vpop.xlane.xlu0 %3639
    %v3641 = vsub.f32 %v3608, %v3619
    %v3642 = vsub.f32 %v3609, %v3622
    %v3643 = vsub.f32 %v3610, %v3625
    %v3644 = vsub.f32 %v3611, %v3628
    %v3645 = vsub.f32 %v3612, %v3631
    %v3646 = vsub.f32 %v3613, %v3634
    %v3647 = vsub.f32 %v3614, %v3637
    %v3648 = vsub.f32 %v3615, %v3640
    %v3649 = vmul.f32 %v3641, 1.442695
    %v3650 = vpow.pop %v3649
    %v3651 = vmul.f32 %v3642, 1.442695
    %v3652 = vpow.pop %v3651
    %v3653 = vmul.f32 %v3643, 1.442695
    %v3654 = vpow.pop %v3653
    %v3655 = vmul.f32 %v3644, 1.442695
    %v3656 = vpow.pop %v3655
    %v3657 = vmul.f32 %v3645, 1.442695
    %v3658 = vpow.pop %v3657
    %v3659 = vmul.f32 %v3646, 1.442695
    %v3660 = vpow.pop %v3659
    %v3661 = vmul.f32 %v3647, 1.442695
    %v3662 = vpow.pop %v3661
    %v3663 = vmul.f32 %v3648, 1.442695
    %v3664 = vpow.pop %v3663
    %v3673 = vlaneseq
    %v3674 = vshrl.u32 %v3673, 7
    %v3675 = vsub.s32 0, %v3674
    %v3676 = vrot.slane %v3650, %v3675
    %v3677 = vlaneseq
    %v3678 = vshrl.u32 %v3677, 7
    %v3679 = vsub.s32 0, %v3678
    %v3680 = vrot.slane %v3652, %v3679
    %v3681 = vlaneseq
    %v3682 = vshrl.u32 %v3681, 7
    %v3683 = vsub.s32 0, %v3682
    %v3684 = vrot.slane %v3654, %v3683
    %v3685 = vlaneseq
    %v3686 = vshrl.u32 %v3685, 7
    %v3687 = vsub.s32 0, %v3686
    %v3688 = vrot.slane %v3656, %v3687
    %v3689 = vlaneseq
    %v3690 = vshrl.u32 %v3689, 7
    %v3691 = vsub.s32 0, %v3690
    %v3692 = vrot.slane %v3658, %v3691
    %v3693 = vlaneseq
    %v3694 = vshrl.u32 %v3693, 7
    %v3695 = vsub.s32 0, %v3694
    %v3696 = vrot.slane %v3660, %v3695
    %v3697 = vlaneseq
    %v3698 = vshrl.u32 %v3697, 7
    %v3699 = vsub.s32 0, %v3698
    %v3700 = vrot.slane %v3662, %v3699
    %v3701 = vlaneseq
    %v3702 = vshrl.u32 %v3701, 7
    %v3703 = vsub.s32 0, %v3702
    %v3704 = vrot.slane %v3664, %v3703
    %3705 = vrot.lane.b32.xlu0 %v3676, 96
    %v3706 = vpop.permute.xlu0 %3705
    %3707 = vrot.lane.b32.xlu0 %v3680, 96
    %v3708 = vpop.permute.xlu0 %3707
    %3709 = vrot.lane.b32.xlu0 %v3684, 96
    %v3710 = vpop.permute.xlu0 %3709
    %3711 = vrot.lane.b32.xlu0 %v3688, 96
    %v3712 = vpop.permute.xlu0 %3711
    %3713 = vrot.lane.b32.xlu0 %v3692, 96
    %v3714 = vpop.permute.xlu0 %3713
    %3715 = vrot.lane.b32.xlu0 %v3696, 96
    %v3716 = vpop.permute.xlu0 %3715
    %3717 = vrot.lane.b32.xlu0 %v3700, 96
    %v3718 = vpop.permute.xlu0 %3717
    %3719 = vrot.lane.b32.xlu0 %v3704, 96
    %v3720 = vpop.permute.xlu0 %3719
    %vm3729 = vcmask 57344
    %v3730 = vsel %vm3729, %v3706, 0.0
    %3731 = vadd.xlane.f32.xlu0 %v3730
    %v3732 = vpop.xlane.xlu0 %3731
    %v3733 = vsel %vm3729, %v3708, 0.0
    %3734 = vadd.xlane.f32.xlu0 %v3733
    %v3735 = vpop.xlane.xlu0 %3734
    %v3736 = vsel %vm3729, %v3710, 0.0
    %3737 = vadd.xlane.f32.xlu0 %v3736
    %v3738 = vpop.xlane.xlu0 %3737
    %v3739 = vsel %vm3729, %v3712, 0.0
    %3740 = vadd.xlane.f32.xlu0 %v3739
    %v3741 = vpop.xlane.xlu0 %3740
    %v3742 = vsel %vm3729, %v3714, 0.0
    %3743 = vadd.xlane.f32.xlu0 %v3742
    %v3744 = vpop.xlane.xlu0 %3743
    %v3745 = vsel %vm3729, %v3716, 0.0
    %3746 = vadd.xlane.f32.xlu0 %v3745
    %v3747 = vpop.xlane.xlu0 %3746
    %v3748 = vsel %vm3729, %v3718, 0.0
    %3749 = vadd.xlane.f32.xlu0 %v3748
    %v3750 = vpop.xlane.xlu0 %3749
    %v3751 = vsel %vm3729, %v3720, 0.0
    %3752 = vadd.xlane.f32.xlu0 %v3751
    %v3753 = vpop.xlane.xlu0 %3752
    %v3754 = vrcp.pop %v3732
    %v3755 = vmul.f32 %v3650, %v3754
    %v3756 = vrcp.pop %v3735
    %v3757 = vmul.f32 %v3652, %v3756
    %v3758 = vrcp.pop %v3738
    %v3759 = vmul.f32 %v3654, %v3758
    %v3760 = vrcp.pop %v3741
    %v3761 = vmul.f32 %v3656, %v3760
    %v3762 = vrcp.pop %v3744
    %v3763 = vmul.f32 %v3658, %v3762
    %v3764 = vrcp.pop %v3747
    %v3765 = vmul.f32 %v3660, %v3764
    %v3766 = vrcp.pop %v3750
    %v3767 = vmul.f32 %v3662, %v3766
    %v3768 = vrcp.pop %v3753
    %v3769 = vmul.f32 %v3664, %v3768
    %v3771 = vlaneseq
    %v3772 = vshrl.u32 %v3771, 7
    %v3773 = vsub.s32 0, %v3772
    %v3774 = vrot.slane %v3755, %v3773
    %3775 = vrot.lane.b32.xlu0 %v3774, 96
    %v3776 = vpop.permute.xlu0 %3775
    %v3777 = vsel %vm101, %v3776, 0
    %3779 = vmatprep.subr.mxu0 0.0
    %3780 = vmatpush1.msra.mxu0 %v77
    %3781 = vmatprep.subr.mxu0 0.0
    %3782 = vmatpush1.msra.mxu0 0.0
    %3783 = vmatprep.subr.mxu0 0.0
    %3784 = vmatpush1.msra.mxu0 0.0
    %3785 = vmatprep.subr.mxu0 0.0
    %3786 = vmatpush1.msra.mxu0 0.0
    %3787 = vmatprep.subr.mxu0 0.0
    %3788 = vmatpush1.msra.mxu0 0.0
    %3789 = vmatprep.subr.mxu0 0.0
    %3790 = vmatpush1.msra.mxu0 0.0
    %3791 = vmatprep.subr.mxu0 0.0
    %3792 = vmatpush1.msra.mxu0 0.0
    %3793 = vmatprep.subr.mxu0 0.0
    %3794 = vmatpush1.msra.mxu0 0.0
    %3795 = vmatprep.subr.mxu0 0.0
    %3796 = vmatpush1.msra.mxu0 0.0
    %3797 = vmatprep.subr.mxu0 0.0
    %3798 = vmatpush1.msra.mxu0 0.0
    %3799 = vmatprep.subr.mxu0 0.0
    %3800 = vmatpush1.msra.mxu0 0.0
    %3801 = vmatprep.subr.mxu0 0.0
    %3802 = vmatpush1.msra.mxu0 0.0
    %3803 = vmatprep.subr.mxu0 0.0
    %3804 = vmatpush1.msra.mxu0 0.0
    %3805 = vmatprep.subr.mxu0 0.0
    %3806 = vmatpush1.msra.mxu0 0.0
    %3807 = vmatprep.subr.mxu0 0.0
    %3808 = vmatpush1.msra.mxu0 0.0
    %3809 = vmatprep.subr.mxu0 0.0
    %3810 = vmatpush1.msra.mxu0 0.0
    %3811 = vmatprep.subr.mxu0 0.0
    %3812 = vmatpush1.msra.mxu0 0.0
    %3813 = vmatprep.subr.mxu0 0.0
    %3814 = vmatpush1.msra.mxu0 0.0
    %3815 = vmatprep.subr.mxu0 0.0
    %3816 = vmatpush1.msra.mxu0 0.0
    %3817 = vmatprep.subr.mxu0 0.0
    %3818 = vmatpush1.msra.mxu0 0.0
    %3819 = vmatprep.subr.mxu0 0.0
    %3820 = vmatpush1.msra.mxu0 0.0
    %3821 = vmatprep.subr.mxu0 0.0
    %3822 = vmatpush1.msra.mxu0 0.0
    %3823 = vmatprep.subr.mxu0 0.0
    %3824 = vmatpush1.msra.mxu0 0.0
    %3825 = vmatprep.subr.mxu0 0.0
    %3826 = vmatpush1.msra.mxu0 0.0
    %3827 = vmatprep.subr.mxu0 0.0
    %3828 = vmatpush1.msra.mxu0 0.0
    %3829 = vmatprep.subr.mxu0 0.0
    %3830 = vmatpush1.msra.mxu0 0.0
    %3831 = vmatprep.subr.mxu0 0.0
    %3832 = vmatpush1.msra.mxu0 0.0
    %3833 = vmatprep.subr.mxu0 0.0
    %3834 = vmatpush1.msra.mxu0 0.0
    %3835 = vmatprep.subr.mxu0 0.0
    %3836 = vmatpush1.msra.mxu0 0.0
    %3837 = vmatprep.subr.mxu0 0.0
    %3838 = vmatpush1.msra.mxu0 0.0
    %3839 = vmatprep.subr.mxu0 0.0
    %3840 = vmatpush1.msra.mxu0 0.0
    %3841 = vmatprep.subr.mxu0 0.0
    %3842 = vmatpush1.msra.mxu0 0.0
    %3843 = vmatprep.mubr.f32.mxu0 0.0
    %3844 = vmatmul.mubr.f32.gmra.mrb[0].mxu0 %v3777
    %v3845 = vpop.f32.mrb[0].mxu0
    %v3846 = vadd.f32 0.0, %v3845
    %v3847 = vpop.f32.mrb[0].mxu0
    %3848 = vdwg.mxu0
    %v3850 = vlaneseq
    %v3851 = vshrl.u32 %v3850, 7
    %v3852 = vsub.s32 0, %v3851
    %v3853 = vrot.slane %v3757, %v3852
    %3854 = vrot.lane.b32.xlu0 %v3853, 96
    %v3855 = vpop.permute.xlu0 %3854
    %v3856 = vsel %vm101, %v3855, 0
    %3858 = vmatprep.subr.mxu0 0.0
    %3859 = vmatpush1.msra.mxu0 %v78
    %3860 = vmatprep.subr.mxu0 0.0
    %3861 = vmatpush1.msra.mxu0 0.0
    %3862 = vmatprep.subr.mxu0 0.0
    %3863 = vmatpush1.msra.mxu0 0.0
    %3864 = vmatprep.subr.mxu0 0.0
    %3865 = vmatpush1.msra.mxu0 0.0
    %3866 = vmatprep.subr.mxu0 0.0
    %3867 = vmatpush1.msra.mxu0 0.0
    %3868 = vmatprep.subr.mxu0 0.0
    %3869 = vmatpush1.msra.mxu0 0.0
    %3870 = vmatprep.subr.mxu0 0.0
    %3871 = vmatpush1.msra.mxu0 0.0
    %3872 = vmatprep.subr.mxu0 0.0
    %3873 = vmatpush1.msra.mxu0 0.0
    %3874 = vmatprep.subr.mxu0 0.0
    %3875 = vmatpush1.msra.mxu0 0.0
    %3876 = vmatprep.subr.mxu0 0.0
    %3877 = vmatpush1.msra.mxu0 0.0
    %3878 = vmatprep.subr.mxu0 0.0
    %3879 = vmatpush1.msra.mxu0 0.0
    %3880 = vmatprep.subr.mxu0 0.0
    %3881 = vmatpush1.msra.mxu0 0.0
    %3882 = vmatprep.subr.mxu0 0.0
    %3883 = vmatpush1.msra.mxu0 0.0
    %3884 = vmatprep.subr.mxu0 0.0
    %3885 = vmatpush1.msra.mxu0 0.0
    %3886 = vmatprep.subr.mxu0 0.0
    %3887 = vmatpush1.msra.mxu0 0.0
    %3888 = vmatprep.subr.mxu0 0.0
    %3889 = vmatpush1.msra.mxu0 0.0
    %3890 = vmatprep.subr.mxu0 0.0
    %3891 = vmatpush1.msra.mxu0 0.0
    %3892 = vmatprep.subr.mxu0 0.0
    %3893 = vmatpush1.msra.mxu0 0.0
    %3894 = vmatprep.subr.mxu0 0.0
    %3895 = vmatpush1.msra.mxu0 0.0
    %3896 = vmatprep.subr.mxu0 0.0
    %3897 = vmatpush1.msra.mxu0 0.0
    %3898 = vmatprep.subr.mxu0 0.0
    %3899 = vmatpush1.msra.mxu0 0.0
    %3900 = vmatprep.subr.mxu0 0.0
    %3901 = vmatpush1.msra.mxu0 0.0
    %3902 = vmatprep.subr.mxu0 0.0
    %3903 = vmatpush1.msra.mxu0 0.0
    %3904 = vmatprep.subr.mxu0 0.0
    %3905 = vmatpush1.msra.mxu0 0.0
    %3906 = vmatprep.subr.mxu0 0.0
    %3907 = vmatpush1.msra.mxu0 0.0
    %3908 = vmatprep.subr.mxu0 0.0
    %3909 = vmatpush1.msra.mxu0 0.0
    %3910 = vmatprep.subr.mxu0 0.0
    %3911 = vmatpush1.msra.mxu0 0.0
    %3912 = vmatprep.subr.mxu0 0.0
    %3913 = vmatpush1.msra.mxu0 0.0
    %3914 = vmatprep.subr.mxu0 0.0
    %3915 = vmatpush1.msra.mxu0 0.0
    %3916 = vmatprep.subr.mxu0 0.0
    %3917 = vmatpush1.msra.mxu0 0.0
    %3918 = vmatprep.subr.mxu0 0.0
    %3919 = vmatpush1.msra.mxu0 0.0
    %3920 = vmatprep.subr.mxu0 0.0
    %3921 = vmatpush1.msra.mxu0 0.0
    %3922 = vmatprep.mubr.f32.mxu0 0.0
    %3923 = vmatmul.mubr.f32.gmra.mrb[0].mxu0 %v3856
    %v3924 = vpop.f32.mrb[0].mxu0
    %v3925 = vadd.f32 0.0, %v3924
    %v3926 = vpop.f32.mrb[0].mxu0
    %3927 = vdwg.mxu0
    %v3929 = vlaneseq
    %v3930 = vshrl.u32 %v3929, 7
    %v3931 = vsub.s32 0, %v3930
    %v3932 = vrot.slane %v3759, %v3931
    %3933 = vrot.lane.b32.xlu0 %v3932, 96
    %v3934 = vpop.permute.xlu0 %3933
    %v3935 = vsel %vm101, %v3934, 0
    %3937 = vmatprep.subr.mxu0 0.0
    %3938 = vmatpush1.msra.mxu0 %v79
    %3939 = vmatprep.subr.mxu0 0.0
    %3940 = vmatpush1.msra.mxu0 0.0
    %3941 = vmatprep.subr.mxu0 0.0
    %3942 = vmatpush1.msra.mxu0 0.0
    %3943 = vmatprep.subr.mxu0 0.0
    %3944 = vmatpush1.msra.mxu0 0.0
    %3945 = vmatprep.subr.mxu0 0.0
    %3946 = vmatpush1.msra.mxu0 0.0
    %3947 = vmatprep.subr.mxu0 0.0
    %3948 = vmatpush1.msra.mxu0 0.0
    %3949 = vmatprep.subr.mxu0 0.0
    %3950 = vmatpush1.msra.mxu0 0.0
    %3951 = vmatprep.subr.mxu0 0.0
    %3952 = vmatpush1.msra.mxu0 0.0
    %3953 = vmatprep.subr.mxu0 0.0
    %3954 = vmatpush1.msra.mxu0 0.0
    %3955 = vmatprep.subr.mxu0 0.0
    %3956 = vmatpush1.msra.mxu0 0.0
    %3957 = vmatprep.subr.mxu0 0.0
    %3958 = vmatpush1.msra.mxu0 0.0
    %3959 = vmatprep.subr.mxu0 0.0
    %3960 = vmatpush1.msra.mxu0 0.0
    %3961 = vmatprep.subr.mxu0 0.0
    %3962 = vmatpush1.msra.mxu0 0.0
    %3963 = vmatprep.subr.mxu0 0.0
    %3964 = vmatpush1.msra.mxu0 0.0
    %3965 = vmatprep.subr.mxu0 0.0
    %3966 = vmatpush1.msra.mxu0 0.0
    %3967 = vmatprep.subr.mxu0 0.0
    %3968 = vmatpush1.msra.mxu0 0.0
    %3969 = vmatprep.subr.mxu0 0.0
    %3970 = vmatpush1.msra.mxu0 0.0
    %3971 = vmatprep.subr.mxu0 0.0
    %3972 = vmatpush1.msra.mxu0 0.0
    %3973 = vmatprep.subr.mxu0 0.0
    %3974 = vmatpush1.msra.mxu0 0.0
    %3975 = vmatprep.subr.mxu0 0.0
    %3976 = vmatpush1.msra.mxu0 0.0
    %3977 = vmatprep.subr.mxu0 0.0
    %3978 = vmatpush1.msra.mxu0 0.0
    %3979 = vmatprep.subr.mxu0 0.0
    %3980 = vmatpush1.msra.mxu0 0.0
    %3981 = vmatprep.subr.mxu0 0.0
    %3982 = vmatpush1.msra.mxu0 0.0
    %3983 = vmatprep.subr.mxu0 0.0
    %3984 = vmatpush1.msra.mxu0 0.0
    %3985 = vmatprep.subr.mxu0 0.0
    %3986 = vmatpush1.msra.mxu0 0.0
    %3987 = vmatprep.subr.mxu0 0.0
    %3988 = vmatpush1.msra.mxu0 0.0
    %3989 = vmatprep.subr.mxu0 0.0
    %3990 = vmatpush1.msra.mxu0 0.0
    %3991 = vmatprep.subr.mxu0 0.0
    %3992 = vmatpush1.msra.mxu0 0.0
    %3993 = vmatprep.subr.mxu0 0.0
    %3994 = vmatpush1.msra.mxu0 0.0
    %3995 = vmatprep.subr.mxu0 0.0
    %3996 = vmatpush1.msra.mxu0 0.0
    %3997 = vmatprep.subr.mxu0 0.0
    %3998 = vmatpush1.msra.mxu0 0.0
    %3999 = vmatprep.subr.mxu0 0.0
    %4000 = vmatpush1.msra.mxu0 0.0
    %4001 = vmatprep.mubr.f32.mxu0 0.0
    %4002 = vmatmul.mubr.f32.gmra.mrb[0].mxu0 %v3935
    %v4003 = vpop.f32.mrb[0].mxu0
    %v4004 = vadd.f32 0.0, %v4003
    %v4005 = vpop.f32.mrb[0].mxu0
    %4006 = vdwg.mxu0
    %v4008 = vlaneseq
    %v4009 = vshrl.u32 %v4008, 7
    %v4010 = vsub.s32 0, %v4009
    %v4011 = vrot.slane %v3761, %v4010
    %4012 = vrot.lane.b32.xlu0 %v4011, 96
    %v4013 = vpop.permute.xlu0 %4012
    %v4014 = vsel %vm101, %v4013, 0
    %4016 = vmatprep.subr.mxu0 0.0
    %4017 = vmatpush1.msra.mxu0 %v80
    %4018 = vmatprep.subr.mxu0 0.0
    %4019 = vmatpush1.msra.mxu0 0.0
    %4020 = vmatprep.subr.mxu0 0.0
    %4021 = vmatpush1.msra.mxu0 0.0
    %4022 = vmatprep.subr.mxu0 0.0
    %4023 = vmatpush1.msra.mxu0 0.0
    %4024 = vmatprep.subr.mxu0 0.0
    %4025 = vmatpush1.msra.mxu0 0.0
    %4026 = vmatprep.subr.mxu0 0.0
    %4027 = vmatpush1.msra.mxu0 0.0
    %4028 = vmatprep.subr.mxu0 0.0
    %4029 = vmatpush1.msra.mxu0 0.0
    %4030 = vmatprep.subr.mxu0 0.0
    %4031 = vmatpush1.msra.mxu0 0.0
    %4032 = vmatprep.subr.mxu0 0.0
    %4033 = vmatpush1.msra.mxu0 0.0
    %4034 = vmatprep.subr.mxu0 0.0
    %4035 = vmatpush1.msra.mxu0 0.0
    %4036 = vmatprep.subr.mxu0 0.0
    %4037 = vmatpush1.msra.mxu0 0.0
    %4038 = vmatprep.subr.mxu0 0.0
    %4039 = vmatpush1.msra.mxu0 0.0
    %4040 = vmatprep.subr.mxu0 0.0
    %4041 = vmatpush1.msra.mxu0 0.0
    %4042 = vmatprep.subr.mxu0 0.0
    %4043 = vmatpush1.msra.mxu0 0.0
    %4044 = vmatprep.subr.mxu0 0.0
    %4045 = vmatpush1.msra.mxu0 0.0
    %4046 = vmatprep.subr.mxu0 0.0
    %4047 = vmatpush1.msra.mxu0 0.0
    %4048 = vmatprep.subr.mxu0 0.0
    %4049 = vmatpush1.msra.mxu0 0.0
    %4050 = vmatprep.subr.mxu0 0.0
    %4051 = vmatpush1.msra.mxu0 0.0
    %4052 = vmatprep.subr.mxu0 0.0
    %4053 = vmatpush1.msra.mxu0 0.0
    %4054 = vmatprep.subr.mxu0 0.0
    %4055 = vmatpush1.msra.mxu0 0.0
    %4056 = vmatprep.subr.mxu0 0.0
    %4057 = vmatpush1.msra.mxu0 0.0
    %4058 = vmatprep.subr.mxu0 0.0
    %4059 = vmatpush1.msra.mxu0 0.0
    %4060 = vmatprep.subr.mxu0 0.0
    %4061 = vmatpush1.msra.mxu0 0.0
    %4062 = vmatprep.subr.mxu0 0.0
    %4063 = vmatpush1.msra.mxu0 0.0
    %4064 = vmatprep.subr.mxu0 0.0
    %4065 = vmatpush1.msra.mxu0 0.0
    %4066 = vmatprep.subr.mxu0 0.0
    %4067 = vmatpush1.msra.mxu0 0.0
    %4068 = vmatprep.subr.mxu0 0.0
    %4069 = vmatpush1.msra.mxu0 0.0
    %4070 = vmatprep.subr.mxu0 0.0
    %4071 = vmatpush1.msra.mxu0 0.0
    %4072 = vmatprep.subr.mxu0 0.0
    %4073 = vmatpush1.msra.mxu0 0.0
    %4074 = vmatprep.subr.mxu0 0.0
    %4075 = vmatpush1.msra.mxu0 0.0
    %4076 = vmatprep.subr.mxu0 0.0
    %4077 = vmatpush1.msra.mxu0 0.0
    %4078 = vmatprep.subr.mxu0 0.0
    %4079 = vmatpush1.msra.mxu0 0.0
    %4080 = vmatprep.mubr.f32.mxu0 0.0
    %4081 = vmatmul.mubr.f32.gmra.mrb[0].mxu0 %v4014
    %v4082 = vpop.f32.mrb[0].mxu0
    %v4083 = vadd.f32 0.0, %v4082
    %v4084 = vpop.f32.mrb[0].mxu0
    %4085 = vdwg.mxu0
    %v4087 = vlaneseq
    %v4088 = vshrl.u32 %v4087, 7
    %v4089 = vsub.s32 0, %v4088
    %v4090 = vrot.slane %v3763, %v4089
    %4091 = vrot.lane.b32.xlu0 %v4090, 96
    %v4092 = vpop.permute.xlu0 %4091
    %v4093 = vsel %vm101, %v4092, 0
    %4095 = vmatprep.subr.mxu0 0.0
    %4096 = vmatpush1.msra.mxu0 %v81
    %4097 = vmatprep.subr.mxu0 0.0
    %4098 = vmatpush1.msra.mxu0 0.0
    %4099 = vmatprep.subr.mxu0 0.0
    %4100 = vmatpush1.msra.mxu0 0.0
    %4101 = vmatprep.subr.mxu0 0.0
    %4102 = vmatpush1.msra.mxu0 0.0
    %4103 = vmatprep.subr.mxu0 0.0
    %4104 = vmatpush1.msra.mxu0 0.0
    %4105 = vmatprep.subr.mxu0 0.0
    %4106 = vmatpush1.msra.mxu0 0.0
    %4107 = vmatprep.subr.mxu0 0.0
    %4108 = vmatpush1.msra.mxu0 0.0
    %4109 = vmatprep.subr.mxu0 0.0
    %4110 = vmatpush1.msra.mxu0 0.0
    %4111 = vmatprep.subr.mxu0 0.0
    %4112 = vmatpush1.msra.mxu0 0.0
    %4113 = vmatprep.subr.mxu0 0.0
    %4114 = vmatpush1.msra.mxu0 0.0
    %4115 = vmatprep.subr.mxu0 0.0
    %4116 = vmatpush1.msra.mxu0 0.0
    %4117 = vmatprep.subr.mxu0 0.0
    %4118 = vmatpush1.msra.mxu0 0.0
    %4119 = vmatprep.subr.mxu0 0.0
    %4120 = vmatpush1.msra.mxu0 0.0
    %4121 = vmatprep.subr.mxu0 0.0
    %4122 = vmatpush1.msra.mxu0 0.0
    %4123 = vmatprep.subr.mxu0 0.0
    %4124 = vmatpush1.msra.mxu0 0.0
    %4125 = vmatprep.subr.mxu0 0.0
    %4126 = vmatpush1.msra.mxu0 0.0
    %4127 = vmatprep.subr.mxu0 0.0
    %4128 = vmatpush1.msra.mxu0 0.0
    %4129 = vmatprep.subr.mxu0 0.0
    %4130 = vmatpush1.msra.mxu0 0.0
    %4131 = vmatprep.subr.mxu0 0.0
    %4132 = vmatpush1.msra.mxu0 0.0
    %4133 = vmatprep.subr.mxu0 0.0
    %4134 = vmatpush1.msra.mxu0 0.0
    %4135 = vmatprep.subr.mxu0 0.0
    %4136 = vmatpush1.msra.mxu0 0.0
    %4137 = vmatprep.subr.mxu0 0.0
    %4138 = vmatpush1.msra.mxu0 0.0
    %4139 = vmatprep.subr.mxu0 0.0
    %4140 = vmatpush1.msra.mxu0 0.0
    %4141 = vmatprep.subr.mxu0 0.0
    %4142 = vmatpush1.msra.mxu0 0.0
    %4143 = vmatprep.subr.mxu0 0.0
    %4144 = vmatpush1.msra.mxu0 0.0
    %4145 = vmatprep.subr.mxu0 0.0
    %4146 = vmatpush1.msra.mxu0 0.0
    %4147 = vmatprep.subr.mxu0 0.0
    %4148 = vmatpush1.msra.mxu0 0.0
    %4149 = vmatprep.subr.mxu0 0.0
    %4150 = vmatpush1.msra.mxu0 0.0
    %4151 = vmatprep.subr.mxu0 0.0
    %4152 = vmatpush1.msra.mxu0 0.0
    %4153 = vmatprep.subr.mxu0 0.0
    %4154 = vmatpush1.msra.mxu0 0.0
    %4155 = vmatprep.subr.mxu0 0.0
    %4156 = vmatpush1.msra.mxu0 0.0
    %4157 = vmatprep.subr.mxu0 0.0
    %4158 = vmatpush1.msra.mxu0 0.0
    %4159 = vmatprep.mubr.f32.mxu0 0.0
    %4160 = vmatmul.mubr.f32.gmra.mrb[0].mxu0 %v4093
    %v4161 = vpop.f32.mrb[0].mxu0
    %v4162 = vadd.f32 0.0, %v4161
    %v4163 = vpop.f32.mrb[0].mxu0
    %4164 = vdwg.mxu0
    %v4166 = vlaneseq
    %v4167 = vshrl.u32 %v4166, 7
    %v4168 = vsub.s32 0, %v4167
    %v4169 = vrot.slane %v3765, %v4168
    %4170 = vrot.lane.b32.xlu0 %v4169, 96
    %v4171 = vpop.permute.xlu0 %4170
    %v4172 = vsel %vm101, %v4171, 0
    %4174 = vmatprep.subr.mxu0 0.0
    %4175 = vmatpush1.msra.mxu0 %v82
    %4176 = vmatprep.subr.mxu0 0.0
    %4177 = vmatpush1.msra.mxu0 0.0
    %4178 = vmatprep.subr.mxu0 0.0
    %4179 = vmatpush1.msra.mxu0 0.0
    %4180 = vmatprep.subr.mxu0 0.0
    %4181 = vmatpush1.msra.mxu0 0.0
    %4182 = vmatprep.subr.mxu0 0.0
    %4183 = vmatpush1.msra.mxu0 0.0
    %4184 = vmatprep.subr.mxu0 0.0
    %4185 = vmatpush1.msra.mxu0 0.0
    %4186 = vmatprep.subr.mxu0 0.0
    %4187 = vmatpush1.msra.mxu0 0.0
    %4188 = vmatprep.subr.mxu0 0.0
    %4189 = vmatpush1.msra.mxu0 0.0
    %4190 = vmatprep.subr.mxu0 0.0
    %4191 = vmatpush1.msra.mxu0 0.0
    %4192 = vmatprep.subr.mxu0 0.0
    %4193 = vmatpush1.msra.mxu0 0.0
    %4194 = vmatprep.subr.mxu0 0.0
    %4195 = vmatpush1.msra.mxu0 0.0
    %4196 = vmatprep.subr.mxu0 0.0
    %4197 = vmatpush1.msra.mxu0 0.0
    %4198 = vmatprep.subr.mxu0 0.0
    %4199 = vmatpush1.msra.mxu0 0.0
    %4200 = vmatprep.subr.mxu0 0.0
    %4201 = vmatpush1.msra.mxu0 0.0
    %4202 = vmatprep.subr.mxu0 0.0
    %4203 = vmatpush1.msra.mxu0 0.0
    %4204 = vmatprep.subr.mxu0 0.0
    %4205 = vmatpush1.msra.mxu0 0.0
    %4206 = vmatprep.subr.mxu0 0.0
    %4207 = vmatpush1.msra.mxu0 0.0
    %4208 = vmatprep.subr.mxu0 0.0
    %4209 = vmatpush1.msra.mxu0 0.0
    %4210 = vmatprep.subr.mxu0 0.0
    %4211 = vmatpush1.msra.mxu0 0.0
    %4212 = vmatprep.subr.mxu0 0.0
    %4213 = vmatpush1.msra.mxu0 0.0
    %4214 = vmatprep.subr.mxu0 0.0
    %4215 = vmatpush1.msra.mxu0 0.0
    %4216 = vmatprep.subr.mxu0 0.0
    %4217 = vmatpush1.msra.mxu0 0.0
    %4218 = vmatprep.subr.mxu0 0.0
    %4219 = vmatpush1.msra.mxu0 0.0
    %4220 = vmatprep.subr.mxu0 0.0
    %4221 = vmatpush1.msra.mxu0 0.0
    %4222 = vmatprep.subr.mxu0 0.0
    %4223 = vmatpush1.msra.mxu0 0.0
    %4224 = vmatprep.subr.mxu0 0.0
    %4225 = vmatpush1.msra.mxu0 0.0
    %4226 = vmatprep.subr.mxu0 0.0
    %4227 = vmatpush1.msra.mxu0 0.0
    %4228 = vmatprep.subr.mxu0 0.0
    %4229 = vmatpush1.msra.mxu0 0.0
    %4230 = vmatprep.subr.mxu0 0.0
    %4231 = vmatpush1.msra.mxu0 0.0
    %4232 = vmatprep.subr.mxu0 0.0
    %4233 = vmatpush1.msra.mxu0 0.0
    %4234 = vmatprep.subr.mxu0 0.0
    %4235 = vmatpush1.msra.mxu0 0.0
    %4236 = vmatprep.subr.mxu0 0.0
    %4237 = vmatpush1.msra.mxu0 0.0
    %4238 = vmatprep.mubr.f32.mxu0 0.0
    %4239 = vmatmul.mubr.f32.gmra.mrb[0].mxu0 %v4172
    %v4240 = vpop.f32.mrb[0].mxu0
    %v4241 = vadd.f32 0.0, %v4240
    %v4242 = vpop.f32.mrb[0].mxu0
    %4243 = vdwg.mxu0
    %v4245 = vlaneseq
    %v4246 = vshrl.u32 %v4245, 7
    %v4247 = vsub.s32 0, %v4246
    %v4248 = vrot.slane %v3767, %v4247
    %4249 = vrot.lane.b32.xlu0 %v4248, 96
    %v4250 = vpop.permute.xlu0 %4249
    %v4251 = vsel %vm101, %v4250, 0
    %4253 = vmatprep.subr.mxu0 0.0
    %4254 = vmatpush1.msra.mxu0 %v83
    %4255 = vmatprep.subr.mxu0 0.0
    %4256 = vmatpush1.msra.mxu0 0.0
    %4257 = vmatprep.subr.mxu0 0.0
    %4258 = vmatpush1.msra.mxu0 0.0
    %4259 = vmatprep.subr.mxu0 0.0
    %4260 = vmatpush1.msra.mxu0 0.0
    %4261 = vmatprep.subr.mxu0 0.0
    %4262 = vmatpush1.msra.mxu0 0.0
    %4263 = vmatprep.subr.mxu0 0.0
    %4264 = vmatpush1.msra.mxu0 0.0
    %4265 = vmatprep.subr.mxu0 0.0
    %4266 = vmatpush1.msra.mxu0 0.0
    %4267 = vmatprep.subr.mxu0 0.0
    %4268 = vmatpush1.msra.mxu0 0.0
    %4269 = vmatprep.subr.mxu0 0.0
    %4270 = vmatpush1.msra.mxu0 0.0
    %4271 = vmatprep.subr.mxu0 0.0
    %4272 = vmatpush1.msra.mxu0 0.0
    %4273 = vmatprep.subr.mxu0 0.0
    %4274 = vmatpush1.msra.mxu0 0.0
    %4275 = vmatprep.subr.mxu0 0.0
    %4276 = vmatpush1.msra.mxu0 0.0
    %4277 = vmatprep.subr.mxu0 0.0
    %4278 = vmatpush1.msra.mxu0 0.0
    %4279 = vmatprep.subr.mxu0 0.0
    %4280 = vmatpush1.msra.mxu0 0.0
    %4281 = vmatprep.subr.mxu0 0.0
    %4282 = vmatpush1.msra.mxu0 0.0
    %4283 = vmatprep.subr.mxu0 0.0
    %4284 = vmatpush1.msra.mxu0 0.0
    %4285 = vmatprep.subr.mxu0 0.0
    %4286 = vmatpush1.msra.mxu0 0.0
    %4287 = vmatprep.subr.mxu0 0.0
    %4288 = vmatpush1.msra.mxu0 0.0
    %4289 = vmatprep.subr.mxu0 0.0
    %4290 = vmatpush1.msra.mxu0 0.0
    %4291 = vmatprep.subr.mxu0 0.0
    %4292 = vmatpush1.msra.mxu0 0.0
    %4293 = vmatprep.subr.mxu0 0.0
    %4294 = vmatpush1.msra.mxu0 0.0
    %4295 = vmatprep.subr.mxu0 0.0
    %4296 = vmatpush1.msra.mxu0 0.0
    %4297 = vmatprep.subr.mxu0 0.0
    %4298 = vmatpush1.msra.mxu0 0.0
    %4299 = vmatprep.subr.mxu0 0.0
    %4300 = vmatpush1.msra.mxu0 0.0
    %4301 = vmatprep.subr.mxu0 0.0
    %4302 = vmatpush1.msra.mxu0 0.0
    %4303 = vmatprep.subr.mxu0 0.0
    %4304 = vmatpush1.msra.mxu0 0.0
    %4305 = vmatprep.subr.mxu0 0.0
    %4306 = vmatpush1.msra.mxu0 0.0
    %4307 = vmatprep.subr.mxu0 0.0
    %4308 = vmatpush1.msra.mxu0 0.0
    %4309 = vmatprep.subr.mxu0 0.0
    %4310 = vmatpush1.msra.mxu0 0.0
    %4311 = vmatprep.subr.mxu0 0.0
    %4312 = vmatpush1.msra.mxu0 0.0
    %4313 = vmatprep.subr.mxu0 0.0
    %4314 = vmatpush1.msra.mxu0 0.0
    %4315 = vmatprep.subr.mxu0 0.0
    %4316 = vmatpush1.msra.mxu0 0.0
    %4317 = vmatprep.mubr.f32.mxu0 0.0
    %4318 = vmatmul.mubr.f32.gmra.mrb[0].mxu0 %v4251
    %v4319 = vpop.f32.mrb[0].mxu0
    %v4320 = vadd.f32 0.0, %v4319
    %v4321 = vpop.f32.mrb[0].mxu0
    %4322 = vdwg.mxu0
    %v4324 = vlaneseq
    %v4325 = vshrl.u32 %v4324, 7
    %v4326 = vsub.s32 0, %v4325
    %v4327 = vrot.slane %v3769, %v4326
    %4328 = vrot.lane.b32.xlu0 %v4327, 96
    %v4329 = vpop.permute.xlu0 %4328
    %v4330 = vsel %vm101, %v4329, 0
    %4332 = vmatprep.subr.mxu0 0.0
    %4333 = vmatpush1.msra.mxu0 %v84
    %4334 = vmatprep.subr.mxu0 0.0
    %4335 = vmatpush1.msra.mxu0 0.0
    %4336 = vmatprep.subr.mxu0 0.0
    %4337 = vmatpush1.msra.mxu0 0.0
    %4338 = vmatprep.subr.mxu0 0.0
    %4339 = vmatpush1.msra.mxu0 0.0
    %4340 = vmatprep.subr.mxu0 0.0
    %4341 = vmatpush1.msra.mxu0 0.0
    %4342 = vmatprep.subr.mxu0 0.0
    %4343 = vmatpush1.msra.mxu0 0.0
    %4344 = vmatprep.subr.mxu0 0.0
    %4345 = vmatpush1.msra.mxu0 0.0
    %4346 = vmatprep.subr.mxu0 0.0
    %4347 = vmatpush1.msra.mxu0 0.0
    %4348 = vmatprep.subr.mxu0 0.0
    %4349 = vmatpush1.msra.mxu0 0.0
    %4350 = vmatprep.subr.mxu0 0.0
    %4351 = vmatpush1.msra.mxu0 0.0
    %4352 = vmatprep.subr.mxu0 0.0
    %4353 = vmatpush1.msra.mxu0 0.0
    %4354 = vmatprep.subr.mxu0 0.0
    %4355 = vmatpush1.msra.mxu0 0.0
    %4356 = vmatprep.subr.mxu0 0.0
    %4357 = vmatpush1.msra.mxu0 0.0
    %4358 = vmatprep.subr.mxu0 0.0
    %4359 = vmatpush1.msra.mxu0 0.0
    %4360 = vmatprep.subr.mxu0 0.0
    %4361 = vmatpush1.msra.mxu0 0.0
    %4362 = vmatprep.subr.mxu0 0.0
    %4363 = vmatpush1.msra.mxu0 0.0
    %4364 = vmatprep.subr.mxu0 0.0
    %4365 = vmatpush1.msra.mxu0 0.0
    %4366 = vmatprep.subr.mxu0 0.0
    %4367 = vmatpush1.msra.mxu0 0.0
    %4368 = vmatprep.subr.mxu0 0.0
    %4369 = vmatpush1.msra.mxu0 0.0
    %4370 = vmatprep.subr.mxu0 0.0
    %4371 = vmatpush1.msra.mxu0 0.0
    %4372 = vmatprep.subr.mxu0 0.0
    %4373 = vmatpush1.msra.mxu0 0.0
    %4374 = vmatprep.subr.mxu0 0.0
    %4375 = vmatpush1.msra.mxu0 0.0
    %4376 = vmatprep.subr.mxu0 0.0
    %4377 = vmatpush1.msra.mxu0 0.0
    %4378 = vmatprep.subr.mxu0 0.0
    %4379 = vmatpush1.msra.mxu0 0.0
    %4380 = vmatprep.subr.mxu0 0.0
    %4381 = vmatpush1.msra.mxu0 0.0
    %4382 = vmatprep.subr.mxu0 0.0
    %4383 = vmatpush1.msra.mxu0 0.0
    %4384 = vmatprep.subr.mxu0 0.0
    %4385 = vmatpush1.msra.mxu0 0.0
    %4386 = vmatprep.subr.mxu0 0.0
    %4387 = vmatpush1.msra.mxu0 0.0
    %4388 = vmatprep.subr.mxu0 0.0
    %4389 = vmatpush1.msra.mxu0 0.0
    %4390 = vmatprep.subr.mxu0 0.0
    %4391 = vmatpush1.msra.mxu0 0.0
    %4392 = vmatprep.subr.mxu0 0.0
    %4393 = vmatpush1.msra.mxu0 0.0
    %4394 = vmatprep.subr.mxu0 0.0
    %4395 = vmatpush1.msra.mxu0 0.0
    %4396 = vmatprep.mubr.f32.mxu0 0.0
    %4397 = vmatmul.mubr.f32.gmra.mrb[0].mxu0 %v4330
    %v4398 = vpop.f32.mrb[0].mxu0
    %v4399 = vadd.f32 0.0, %v4398
    %v4400 = vpop.f32.mrb[0].mxu0
    %4401 = vdwg.mxu0
    %v4402 = vld [vmem:[%s7] sm:$0xff]
    %v4403 = vld [vmem:[%s7 + $0x8] sm:$0xff]
    %v4404 = vld [vmem:[%s7 + $0x10] sm:$0xff]
    %v4405 = vld [vmem:[%s7 + $0x18] sm:$0xff]
    %v4406 = vld [vmem:[%s8] sm:$0x1]
    %v4408 = vlaneseq
    %v4409 = vshrl.u32 %v4408, 7
    %v4410 = vsub.s32 0, %v4409
    %v4411 = vrot.slane %v4406, %v4410
    %v4421 = vrot.slane %v3925, 7
    %v4422 = vsel %vm1504, %v4421, %v3846
    %v4423 = vrot.slane %v4004, 6
    %v4424 = vsel %vm1507, %v4423, %v4422
    %v4425 = vrot.slane %v4083, 5
    %v4426 = vsel %vm1510, %v4425, %v4424
    %v4427 = vrot.slane %v4162, 4
    %v4428 = vsel %vm1513, %v4427, %v4426
    %v4429 = vrot.slane %v4241, 3
    %v4430 = vsel %vm1516, %v4429, %v4428
    %v4431 = vrot.slane %v4320, 2
    %v4432 = vsel %vm1519, %v4431, %v4430
    %v4433 = vrot.slane %v4399, 1
    %v4434 = vsel %vm1522, %v4433, %v4432
    %v4435 = vsel %vm210, %v4434, 0
    %4437 = vmatprep.subr.mxu0 0.0
    %4438 = vmatpush1.msra.mxu0 %v4402
    %4439 = vmatprep.subr.mxu0 0.0
    %4440 = vmatpush1.msra.mxu0 %v4403
    %4441 = vmatprep.subr.mxu0 0.0
    %4442 = vmatpush1.msra.mxu0 %v4404
    %4443 = vmatprep.subr.mxu0 0.0
    %4444 = vmatpush1.msra.mxu0 %v4405
    %4445 = vmatprep.subr.mxu0 0.0
    %4446 = vmatpush1.msra.mxu0 0.0
    %4447 = vmatprep.subr.mxu0 0.0
    %4448 = vmatpush1.msra.mxu0 0.0
    %4449 = vmatprep.subr.mxu0 0.0
    %4450 = vmatpush1.msra.mxu0 0.0
    %4451 = vmatprep.subr.mxu0 0.0
    %4452 = vmatpush1.msra.mxu0 0.0
    %4453 = vmatprep.subr.mxu0 0.0
    %4454 = vmatpush1.msra.mxu0 0.0
    %4455 = vmatprep.subr.mxu0 0.0
    %4456 = vmatpush1.msra.mxu0 0.0
    %4457 = vmatprep.subr.mxu0 0.0
    %4458 = vmatpush1.msra.mxu0 0.0
    %4459 = vmatprep.subr.mxu0 0.0
    %4460 = vmatpush1.msra.mxu0 0.0
    %4461 = vmatprep.subr.mxu0 0.0
    %4462 = vmatpush1.msra.mxu0 0.0
    %4463 = vmatprep.subr.mxu0 0.0
    %4464 = vmatpush1.msra.mxu0 0.0
    %4465 = vmatprep.subr.mxu0 0.0
    %4466 = vmatpush1.msra.mxu0 0.0
    %4467 = vmatprep.subr.mxu0 0.0
    %4468 = vmatpush1.msra.mxu0 0.0
    %4469 = vmatprep.subr.mxu0 0.0
    %4470 = vmatpush1.msra.mxu0 0.0
    %4471 = vmatprep.subr.mxu0 0.0
    %4472 = vmatpush1.msra.mxu0 0.0
    %4473 = vmatprep.subr.mxu0 0.0
    %4474 = vmatpush1.msra.mxu0 0.0
    %4475 = vmatprep.subr.mxu0 0.0
    %4476 = vmatpush1.msra.mxu0 0.0
    %4477 = vmatprep.subr.mxu0 0.0
    %4478 = vmatpush1.msra.mxu0 0.0
    %4479 = vmatprep.subr.mxu0 0.0
    %4480 = vmatpush1.msra.mxu0 0.0
    %4481 = vmatprep.subr.mxu0 0.0
    %4482 = vmatpush1.msra.mxu0 0.0
    %4483 = vmatprep.subr.mxu0 0.0
    %4484 = vmatpush1.msra.mxu0 0.0
    %4485 = vmatprep.subr.mxu0 0.0
    %4486 = vmatpush1.msra.mxu0 0.0
    %4487 = vmatprep.subr.mxu0 0.0
    %4488 = vmatpush1.msra.mxu0 0.0
    %4489 = vmatprep.subr.mxu0 0.0
    %4490 = vmatpush1.msra.mxu0 0.0
    %4491 = vmatprep.subr.mxu0 0.0
    %4492 = vmatpush1.msra.mxu0 0.0
    %4493 = vmatprep.subr.mxu0 0.0
    %4494 = vmatpush1.msra.mxu0 0.0
    %4495 = vmatprep.subr.mxu0 0.0
    %4496 = vmatpush1.msra.mxu0 0.0
    %4497 = vmatprep.subr.mxu0 0.0
    %4498 = vmatpush1.msra.mxu0 0.0
    %4499 = vmatprep.subr.mxu0 0.0
    %4500 = vmatpush1.msra.mxu0 0.0
    %4501 = vmatprep.mubr.f32.mxu0 0.0
    %4502 = vmatmul.mubr.f32.gmra.mrb[0].mxu0 %v4435
    %v4503 = vpop.f32.mrb[0].mxu0
    %v4504 = vadd.f32 %v4411, %v4503
    %v4505 = vpop.f32.mrb[0].mxu0
    %4506 = vdwg.mxu0
    %v4507 = vcombine.low %v3755, %v3757
    %v4508 = vcombine.low %v3759, %v3761
    %v4509 = vcombine.low %v3763, %v3765
    %v4510 = vcombine.low %v3767, %v3769
    %v4512 = vunpack.c.l.s4 1966171168
    %v4513 = vunpack.c.0.s8 %v4512
    %v4514 = vlaneseq
    %v4515 = vshrl.u32 %v4514, 7
    %v4516 = vsub.s32 %v4513, %v4515
    %v4517 = vrot.slane %v4507, %v4516
    %v4519 = vunpack.c.l.s4 1966171168
    %v4520 = vunpack.c.0.s8 %v4519
    %v4521 = vlaneseq
    %v4522 = vshrl.u32 %v4521, 7
    %v4523 = vsub.s32 %v4520, %v4522
    %v4524 = vrot.slane %v4508, %v4523
    %v4526 = vunpack.c.l.s4 1966171168
    %v4527 = vunpack.c.0.s8 %v4526
    %v4528 = vlaneseq
    %v4529 = vshrl.u32 %v4528, 7
    %v4530 = vsub.s32 %v4527, %v4529
    %v4531 = vrot.slane %v4509, %v4530
    %v4533 = vunpack.c.l.s4 1966171168
    %v4534 = vunpack.c.0.s8 %v4533
    %v4535 = vlaneseq
    %v4536 = vshrl.u32 %v4535, 7
    %v4537 = vsub.s32 %v4534, %v4536
    %v4538 = vrot.slane %v4510, %v4537
    %v4539 = vcombine.low %v4517, %v4524
    %v4540 = vcombine.low %v4531, %v4538
    %v4542 = vunpack.c.l.s4 1966171168
    %v4543 = vunpack.c.0.s8 %v4542
    %v4544 = vlaneseq
    %v4545 = vshrl.u32 %v4544, 7
    %v4546 = vsub.s32 %v4543, %v4545
    %v4547 = vrot.slane %v4539, %v4546
    %v4549 = vunpack.c.l.s4 1966171168
    %v4550 = vunpack.c.0.s8 %v4549
    %v4551 = vlaneseq
    %v4552 = vshrl.u32 %v4551, 7
    %v4553 = vsub.s32 %v4550, %v4552
    %v4554 = vrot.slane %v4540, %v4553
    %v4555 = vcombine.low %v4547, %v4554
    %4556 = vrot.lane.b32.xlu0 %v4555, 99
    %v4557 = vpop.permute.xlu0 %4556
    %v4567 = vsel %vm1504, %v2797, %v2790
    %v4568 = vsel %vm1507, %v2804, %v4567
    %v4569 = vsel %vm1510, %v2811, %v4568
    %v4570 = vsel %vm1513, %v2818, %v4569
    %v4571 = vsel %vm1516, %v2825, %v4570
    %v4572 = vsel %vm1519, %v2832, %v4571
    %v4573 = vsel %vm1522, %v2839, %v4572
    %4574 = vrot.lane.b32.xlu0 %v4573, 11
    %v4575 = vpop.permute.xlu0 %4574
    %vm4577 = vcmask 23552
    %v4578 = vsel %vm4577, %v4504, %v4557
    %vm4579 = vcmask 89088
    %v4580 = vsel %vm4579, %v4578, %v4575
    %vm4581 = vcmask 351232
    %v4582 = vsel %vm4581, %v4580, 0.0
    %4583 = vst [vmem:[#allocation9] sm:$0xff] %v4582
    // Predicated region
    $region50: #{tpu_custom_call.1} parent=1 // pred_check
      _
    $region51: #{tpu_custom_call.1} parent=1 // pred_check_branch
      %4585 = sbr.rel (0) target = $region53
    $region52: #{tpu_custom_call.1} parent=1 // pred_region
      %s4587 = ssub.s32 256, 256
      %4588 = vsyncadd [#allocation4], %s4587
      %s4590 = sshll.u32 [#allocation8], 4
      %s4591 = int_to_ptr.vmem [resolvable:$true] %s4590
      %4593 = dma.vmem_to_hbm [thread:$0]  %s4591, 256, %s9, [#allocation4]
    $region53: #{tpu_custom_call.1} parent=1 // pred_fallthru
      _
    // Predicated region
    $region54: #{tpu_custom_call.1} parent=1 // pred_check
      _
    $region55: #{tpu_custom_call.1} parent=1 // pred_check_branch
      %4595 = sbr.rel (0) target = $region57
    $region56: #{tpu_custom_call.1} parent=1 // pred_region
      %s4597 = ssub.s32 128, 128
      %4598 = vsyncadd [#allocation10], %s4597
      %s4600 = sshll.u32 [#allocation9], 4
      %s4601 = int_to_ptr.vmem [resolvable:$true] %s4600
      %4603 = dma.vmem_to_hbm [thread:$0]  %s4601, 128, %s10, [#allocation10]
    $region57: #{tpu_custom_call.1} parent=1 // pred_fallthru
      _
    // Predicated region
    $region58: #{tpu_custom_call.1} parent=1 // pred_check
      _
    $region59: #{tpu_custom_call.1} parent=1 // pred_check_branch
      %4605 = sbr.rel (0) target = $region61
    $region60: #{tpu_custom_call.1} parent=1 // pred_region
      %4606 = dma.done [#allocation4], 256
    $region61: #{tpu_custom_call.1} parent=1 // pred_fallthru
      _
    // Predicated region
    $region62: #{tpu_custom_call.1} parent=1 // pred_check
      _
    $region63: #{tpu_custom_call.1} parent=1 // pred_check_branch
      %4608 = sbr.rel (0) target = $region65
    $region64: #{tpu_custom_call.1} parent=1 // pred_region
      %4609 = dma.done [#allocation10], 128
    $region65: #{tpu_custom_call.1} parent=1 // pred_fallthru
      _
    %4610 = vsyncpa [#allocation3], 1
    %4611 = vsyncpa [#allocation6], 1
    %4612 = vsyncpa [#allocation4], 1
    %4613 = vsyncpa [#allocation10], 1

</llo_original>
